<compile_context>
chip_gen: v6e
topology: v6e:2x2x1
jax: 0.10.0
libtpu: 0.0.40
codegen_flags: <defaults>
</compile_context>

<pallas_src>
import functools

import jax
import jax.numpy as jnp
from jax import lax
from jax.experimental import pallas as pl
from jax.experimental.pallas import tpu as pltpu


def _round_up(x, m):
    return (x + m - 1) // m * m


# ---------------------------------------------------------------------------
# Fused kernel: per time block ->
#   1) xg = x @ [Wr_x|Wz_x|Wn_x] + [br|bz|bn]          (MXU, bf16 operands)
#   2) unrolled recurrence over the block's timesteps   (small bf16 matmuls,
#      f32 gate math, hidden state carried in VMEM scratch)
#   3) logits = hs @ Wo + bo ; log-softmax              (MXU + VPU/EUP)
# Final hidden state stored only on the last block.
# ---------------------------------------------------------------------------
def fused_gru_kernel(x_ref, h0_ref, wx_ref, bx_ref, wrz_ref, wn_ref,
                     wo_ref, bo_ref,
                     out_ref, hfin_ref,
                     xg_scr, hs_scr, h_scr,
                     *, hp, time_block, seq_len, padded_time, mm_dtype):
    blk = pl.program_id(0)
    t_dim, b_dim, ip = x_ref.shape
    h3 = xg_scr.shape[-1]
    op = out_ref.shape[-1]

    @pl.when(blk == 0)
    def _():
        h_scr[...] = h0_ref[...]

    # --- 1) input-side gate pre-activations for this time block -----------
    x_flat = x_ref[...].reshape(t_dim * b_dim, ip)
    xg = (jnp.dot(x_flat, wx_ref[...], preferred_element_type=jnp.float32)
          + bx_ref[...])
    xg_scr[...] = xg.reshape(t_dim, b_dim, h3)

    # --- 2) recurrence (serial path: two small matmuls per step) ----------
    def step(t, h):
        xg_t = xg_scr[t]                                    # (Bp, 3*Hp) f32
        # Fused reset/update gates: one (Bp,Hp)x(Hp,2Hp) matmul, then slice.
        rz = jax.nn.sigmoid(
            jnp.dot(h.astype(mm_dtype), wrz_ref[...],
                    preferred_element_type=jnp.float32)
            + xg_t[:, :2 * hp])
        r = rz[:, :hp]
        z = rz[:, hp:]
        n = jnp.tanh(
            jnp.dot((r * h).astype(mm_dtype), wn_ref[...],
                    preferred_element_type=jnp.float32)
            + xg_t[:, 2 * hp:])
        h_t = (1.0 - z) * n + z * h
        hs_scr[t] = h_t
        if padded_time:
            # Don't advance the hidden state on padded (fake) timesteps.
            valid = (blk * time_block + t) < seq_len
            h_t = jnp.where(valid, h_t, h)
        return h_t

    h_final = lax.fori_loop(0, time_block, step, h_scr[...], unroll=True)
    h_scr[...] = h_final

    # --- 3) projection + log-softmax epilogue ------------------------------
    # Padded output columns: wo cols are zero and bo cols are -1e30, so the
    # mask is baked into the bias -- no iota/where needed here.
    h_flat = hs_scr[...].reshape(t_dim * b_dim, hp)
    logits = (jnp.dot(h_flat.astype(mm_dtype), wo_ref[...],
                      preferred_element_type=jnp.float32)
              + bo_ref[...])
    m = jnp.max(logits, axis=-1, keepdims=True)
    lse = m + jnp.log(jnp.sum(jnp.exp(logits - m), axis=-1, keepdims=True))
    out_ref[...] = (logits - lse).reshape(t_dim, b_dim, op)

    @pl.when(blk == pl.num_programs(0) - 1)
    def _():
        hfin_ref[...] = h_final


# ---------------------------------------------------------------------------
# Wrapper
# ---------------------------------------------------------------------------
def manual_gru_forward(x, h0, p, *, time_block=16, mm_dtype=jnp.bfloat16):
    S, B, I = x.shape
    H = h0.shape[-1]
    O = p['wo'].shape[-1]

    f32 = jnp.float32
    Hp = _round_up(H, 128)
    Op = _round_up(O, 128)
    Ip = _round_up(I, 128)
    Bp = _round_up(B, 8)
    T = min(time_block, S)
    Sp = _round_up(S, T)
    nblk = Sp // T
    padded_time = (Sp != S)

    # --- pad activations (x in matmul dtype; h0 stays f32) ----------------
    xp = jnp.zeros((Sp, Bp, Ip), mm_dtype).at[:S, :B, :I].set(x.astype(mm_dtype))
    h0p = jnp.zeros((Bp, Hp), f32).at[:B, :H].set(h0.astype(f32))

    # --- pack + pad weights (zero padding keeps padded lanes inert) -------
    wx = jnp.zeros((Ip, 3 * Hp), f32)
    wx = wx.at[:I, 0 * Hp:0 * Hp + H].set(p['wr_x'])
    wx = wx.at[:I, 1 * Hp:1 * Hp + H].set(p['wz_x'])
    wx = wx.at[:I, 2 * Hp:2 * Hp + H].set(p['wn_x'])
    bx = jnp.zeros((1, 3 * Hp), f32)
    bx = bx.at[:, 0 * Hp:0 * Hp + H].set(p['br'])
    bx = bx.at[:, 1 * Hp:1 * Hp + H].set(p['bz'])
    bx = bx.at[:, 2 * Hp:2 * Hp + H].set(p['bn'])

    wrz = jnp.zeros((Hp, 2 * Hp), f32)
    wrz = wrz.at[:H, 0 * Hp:0 * Hp + H].set(p['wr_h'])
    wrz = wrz.at[:H, 1 * Hp:1 * Hp + H].set(p['wz_h'])
    wn = jnp.zeros((Hp, Hp), f32).at[:H, :H].set(p['wn_h'])

    wo = jnp.zeros((Hp, Op), f32).at[:H, :O].set(p['wo'])
    # Bake the output-column mask into the padded bias lanes (applied in f32
    # AFTER the matmul, so it is never downcast/flushed).
    bo = jnp.full((1, Op), -1e30, f32)
    bo = bo.at[:, :O].set(p['bo'])

    # Matmul operands in mm_dtype (bf16 on v6e/v7x); biases stay f32.
    wx = wx.astype(mm_dtype)
    wrz = wrz.astype(mm_dtype)
    wn = wn.astype(mm_dtype)
    wo = wo.astype(mm_dtype)

    # --- VMEM budget (explicit; matters on v7x's 64 MiB VMEM) -------------
    mm_bytes = jnp.dtype(mm_dtype).itemsize
    est = (2 * T * Bp * Ip * mm_bytes                       # x block (dbl-buf)
           + 2 * T * Bp * Op * 4                            # out block
           + 2 * (Ip * 3 * Hp + Hp * 2 * Hp + Hp * Hp + Hp * Op) * mm_bytes
           + 2 * (3 * Hp + Op) * 4                          # biases
           + 4 * Bp * Hp * 4                                # h0 / hfin
           + T * Bp * 3 * Hp * 4 + T * Bp * Hp * 4 + Bp * Hp * 4)  # scratch
    vmem_limit = max(32 * 1024 * 1024, min(64 * 1024 * 1024, 2 * est))

    kernel = functools.partial(
        fused_gru_kernel,
        hp=Hp, time_block=T, seq_len=S, padded_time=padded_time,
        mm_dtype=mm_dtype)

    outp, h_fin = pl.pallas_call(
        kernel,
        out_shape=(jax.ShapeDtypeStruct((Sp, Bp, Op), f32),
                   jax.ShapeDtypeStruct((Bp, Hp), f32)),
        grid_spec=pltpu.PrefetchScalarGridSpec(
            num_scalar_prefetch=0,
            grid=(nblk,),
            in_specs=[
                pl.BlockSpec((T, Bp, Ip), lambda b: (b, 0, 0)),      # x block
                pl.BlockSpec((Bp, Hp), lambda b: (0, 0)),            # h0
                pl.BlockSpec((Ip, 3 * Hp), lambda b: (0, 0)),        # wx
                pl.BlockSpec((1, 3 * Hp), lambda b: (0, 0)),         # bx
                pl.BlockSpec((Hp, 2 * Hp), lambda b: (0, 0)),        # wrz
                pl.BlockSpec((Hp, Hp), lambda b: (0, 0)),            # wn
                pl.BlockSpec((Hp, Op), lambda b: (0, 0)),            # wo
                pl.BlockSpec((1, Op), lambda b: (0, 0)),             # bo
            ],
            out_specs=[
                pl.BlockSpec((T, Bp, Op), lambda b: (b, 0, 0)),      # log-probs
                pl.BlockSpec((Bp, Hp), lambda b: (0, 0)),            # final h
            ],
            scratch_shapes=[
                pltpu.VMEM((T, Bp, 3 * Hp), f32),    # xg (never hits HBM)
                pltpu.VMEM((T, Bp, Hp), f32),        # hs (never hits HBM)
                pltpu.VMEM((Bp, Hp), f32),           # carried hidden state
            ],
        ),
        compiler_params=pltpu.CompilerParams(
            dimension_semantics=("arbitrary",),
            vmem_limit_bytes=int(vmem_limit)),
    )(xp, h0p, wx, bx, wrz, wn, wo, bo)

    out_seq = outp[:S, :B, :O]
    # torch returns h_prev with a leading singleton dim: (1, batch, hidden)
    h_final = h_fin[:B, :H][None]
    return out_seq, h_final


# ---------------------------------------------------------------------------
# Params + pure-JAX reference (mirrors the torch module exactly)
# ---------------------------------------------------------------------------
def init_params(key, input_size, hidden_size, output_size):
    """Deterministic torch-like nn.Linear init (uniform +-1/sqrt(fan_in))."""
    ks = jax.random.split(key, 8)

    def linear(kw, kb, fan_in, fan_out):
        bound = 1.0 / float(fan_in) ** 0.5
        w = jax.random.uniform(kw, (fan_out, fan_in), jnp.float32, -bound, bound)
        b = jax.random.uniform(kb, (fan_out,), jnp.float32, -bound, bound)
        return w, b

    H = hidden_size
    wr, br = linear(ks[0], ks[1], input_size + H, H)
    wz, bz = linear(ks[2], ks[3], input_size + H, H)
    wn, bn = linear(ks[4], ks[5], input_size + H, H)
    wo, bo = linear(ks[6], ks[7], H, output_size)

    # torch applies W to combined=[h, x]; split the (out,in) weight columns and transpose.
    return dict(
        wr_h=wr[:, :H].T, wr_x=wr[:, H:].T, br=br[None, :],
        wz_h=wz[:, :H].T, wz_x=wz[:, H:].T, bz=bz[None, :],
        wn_h=wn[:, :H].T, wn_x=wn[:, H:].T, bn=bn[None, :],
        wo=wo.T, bo=bo[None, :],
    )


def ref_forward(x, h0, p):
    def step(h, x_t):
        r = jax.nn.sigmoid(h @ p['wr_h'] + x_t @ p['wr_x'] + p['br'])
        z = jax.nn.sigmoid(h @ p['wz_h'] + x_t @ p['wz_x'] + p['bz'])
        n = jnp.tanh((r * h) @ p['wn_h'] + x_t @ p['wn_x'] + p['bn'])
        h_t = (1.0 - z) * n + z * h
        return h_t, h_t
    h_fin, hs = jax.lax.scan(step, h0, x)
    logits = hs @ p['wo'] + p['bo']
    return jax.nn.log_softmax(logits, axis=-1), h_fin[None]


if __name__ == "__main__":
    SEQ, BATCH, INPUT, HIDDEN, OUTPUT = 8, 1, 16, 32, 10

    key = jax.random.PRNGKey(0)
    kx, kp = jax.random.split(key)
    x = jax.random.normal(kx, (SEQ, BATCH, INPUT), jnp.float32)
    h0 = jnp.zeros((BATCH, HIDDEN), jnp.float32)     # init_hidden() equivalent
    params = init_params(kp, INPUT, HIDDEN, OUTPUT)

    ref_out, ref_h = ref_forward(x, h0, params)

    # Production path: bf16 MXU operands, f32 accumulation + gate math.
    out_seq, h_fin = manual_gru_forward(x, h0, params)
    out_seq = jax.block_until_ready(out_seq)
    h_fin = jax.block_until_ready(h_fin)
    assert out_seq.shape == (SEQ, BATCH, OUTPUT)
    assert h_fin.shape == (1, BATCH, HIDDEN)
    assert jnp.allclose(out_seq, ref_out, atol=3e-2, rtol=3e-2)
    assert jnp.allclose(h_fin, ref_h, atol=3e-2, rtol=3e-2)

    # Structural check: same kernel with f32 matmuls matches to tight tolerance.
    out32, h32 = manual_gru_forward(x, h0, params, mm_dtype=jnp.float32)
    out32 = jax.block_until_ready(out32)
    h32 = jax.block_until_ready(h32)
    assert jnp.allclose(out32, ref_out, atol=1e-4, rtol=1e-4)
    assert jnp.allclose(h32, ref_h, atol=1e-4, rtol=1e-4)

    print("KERNEL_OK")
</pallas_src>

<mosaic_0001>
module attributes {stable_mosaic.version = 11 : i64} {
  func.func @fused_gru_kernel(%arg0: i32, %arg1: memref<8x8x128xbf16, #tpu.memory_space<vmem>>, %arg2: memref<8x128xf32, #tpu.memory_space<vmem>>, %arg3: memref<128x384xbf16, #tpu.memory_space<vmem>>, %arg4: memref<1x384xf32, #tpu.memory_space<vmem>>, %arg5: memref<128x256xbf16, #tpu.memory_space<vmem>>, %arg6: memref<128x128xbf16, #tpu.memory_space<vmem>>, %arg7: memref<128x128xbf16, #tpu.memory_space<vmem>>, %arg8: memref<1x128xf32, #tpu.memory_space<vmem>>, %arg9: memref<8x8x128xf32, #tpu.memory_space<vmem>>, %arg10: memref<8x128xf32, #tpu.memory_space<vmem>>, %arg11: memref<8x8x384xf32, #tpu.memory_space<vmem>>, %arg12: memref<8x8x128xf32, #tpu.memory_space<vmem>>, %arg13: memref<8x128xf32, #tpu.memory_space<vmem>>) attributes {dimension_semantics = [#tpu.dimension_semantics<arbitrary>], iteration_bounds = array<i64: 1>, scalar_prefetch = 0 : i64, scratch_operands = 3 : i64, tpu.core_type = #tpu.core_type<tc>, window_params = [{transform_indices = @transform_0, window_bounds = array<i64: 8, 8, 128>}, {pipeline_mode = #tpu.pipeline_mode<synchronous>, transform_indices = @transform_1, window_bounds = array<i64: 8, 128>}, {pipeline_mode = #tpu.pipeline_mode<synchronous>, transform_indices = @transform_2, window_bounds = array<i64: 128, 384>}, {pipeline_mode = #tpu.pipeline_mode<synchronous>, transform_indices = @transform_3, window_bounds = array<i64: 1, 384>}, {pipeline_mode = #tpu.pipeline_mode<synchronous>, transform_indices = @transform_4, window_bounds = array<i64: 128, 256>}, {pipeline_mode = #tpu.pipeline_mode<synchronous>, transform_indices = @transform_5, window_bounds = array<i64: 128, 128>}, {pipeline_mode = #tpu.pipeline_mode<synchronous>, transform_indices = @transform_6, window_bounds = array<i64: 128, 128>}, {pipeline_mode = #tpu.pipeline_mode<synchronous>, transform_indices = @transform_7, window_bounds = array<i64: 1, 128>}, {transform_indices = @transform_8, window_bounds = array<i64: 8, 8, 128>}, {pipeline_mode = #tpu.pipeline_mode<synchronous>, transform_indices = @transform_9, window_bounds = array<i64: 8, 128>}]} {
    %c0_i32 = arith.constant 0 : i32
    %0 = arith.cmpi eq, %arg0, %c0_i32 : i32
    %1 = arith.extui %0 : i1 to i32
    %c0_i32_0 = arith.constant 0 : i32
    %2 = arith.cmpi ne, %1, %c0_i32_0 : i32
    scf.if %2 {
      %c0_126 = arith.constant 0 : index
      %c0_127 = arith.constant 0 : index
      %286 = vector.load %arg2[%c0_126, %c0_127] : memref<8x128xf32, #tpu.memory_space<vmem>>, vector<8x128xf32>
      %c0_128 = arith.constant 0 : index
      %c0_129 = arith.constant 0 : index
      %287 = vector.load %arg13[%c0_128, %c0_129] : memref<8x128xf32, #tpu.memory_space<vmem>>, vector<8x128xf32>
      tpu.vector_store %arg13[%c0_128, %c0_129], %286 {strides = array<i32>} : memref<8x128xf32, #tpu.memory_space<vmem>>, vector<8x128xf32>,
    } else {
    }
    %c0 = arith.constant 0 : index
    %c0_1 = arith.constant 0 : index
    %c0_2 = arith.constant 0 : index
    %3 = vector.load %arg1[%c0, %c0_1, %c0_2] : memref<8x8x128xbf16, #tpu.memory_space<vmem>>, vector<8x8x128xbf16>
    %4 = vector.shape_cast %3 : vector<8x8x128xbf16> to vector<64x128xbf16>
    %c0_3 = arith.constant 0 : index
    %c0_4 = arith.constant 0 : index
    %5 = vector.load %arg3[%c0_3, %c0_4] : memref<128x384xbf16, #tpu.memory_space<vmem>>, vector<128x384xbf16>
    %cst = arith.constant dense<0.000000e+00> : vector<64x384xf32>
    %6 = tpu.matmul %4, %5, %cst {dimension_numbers = #tpu.dot_dimension_numbers<[1], [0], [0], [1], [0, 0, 1, 1], [], []>} : vector<64x128xbf16>, vector<128x384xbf16>, vector<64x384xf32> -> vector<64x384xf32>
    %c0_5 = arith.constant 0 : index
    %c0_6 = arith.constant 0 : index
    %7 = vector.load %arg4[%c0_5, %c0_6] : memref<1x384xf32, #tpu.memory_space<vmem>>, vector<1x384xf32>
    %8 = vector.broadcast %7 : vector<1x384xf32> to vector<64x384xf32>
    %9 = arith.addf %6, %8 : vector<64x384xf32>
    %10 = vector.shape_cast %9 : vector<64x384xf32> to vector<8x8x384xf32>
    %c0_7 = arith.constant 0 : index
    %c0_8 = arith.constant 0 : index
    %c0_9 = arith.constant 0 : index
    %11 = vector.load %arg11[%c0_7, %c0_8, %c0_9] : memref<8x8x384xf32, #tpu.memory_space<vmem>>, vector<8x8x384xf32>
    tpu.vector_store %arg11[%c0_7, %c0_8, %c0_9], %10 {strides = array<i32>} : memref<8x8x384xf32, #tpu.memory_space<vmem>>, vector<8x8x384xf32>,
    %c0_10 = arith.constant 0 : index
    %c0_11 = arith.constant 0 : index
    %12 = vector.load %arg13[%c0_10, %c0_11] : memref<8x128xf32, #tpu.memory_space<vmem>>, vector<8x128xf32>
    %c0_i32_12 = arith.constant 0 : i32
    %13 = arith.index_cast %c0_i32_12 : i32 to index
    %c0_13 = arith.constant 0 : index
    %c0_14 = arith.constant 0 : index
    %14 = vector.load %arg11[%13, %c0_13, %c0_14] : memref<8x8x384xf32, #tpu.memory_space<vmem>>, vector<1x8x384xf32>
    %15 = vector.shape_cast %14 : vector<1x8x384xf32> to vector<8x384xf32>
    %16 = arith.truncf %12 : vector<8x128xf32> to vector<8x128xbf16>
    %c0_15 = arith.constant 0 : index
    %c0_16 = arith.constant 0 : index
    %17 = vector.load %arg5[%c0_15, %c0_16] : memref<128x256xbf16, #tpu.memory_space<vmem>>, vector<128x256xbf16>
    %cst_17 = arith.constant dense<0.000000e+00> : vector<8x256xf32>
    %18 = tpu.matmul %16, %17, %cst_17 {dimension_numbers = #tpu.dot_dimension_numbers<[1], [0], [0], [1], [0, 0, 1, 1], [], []>} : vector<8x128xbf16>, vector<128x256xbf16>, vector<8x256xf32> -> vector<8x256xf32>
    %19 = vector.extract_strided_slice %15 {offsets = [0, 0], sizes = [8, 256], strides = [1, 1]} : vector<8x384xf32> to vector<8x256xf32>
    %20 = arith.addf %18, %19 : vector<8x256xf32>
    %21 = arith.negf %20 : vector<8x256xf32>
    %22 = math.exp %21 : vector<8x256xf32>
    %cst_18 = arith.constant 1.000000e+00 : f32
    %23 = vector.broadcast %cst_18 : f32 to vector<8x256xf32>
    %24 = arith.addf %23, %22 : vector<8x256xf32>
    %25 = arith.divf %23, %24 : vector<8x256xf32>
    %26 = vector.extract_strided_slice %25 {offsets = [0, 0], sizes = [8, 128], strides = [1, 1]} : vector<8x256xf32> to vector<8x128xf32>
    %27 = vector.extract_strided_slice %25 {offsets = [0, 128], sizes = [8, 128], strides = [1, 1]} : vector<8x256xf32> to vector<8x128xf32>
    %28 = arith.mulf %26, %12 : vector<8x128xf32>
    %29 = arith.truncf %28 : vector<8x128xf32> to vector<8x128xbf16>
    %c0_19 = arith.constant 0 : index
    %c0_20 = arith.constant 0 : index
    %30 = vector.load %arg6[%c0_19, %c0_20] : memref<128x128xbf16, #tpu.memory_space<vmem>>, vector<128x128xbf16>
    %cst_21 = arith.constant dense<0.000000e+00> : vector<8x128xf32>
    %31 = tpu.matmul %29, %30, %cst_21 {dimension_numbers = #tpu.dot_dimension_numbers<[1], [0], [0], [1], [0, 0, 1, 1], [], []>} : vector<8x128xbf16>, vector<128x128xbf16>, vector<8x128xf32> -> vector<8x128xf32>
    %32 = vector.extract_strided_slice %15 {offsets = [0, 256], sizes = [8, 128], strides = [1, 1]} : vector<8x384xf32> to vector<8x128xf32>
    %33 = arith.addf %31, %32 : vector<8x128xf32>
    %34 = math.tanh %33 : vector<8x128xf32>
    %cst_22 = arith.constant 1.000000e+00 : f32
    %35 = vector.broadcast %cst_22 : f32 to vector<8x128xf32>
    %36 = arith.subf %35, %27 : vector<8x128xf32>
    %37 = arith.mulf %36, %34 : vector<8x128xf32>
    %38 = arith.mulf %27, %12 : vector<8x128xf32>
    %39 = arith.addf %37, %38 : vector<8x128xf32>
    %40 = arith.index_cast %c0_i32_12 : i32 to index
    %c0_23 = arith.constant 0 : index
    %c0_24 = arith.constant 0 : index
    %41 = vector.load %arg12[%40, %c0_23, %c0_24] : memref<8x8x128xf32, #tpu.memory_space<vmem>>, vector<1x8x128xf32>
    %42 = vector.shape_cast %41 : vector<1x8x128xf32> to vector<8x128xf32>
    %43 = vector.shape_cast %39 : vector<8x128xf32> to vector<1x8x128xf32>
    tpu.vector_store %arg12[%40, %c0_23, %c0_24], %43 {strides = array<i32>} : memref<8x8x128xf32, #tpu.memory_space<vmem>>, vector<1x8x128xf32>,
    %c1_i32 = arith.constant 1 : i32
    %44 = arith.index_cast %c1_i32 : i32 to index
    %c0_25 = arith.constant 0 : index
    %c0_26 = arith.constant 0 : index
    %45 = vector.load %arg11[%44, %c0_25, %c0_26] : memref<8x8x384xf32, #tpu.memory_space<vmem>>, vector<1x8x384xf32>
    %46 = vector.shape_cast %45 : vector<1x8x384xf32> to vector<8x384xf32>
    %47 = arith.truncf %39 : vector<8x128xf32> to vector<8x128xbf16>
    %c0_27 = arith.constant 0 : index
    %c0_28 = arith.constant 0 : index
    %48 = vector.load %arg5[%c0_27, %c0_28] : memref<128x256xbf16, #tpu.memory_space<vmem>>, vector<128x256xbf16>
    %cst_29 = arith.constant dense<0.000000e+00> : vector<8x256xf32>
    %49 = tpu.matmul %47, %48, %cst_29 {dimension_numbers = #tpu.dot_dimension_numbers<[1], [0], [0], [1], [0, 0, 1, 1], [], []>} : vector<8x128xbf16>, vector<128x256xbf16>, vector<8x256xf32> -> vector<8x256xf32>
    %50 = vector.extract_strided_slice %46 {offsets = [0, 0], sizes = [8, 256], strides = [1, 1]} : vector<8x384xf32> to vector<8x256xf32>
    %51 = arith.addf %49, %50 : vector<8x256xf32>
    %52 = arith.negf %51 : vector<8x256xf32>
    %53 = math.exp %52 : vector<8x256xf32>
    %cst_30 = arith.constant 1.000000e+00 : f32
    %54 = vector.broadcast %cst_30 : f32 to vector<8x256xf32>
    %55 = arith.addf %54, %53 : vector<8x256xf32>
    %56 = arith.divf %54, %55 : vector<8x256xf32>
    %57 = vector.extract_strided_slice %56 {offsets = [0, 0], sizes = [8, 128], strides = [1, 1]} : vector<8x256xf32> to vector<8x128xf32>
    %58 = vector.extract_strided_slice %56 {offsets = [0, 128], sizes = [8, 128], strides = [1, 1]} : vector<8x256xf32> to vector<8x128xf32>
    %59 = arith.mulf %57, %39 : vector<8x128xf32>
    %60 = arith.truncf %59 : vector<8x128xf32> to vector<8x128xbf16>
    %c0_31 = arith.constant 0 : index
    %c0_32 = arith.constant 0 : index
    %61 = vector.load %arg6[%c0_31, %c0_32] : memref<128x128xbf16, #tpu.memory_space<vmem>>, vector<128x128xbf16>
    %cst_33 = arith.constant dense<0.000000e+00> : vector<8x128xf32>
    %62 = tpu.matmul %60, %61, %cst_33 {dimension_numbers = #tpu.dot_dimension_numbers<[1], [0], [0], [1], [0, 0, 1, 1], [], []>} : vector<8x128xbf16>, vector<128x128xbf16>, vector<8x128xf32> -> vector<8x128xf32>
    %63 = vector.extract_strided_slice %46 {offsets = [0, 256], sizes = [8, 128], strides = [1, 1]} : vector<8x384xf32> to vector<8x128xf32>
    %64 = arith.addf %62, %63 : vector<8x128xf32>
    %65 = math.tanh %64 : vector<8x128xf32>
    %cst_34 = arith.constant 1.000000e+00 : f32
    %66 = vector.broadcast %cst_34 : f32 to vector<8x128xf32>
    %67 = arith.subf %66, %58 : vector<8x128xf32>
    %68 = arith.mulf %67, %65 : vector<8x128xf32>
    %69 = arith.mulf %58, %39 : vector<8x128xf32>
    %70 = arith.addf %68, %69 : vector<8x128xf32>
    %71 = arith.index_cast %c1_i32 : i32 to index
    %c0_35 = arith.constant 0 : index
    %c0_36 = arith.constant 0 : index
    %72 = vector.load %arg12[%71, %c0_35, %c0_36] : memref<8x8x128xf32, #tpu.memory_space<vmem>>, vector<1x8x128xf32>
    %73 = vector.shape_cast %72 : vector<1x8x128xf32> to vector<8x128xf32>
    %74 = vector.shape_cast %70 : vector<8x128xf32> to vector<1x8x128xf32>
    tpu.vector_store %arg12[%71, %c0_35, %c0_36], %74 {strides = array<i32>} : memref<8x8x128xf32, #tpu.memory_space<vmem>>, vector<1x8x128xf32>,
    %c2_i32 = arith.constant 2 : i32
    %75 = arith.index_cast %c2_i32 : i32 to index
    %c0_37 = arith.constant 0 : index
    %c0_38 = arith.constant 0 : index
    %76 = vector.load %arg11[%75, %c0_37, %c0_38] : memref<8x8x384xf32, #tpu.memory_space<vmem>>, vector<1x8x384xf32>
    %77 = vector.shape_cast %76 : vector<1x8x384xf32> to vector<8x384xf32>
    %78 = arith.truncf %70 : vector<8x128xf32> to vector<8x128xbf16>
    %c0_39 = arith.constant 0 : index
    %c0_40 = arith.constant 0 : index
    %79 = vector.load %arg5[%c0_39, %c0_40] : memref<128x256xbf16, #tpu.memory_space<vmem>>, vector<128x256xbf16>
    %cst_41 = arith.constant dense<0.000000e+00> : vector<8x256xf32>
    %80 = tpu.matmul %78, %79, %cst_41 {dimension_numbers = #tpu.dot_dimension_numbers<[1], [0], [0], [1], [0, 0, 1, 1], [], []>} : vector<8x128xbf16>, vector<128x256xbf16>, vector<8x256xf32> -> vector<8x256xf32>
    %81 = vector.extract_strided_slice %77 {offsets = [0, 0], sizes = [8, 256], strides = [1, 1]} : vector<8x384xf32> to vector<8x256xf32>
    %82 = arith.addf %80, %81 : vector<8x256xf32>
    %83 = arith.negf %82 : vector<8x256xf32>
    %84 = math.exp %83 : vector<8x256xf32>
    %cst_42 = arith.constant 1.000000e+00 : f32
    %85 = vector.broadcast %cst_42 : f32 to vector<8x256xf32>
    %86 = arith.addf %85, %84 : vector<8x256xf32>
    %87 = arith.divf %85, %86 : vector<8x256xf32>
    %88 = vector.extract_strided_slice %87 {offsets = [0, 0], sizes = [8, 128], strides = [1, 1]} : vector<8x256xf32> to vector<8x128xf32>
    %89 = vector.extract_strided_slice %87 {offsets = [0, 128], sizes = [8, 128], strides = [1, 1]} : vector<8x256xf32> to vector<8x128xf32>
    %90 = arith.mulf %88, %70 : vector<8x128xf32>
    %91 = arith.truncf %90 : vector<8x128xf32> to vector<8x128xbf16>
    %c0_43 = arith.constant 0 : index
    %c0_44 = arith.constant 0 : index
    %92 = vector.load %arg6[%c0_43, %c0_44] : memref<128x128xbf16, #tpu.memory_space<vmem>>, vector<128x128xbf16>
    %cst_45 = arith.constant dense<0.000000e+00> : vector<8x128xf32>
    %93 = tpu.matmul %91, %92, %cst_45 {dimension_numbers = #tpu.dot_dimension_numbers<[1], [0], [0], [1], [0, 0, 1, 1], [], []>} : vector<8x128xbf16>, vector<128x128xbf16>, vector<8x128xf32> -> vector<8x128xf32>
    %94 = vector.extract_strided_slice %77 {offsets = [0, 256], sizes = [8, 128], strides = [1, 1]} : vector<8x384xf32> to vector<8x128xf32>
    %95 = arith.addf %93, %94 : vector<8x128xf32>
    %96 = math.tanh %95 : vector<8x128xf32>
    %cst_46 = arith.constant 1.000000e+00 : f32
    %97 = vector.broadcast %cst_46 : f32 to vector<8x128xf32>
    %98 = arith.subf %97, %89 : vector<8x128xf32>
    %99 = arith.mulf %98, %96 : vector<8x128xf32>
    %100 = arith.mulf %89, %70 : vector<8x128xf32>
    %101 = arith.addf %99, %100 : vector<8x128xf32>
    %102 = arith.index_cast %c2_i32 : i32 to index
    %c0_47 = arith.constant 0 : index
    %c0_48 = arith.constant 0 : index
    %103 = vector.load %arg12[%102, %c0_47, %c0_48] : memref<8x8x128xf32, #tpu.memory_space<vmem>>, vector<1x8x128xf32>
    %104 = vector.shape_cast %103 : vector<1x8x128xf32> to vector<8x128xf32>
    %105 = vector.shape_cast %101 : vector<8x128xf32> to vector<1x8x128xf32>
    tpu.vector_store %arg12[%102, %c0_47, %c0_48], %105 {strides = array<i32>} : memref<8x8x128xf32, #tpu.memory_space<vmem>>, vector<1x8x128xf32>,
    %c3_i32 = arith.constant 3 : i32
    %106 = arith.index_cast %c3_i32 : i32 to index
    %c0_49 = arith.constant 0 : index
    %c0_50 = arith.constant 0 : index
    %107 = vector.load %arg11[%106, %c0_49, %c0_50] : memref<8x8x384xf32, #tpu.memory_space<vmem>>, vector<1x8x384xf32>
    %108 = vector.shape_cast %107 : vector<1x8x384xf32> to vector<8x384xf32>
    %109 = arith.truncf %101 : vector<8x128xf32> to vector<8x128xbf16>
    %c0_51 = arith.constant 0 : index
    %c0_52 = arith.constant 0 : index
    %110 = vector.load %arg5[%c0_51, %c0_52] : memref<128x256xbf16, #tpu.memory_space<vmem>>, vector<128x256xbf16>
    %cst_53 = arith.constant dense<0.000000e+00> : vector<8x256xf32>
    %111 = tpu.matmul %109, %110, %cst_53 {dimension_numbers = #tpu.dot_dimension_numbers<[1], [0], [0], [1], [0, 0, 1, 1], [], []>} : vector<8x128xbf16>, vector<128x256xbf16>, vector<8x256xf32> -> vector<8x256xf32>
    %112 = vector.extract_strided_slice %108 {offsets = [0, 0], sizes = [8, 256], strides = [1, 1]} : vector<8x384xf32> to vector<8x256xf32>
    %113 = arith.addf %111, %112 : vector<8x256xf32>
    %114 = arith.negf %113 : vector<8x256xf32>
    %115 = math.exp %114 : vector<8x256xf32>
    %cst_54 = arith.constant 1.000000e+00 : f32
    %116 = vector.broadcast %cst_54 : f32 to vector<8x256xf32>
    %117 = arith.addf %116, %115 : vector<8x256xf32>
    %118 = arith.divf %116, %117 : vector<8x256xf32>
    %119 = vector.extract_strided_slice %118 {offsets = [0, 0], sizes = [8, 128], strides = [1, 1]} : vector<8x256xf32> to vector<8x128xf32>
    %120 = vector.extract_strided_slice %118 {offsets = [0, 128], sizes = [8, 128], strides = [1, 1]} : vector<8x256xf32> to vector<8x128xf32>
    %121 = arith.mulf %119, %101 : vector<8x128xf32>
    %122 = arith.truncf %121 : vector<8x128xf32> to vector<8x128xbf16>
    %c0_55 = arith.constant 0 : index
    %c0_56 = arith.constant 0 : index
    %123 = vector.load %arg6[%c0_55, %c0_56] : memref<128x128xbf16, #tpu.memory_space<vmem>>, vector<128x128xbf16>
    %cst_57 = arith.constant dense<0.000000e+00> : vector<8x128xf32>
    %124 = tpu.matmul %122, %123, %cst_57 {dimension_numbers = #tpu.dot_dimension_numbers<[1], [0], [0], [1], [0, 0, 1, 1], [], []>} : vector<8x128xbf16>, vector<128x128xbf16>, vector<8x128xf32> -> vector<8x128xf32>
    %125 = vector.extract_strided_slice %108 {offsets = [0, 256], sizes = [8, 128], strides = [1, 1]} : vector<8x384xf32> to vector<8x128xf32>
    %126 = arith.addf %124, %125 : vector<8x128xf32>
    %127 = math.tanh %126 : vector<8x128xf32>
    %cst_58 = arith.constant 1.000000e+00 : f32
    %128 = vector.broadcast %cst_58 : f32 to vector<8x128xf32>
    %129 = arith.subf %128, %120 : vector<8x128xf32>
    %130 = arith.mulf %129, %127 : vector<8x128xf32>
    %131 = arith.mulf %120, %101 : vector<8x128xf32>
    %132 = arith.addf %130, %131 : vector<8x128xf32>
    %133 = arith.index_cast %c3_i32 : i32 to index
    %c0_59 = arith.constant 0 : index
    %c0_60 = arith.constant 0 : index
    %134 = vector.load %arg12[%133, %c0_59, %c0_60] : memref<8x8x128xf32, #tpu.memory_space<vmem>>, vector<1x8x128xf32>
    %135 = vector.shape_cast %134 : vector<1x8x128xf32> to vector<8x128xf32>
    %136 = vector.shape_cast %132 : vector<8x128xf32> to vector<1x8x128xf32>
    tpu.vector_store %arg12[%133, %c0_59, %c0_60], %136 {strides = array<i32>} : memref<8x8x128xf32, #tpu.memory_space<vmem>>, vector<1x8x128xf32>,
    %c4_i32 = arith.constant 4 : i32
    %137 = arith.index_cast %c4_i32 : i32 to index
    %c0_61 = arith.constant 0 : index
    %c0_62 = arith.constant 0 : index
    %138 = vector.load %arg11[%137, %c0_61, %c0_62] : memref<8x8x384xf32, #tpu.memory_space<vmem>>, vector<1x8x384xf32>
    %139 = vector.shape_cast %138 : vector<1x8x384xf32> to vector<8x384xf32>
    %140 = arith.truncf %132 : vector<8x128xf32> to vector<8x128xbf16>
    %c0_63 = arith.constant 0 : index
    %c0_64 = arith.constant 0 : index
    %141 = vector.load %arg5[%c0_63, %c0_64] : memref<128x256xbf16, #tpu.memory_space<vmem>>, vector<128x256xbf16>
    %cst_65 = arith.constant dense<0.000000e+00> : vector<8x256xf32>
    %142 = tpu.matmul %140, %141, %cst_65 {dimension_numbers = #tpu.dot_dimension_numbers<[1], [0], [0], [1], [0, 0, 1, 1], [], []>} : vector<8x128xbf16>, vector<128x256xbf16>, vector<8x256xf32> -> vector<8x256xf32>
    %143 = vector.extract_strided_slice %139 {offsets = [0, 0], sizes = [8, 256], strides = [1, 1]} : vector<8x384xf32> to vector<8x256xf32>
    %144 = arith.addf %142, %143 : vector<8x256xf32>
    %145 = arith.negf %144 : vector<8x256xf32>
    %146 = math.exp %145 : vector<8x256xf32>
    %cst_66 = arith.constant 1.000000e+00 : f32
    %147 = vector.broadcast %cst_66 : f32 to vector<8x256xf32>
    %148 = arith.addf %147, %146 : vector<8x256xf32>
    %149 = arith.divf %147, %148 : vector<8x256xf32>
    %150 = vector.extract_strided_slice %149 {offsets = [0, 0], sizes = [8, 128], strides = [1, 1]} : vector<8x256xf32> to vector<8x128xf32>
    %151 = vector.extract_strided_slice %149 {offsets = [0, 128], sizes = [8, 128], strides = [1, 1]} : vector<8x256xf32> to vector<8x128xf32>
    %152 = arith.mulf %150, %132 : vector<8x128xf32>
    %153 = arith.truncf %152 : vector<8x128xf32> to vector<8x128xbf16>
    %c0_67 = arith.constant 0 : index
    %c0_68 = arith.constant 0 : index
    %154 = vector.load %arg6[%c0_67, %c0_68] : memref<128x128xbf16, #tpu.memory_space<vmem>>, vector<128x128xbf16>
    %cst_69 = arith.constant dense<0.000000e+00> : vector<8x128xf32>
    %155 = tpu.matmul %153, %154, %cst_69 {dimension_numbers = #tpu.dot_dimension_numbers<[1], [0], [0], [1], [0, 0, 1, 1], [], []>} : vector<8x128xbf16>, vector<128x128xbf16>, vector<8x128xf32> -> vector<8x128xf32>
    %156 = vector.extract_strided_slice %139 {offsets = [0, 256], sizes = [8, 128], strides = [1, 1]} : vector<8x384xf32> to vector<8x128xf32>
    %157 = arith.addf %155, %156 : vector<8x128xf32>
    %158 = math.tanh %157 : vector<8x128xf32>
    %cst_70 = arith.constant 1.000000e+00 : f32
    %159 = vector.broadcast %cst_70 : f32 to vector<8x128xf32>
    %160 = arith.subf %159, %151 : vector<8x128xf32>
    %161 = arith.mulf %160, %158 : vector<8x128xf32>
    %162 = arith.mulf %151, %132 : vector<8x128xf32>
    %163 = arith.addf %161, %162 : vector<8x128xf32>
    %164 = arith.index_cast %c4_i32 : i32 to index
    %c0_71 = arith.constant 0 : index
    %c0_72 = arith.constant 0 : index
    %165 = vector.load %arg12[%164, %c0_71, %c0_72] : memref<8x8x128xf32, #tpu.memory_space<vmem>>, vector<1x8x128xf32>
    %166 = vector.shape_cast %165 : vector<1x8x128xf32> to vector<8x128xf32>
    %167 = vector.shape_cast %163 : vector<8x128xf32> to vector<1x8x128xf32>
    tpu.vector_store %arg12[%164, %c0_71, %c0_72], %167 {strides = array<i32>} : memref<8x8x128xf32, #tpu.memory_space<vmem>>, vector<1x8x128xf32>,
    %c5_i32 = arith.constant 5 : i32
    %168 = arith.index_cast %c5_i32 : i32 to index
    %c0_73 = arith.constant 0 : index
    %c0_74 = arith.constant 0 : index
    %169 = vector.load %arg11[%168, %c0_73, %c0_74] : memref<8x8x384xf32, #tpu.memory_space<vmem>>, vector<1x8x384xf32>
    %170 = vector.shape_cast %169 : vector<1x8x384xf32> to vector<8x384xf32>
    %171 = arith.truncf %163 : vector<8x128xf32> to vector<8x128xbf16>
    %c0_75 = arith.constant 0 : index
    %c0_76 = arith.constant 0 : index
    %172 = vector.load %arg5[%c0_75, %c0_76] : memref<128x256xbf16, #tpu.memory_space<vmem>>, vector<128x256xbf16>
    %cst_77 = arith.constant dense<0.000000e+00> : vector<8x256xf32>
    %173 = tpu.matmul %171, %172, %cst_77 {dimension_numbers = #tpu.dot_dimension_numbers<[1], [0], [0], [1], [0, 0, 1, 1], [], []>} : vector<8x128xbf16>, vector<128x256xbf16>, vector<8x256xf32> -> vector<8x256xf32>
    %174 = vector.extract_strided_slice %170 {offsets = [0, 0], sizes = [8, 256], strides = [1, 1]} : vector<8x384xf32> to vector<8x256xf32>
    %175 = arith.addf %173, %174 : vector<8x256xf32>
    %176 = arith.negf %175 : vector<8x256xf32>
    %177 = math.exp %176 : vector<8x256xf32>
    %cst_78 = arith.constant 1.000000e+00 : f32
    %178 = vector.broadcast %cst_78 : f32 to vector<8x256xf32>
    %179 = arith.addf %178, %177 : vector<8x256xf32>
    %180 = arith.divf %178, %179 : vector<8x256xf32>
    %181 = vector.extract_strided_slice %180 {offsets = [0, 0], sizes = [8, 128], strides = [1, 1]} : vector<8x256xf32> to vector<8x128xf32>
    %182 = vector.extract_strided_slice %180 {offsets = [0, 128], sizes = [8, 128], strides = [1, 1]} : vector<8x256xf32> to vector<8x128xf32>
    %183 = arith.mulf %181, %163 : vector<8x128xf32>
    %184 = arith.truncf %183 : vector<8x128xf32> to vector<8x128xbf16>
    %c0_79 = arith.constant 0 : index
    %c0_80 = arith.constant 0 : index
    %185 = vector.load %arg6[%c0_79, %c0_80] : memref<128x128xbf16, #tpu.memory_space<vmem>>, vector<128x128xbf16>
    %cst_81 = arith.constant dense<0.000000e+00> : vector<8x128xf32>
    %186 = tpu.matmul %184, %185, %cst_81 {dimension_numbers = #tpu.dot_dimension_numbers<[1], [0], [0], [1], [0, 0, 1, 1], [], []>} : vector<8x128xbf16>, vector<128x128xbf16>, vector<8x128xf32> -> vector<8x128xf32>
    %187 = vector.extract_strided_slice %170 {offsets = [0, 256], sizes = [8, 128], strides = [1, 1]} : vector<8x384xf32> to vector<8x128xf32>
    %188 = arith.addf %186, %187 : vector<8x128xf32>
    %189 = math.tanh %188 : vector<8x128xf32>
    %cst_82 = arith.constant 1.000000e+00 : f32
    %190 = vector.broadcast %cst_82 : f32 to vector<8x128xf32>
    %191 = arith.subf %190, %182 : vector<8x128xf32>
    %192 = arith.mulf %191, %189 : vector<8x128xf32>
    %193 = arith.mulf %182, %163 : vector<8x128xf32>
    %194 = arith.addf %192, %193 : vector<8x128xf32>
    %195 = arith.index_cast %c5_i32 : i32 to index
    %c0_83 = arith.constant 0 : index
    %c0_84 = arith.constant 0 : index
    %196 = vector.load %arg12[%195, %c0_83, %c0_84] : memref<8x8x128xf32, #tpu.memory_space<vmem>>, vector<1x8x128xf32>
    %197 = vector.shape_cast %196 : vector<1x8x128xf32> to vector<8x128xf32>
    %198 = vector.shape_cast %194 : vector<8x128xf32> to vector<1x8x128xf32>
    tpu.vector_store %arg12[%195, %c0_83, %c0_84], %198 {strides = array<i32>} : memref<8x8x128xf32, #tpu.memory_space<vmem>>, vector<1x8x128xf32>,
    %c6_i32 = arith.constant 6 : i32
    %199 = arith.index_cast %c6_i32 : i32 to index
    %c0_85 = arith.constant 0 : index
    %c0_86 = arith.constant 0 : index
    %200 = vector.load %arg11[%199, %c0_85, %c0_86] : memref<8x8x384xf32, #tpu.memory_space<vmem>>, vector<1x8x384xf32>
    %201 = vector.shape_cast %200 : vector<1x8x384xf32> to vector<8x384xf32>
    %202 = arith.truncf %194 : vector<8x128xf32> to vector<8x128xbf16>
    %c0_87 = arith.constant 0 : index
    %c0_88 = arith.constant 0 : index
    %203 = vector.load %arg5[%c0_87, %c0_88] : memref<128x256xbf16, #tpu.memory_space<vmem>>, vector<128x256xbf16>
    %cst_89 = arith.constant dense<0.000000e+00> : vector<8x256xf32>
    %204 = tpu.matmul %202, %203, %cst_89 {dimension_numbers = #tpu.dot_dimension_numbers<[1], [0], [0], [1], [0, 0, 1, 1], [], []>} : vector<8x128xbf16>, vector<128x256xbf16>, vector<8x256xf32> -> vector<8x256xf32>
    %205 = vector.extract_strided_slice %201 {offsets = [0, 0], sizes = [8, 256], strides = [1, 1]} : vector<8x384xf32> to vector<8x256xf32>
    %206 = arith.addf %204, %205 : vector<8x256xf32>
    %207 = arith.negf %206 : vector<8x256xf32>
    %208 = math.exp %207 : vector<8x256xf32>
    %cst_90 = arith.constant 1.000000e+00 : f32
    %209 = vector.broadcast %cst_90 : f32 to vector<8x256xf32>
    %210 = arith.addf %209, %208 : vector<8x256xf32>
    %211 = arith.divf %209, %210 : vector<8x256xf32>
    %212 = vector.extract_strided_slice %211 {offsets = [0, 0], sizes = [8, 128], strides = [1, 1]} : vector<8x256xf32> to vector<8x128xf32>
    %213 = vector.extract_strided_slice %211 {offsets = [0, 128], sizes = [8, 128], strides = [1, 1]} : vector<8x256xf32> to vector<8x128xf32>
    %214 = arith.mulf %212, %194 : vector<8x128xf32>
    %215 = arith.truncf %214 : vector<8x128xf32> to vector<8x128xbf16>
    %c0_91 = arith.constant 0 : index
    %c0_92 = arith.constant 0 : index
    %216 = vector.load %arg6[%c0_91, %c0_92] : memref<128x128xbf16, #tpu.memory_space<vmem>>, vector<128x128xbf16>
    %cst_93 = arith.constant dense<0.000000e+00> : vector<8x128xf32>
    %217 = tpu.matmul %215, %216, %cst_93 {dimension_numbers = #tpu.dot_dimension_numbers<[1], [0], [0], [1], [0, 0, 1, 1], [], []>} : vector<8x128xbf16>, vector<128x128xbf16>, vector<8x128xf32> -> vector<8x128xf32>
    %218 = vector.extract_strided_slice %201 {offsets = [0, 256], sizes = [8, 128], strides = [1, 1]} : vector<8x384xf32> to vector<8x128xf32>
    %219 = arith.addf %217, %218 : vector<8x128xf32>
    %220 = math.tanh %219 : vector<8x128xf32>
    %cst_94 = arith.constant 1.000000e+00 : f32
    %221 = vector.broadcast %cst_94 : f32 to vector<8x128xf32>
    %222 = arith.subf %221, %213 : vector<8x128xf32>
    %223 = arith.mulf %222, %220 : vector<8x128xf32>
    %224 = arith.mulf %213, %194 : vector<8x128xf32>
    %225 = arith.addf %223, %224 : vector<8x128xf32>
    %226 = arith.index_cast %c6_i32 : i32 to index
    %c0_95 = arith.constant 0 : index
    %c0_96 = arith.constant 0 : index
    %227 = vector.load %arg12[%226, %c0_95, %c0_96] : memref<8x8x128xf32, #tpu.memory_space<vmem>>, vector<1x8x128xf32>
    %228 = vector.shape_cast %227 : vector<1x8x128xf32> to vector<8x128xf32>
    %229 = vector.shape_cast %225 : vector<8x128xf32> to vector<1x8x128xf32>
    tpu.vector_store %arg12[%226, %c0_95, %c0_96], %229 {strides = array<i32>} : memref<8x8x128xf32, #tpu.memory_space<vmem>>, vector<1x8x128xf32>,
    %c7_i32 = arith.constant 7 : i32
    %230 = arith.index_cast %c7_i32 : i32 to index
    %c0_97 = arith.constant 0 : index
    %c0_98 = arith.constant 0 : index
    %231 = vector.load %arg11[%230, %c0_97, %c0_98] : memref<8x8x384xf32, #tpu.memory_space<vmem>>, vector<1x8x384xf32>
    %232 = vector.shape_cast %231 : vector<1x8x384xf32> to vector<8x384xf32>
    %233 = arith.truncf %225 : vector<8x128xf32> to vector<8x128xbf16>
    %c0_99 = arith.constant 0 : index
    %c0_100 = arith.constant 0 : index
    %234 = vector.load %arg5[%c0_99, %c0_100] : memref<128x256xbf16, #tpu.memory_space<vmem>>, vector<128x256xbf16>
    %cst_101 = arith.constant dense<0.000000e+00> : vector<8x256xf32>
    %235 = tpu.matmul %233, %234, %cst_101 {dimension_numbers = #tpu.dot_dimension_numbers<[1], [0], [0], [1], [0, 0, 1, 1], [], []>} : vector<8x128xbf16>, vector<128x256xbf16>, vector<8x256xf32> -> vector<8x256xf32>
    %236 = vector.extract_strided_slice %232 {offsets = [0, 0], sizes = [8, 256], strides = [1, 1]} : vector<8x384xf32> to vector<8x256xf32>
    %237 = arith.addf %235, %236 : vector<8x256xf32>
    %238 = arith.negf %237 : vector<8x256xf32>
    %239 = math.exp %238 : vector<8x256xf32>
    %cst_102 = arith.constant 1.000000e+00 : f32
    %240 = vector.broadcast %cst_102 : f32 to vector<8x256xf32>
    %241 = arith.addf %240, %239 : vector<8x256xf32>
    %242 = arith.divf %240, %241 : vector<8x256xf32>
    %243 = vector.extract_strided_slice %242 {offsets = [0, 0], sizes = [8, 128], strides = [1, 1]} : vector<8x256xf32> to vector<8x128xf32>
    %244 = vector.extract_strided_slice %242 {offsets = [0, 128], sizes = [8, 128], strides = [1, 1]} : vector<8x256xf32> to vector<8x128xf32>
    %245 = arith.mulf %243, %225 : vector<8x128xf32>
    %246 = arith.truncf %245 : vector<8x128xf32> to vector<8x128xbf16>
    %c0_103 = arith.constant 0 : index
    %c0_104 = arith.constant 0 : index
    %247 = vector.load %arg6[%c0_103, %c0_104] : memref<128x128xbf16, #tpu.memory_space<vmem>>, vector<128x128xbf16>
    %cst_105 = arith.constant dense<0.000000e+00> : vector<8x128xf32>
    %248 = tpu.matmul %246, %247, %cst_105 {dimension_numbers = #tpu.dot_dimension_numbers<[1], [0], [0], [1], [0, 0, 1, 1], [], []>} : vector<8x128xbf16>, vector<128x128xbf16>, vector<8x128xf32> -> vector<8x128xf32>
    %249 = vector.extract_strided_slice %232 {offsets = [0, 256], sizes = [8, 128], strides = [1, 1]} : vector<8x384xf32> to vector<8x128xf32>
    %250 = arith.addf %248, %249 : vector<8x128xf32>
    %251 = math.tanh %250 : vector<8x128xf32>
    %cst_106 = arith.constant 1.000000e+00 : f32
    %252 = vector.broadcast %cst_106 : f32 to vector<8x128xf32>
    %253 = arith.subf %252, %244 : vector<8x128xf32>
    %254 = arith.mulf %253, %251 : vector<8x128xf32>
    %255 = arith.mulf %244, %225 : vector<8x128xf32>
    %256 = arith.addf %254, %255 : vector<8x128xf32>
    %257 = arith.index_cast %c7_i32 : i32 to index
    %c0_107 = arith.constant 0 : index
    %c0_108 = arith.constant 0 : index
    %258 = vector.load %arg12[%257, %c0_107, %c0_108] : memref<8x8x128xf32, #tpu.memory_space<vmem>>, vector<1x8x128xf32>
    %259 = vector.shape_cast %258 : vector<1x8x128xf32> to vector<8x128xf32>
    %260 = vector.shape_cast %256 : vector<8x128xf32> to vector<1x8x128xf32>
    tpu.vector_store %arg12[%257, %c0_107, %c0_108], %260 {strides = array<i32>} : memref<8x8x128xf32, #tpu.memory_space<vmem>>, vector<1x8x128xf32>,
    %c8_i32 = arith.constant 8 : i32
    %c0_109 = arith.constant 0 : index
    %c0_110 = arith.constant 0 : index
    %261 = vector.load %arg13[%c0_109, %c0_110] : memref<8x128xf32, #tpu.memory_space<vmem>>, vector<8x128xf32>
    tpu.vector_store %arg13[%c0_109, %c0_110], %256 {strides = array<i32>} : memref<8x128xf32, #tpu.memory_space<vmem>>, vector<8x128xf32>,
    %c0_111 = arith.constant 0 : index
    %c0_112 = arith.constant 0 : index
    %c0_113 = arith.constant 0 : index
    %262 = vector.load %arg12[%c0_111, %c0_112, %c0_113] : memref<8x8x128xf32, #tpu.memory_space<vmem>>, vector<8x8x128xf32>
    %263 = vector.shape_cast %262 : vector<8x8x128xf32> to vector<64x128xf32>
    %264 = arith.truncf %263 : vector<64x128xf32> to vector<64x128xbf16>
    %c0_114 = arith.constant 0 : index
    %c0_115 = arith.constant 0 : index
    %265 = vector.load %arg7[%c0_114, %c0_115] : memref<128x128xbf16, #tpu.memory_space<vmem>>, vector<128x128xbf16>
    %cst_116 = arith.constant dense<0.000000e+00> : vector<64x128xf32>
    %266 = tpu.matmul %264, %265, %cst_116 {dimension_numbers = #tpu.dot_dimension_numbers<[1], [0], [0], [1], [0, 0, 1, 1], [], []>} : vector<64x128xbf16>, vector<128x128xbf16>, vector<64x128xf32> -> vector<64x128xf32>
    %c0_117 = arith.constant 0 : index
    %c0_118 = arith.constant 0 : index
    %267 = vector.load %arg8[%c0_117, %c0_118] : memref<1x128xf32, #tpu.memory_space<vmem>>, vector<1x128xf32>
    %268 = vector.broadcast %267 : vector<1x128xf32> to vector<64x128xf32>
    %269 = arith.addf %266, %268 : vector<64x128xf32>
    %cst_119 = arith.constant dense<0xFF800000> : vector<64xf32>
    %270 = vector.multi_reduction <maximumf>, %269, %cst_119 [1] : vector<64x128xf32> to vector<64xf32>
    %271 = vector.shape_cast %270 : vector<64xf32> to vector<64x1xf32>
    %272 = vector.broadcast %271 : vector<64x1xf32> to vector<64x128xf32>
    %273 = arith.subf %269, %272 : vector<64x128xf32>
    %274 = math.exp %273 : vector<64x128xf32>
    %cst_120 = arith.constant dense<0.000000e+00> : vector<64xf32>
    %275 = vector.multi_reduction <add>, %274, %cst_120 [1] : vector<64x128xf32> to vector<64xf32>
    %276 = vector.shape_cast %275 : vector<64xf32> to vector<64x1xf32>
    %277 = math.log %276 : vector<64x1xf32>
    %278 = arith.addf %271, %277 : vector<64x1xf32>
    %279 = vector.broadcast %278 : vector<64x1xf32> to vector<64x128xf32>
    %280 = arith.subf %269, %279 : vector<64x128xf32>
    %281 = vector.shape_cast %280 : vector<64x128xf32> to vector<8x8x128xf32>
    %c0_121 = arith.constant 0 : index
    %c0_122 = arith.constant 0 : index
    %c0_123 = arith.constant 0 : index
    %282 = vector.load %arg9[%c0_121, %c0_122, %c0_123] : memref<8x8x128xf32, #tpu.memory_space<vmem>>, vector<8x8x128xf32>
    tpu.vector_store %arg9[%c0_121, %c0_122, %c0_123], %281 {strides = array<i32>} : memref<8x8x128xf32, #tpu.memory_space<vmem>>, vector<8x8x128xf32>,
    %c0_i32_124 = arith.constant 0 : i32
    %283 = arith.cmpi eq, %arg0, %c0_i32_124 : i32
    %284 = arith.extui %283 : i1 to i32
    %c0_i32_125 = arith.constant 0 : i32
    %285 = arith.cmpi ne, %284, %c0_i32_125 : i32
    scf.if %285 {
      %c0_126 = arith.constant 0 : index
      %c0_127 = arith.constant 0 : index
      %286 = vector.load %arg10[%c0_126, %c0_127] : memref<8x128xf32, #tpu.memory_space<vmem>>, vector<8x128xf32>
      tpu.vector_store %arg10[%c0_126, %c0_127], %256 {strides = array<i32>} : memref<8x128xf32, #tpu.memory_space<vmem>>, vector<8x128xf32>,
    } else {
    }
    return
  }
  func.func @transform_0(%arg0: i32) -> (i32, i32, i32) {
    %c0_i32 = arith.constant 0 : i32
    %c0_i32_0 = arith.constant 0 : i32
    %c0_i32_1 = arith.constant 0 : i32
    return %arg0, %c0_i32, %c0_i32_0 : i32, i32, i32
  }
  func.func @transform_1(%arg0: i32) -> (i32, i32) {
    %c0_i32 = arith.constant 0 : i32
    %c0_i32_0 = arith.constant 0 : i32
    %c0_i32_1 = arith.constant 0 : i32
    return %c0_i32, %c0_i32_0 : i32, i32
  }
  func.func @transform_2(%arg0: i32) -> (i32, i32) {
    %c0_i32 = arith.constant 0 : i32
    %c0_i32_0 = arith.constant 0 : i32
    %c0_i32_1 = arith.constant 0 : i32
    return %c0_i32, %c0_i32_0 : i32, i32
  }
  func.func @transform_3(%arg0: i32) -> (i32, i32) {
    %c0_i32 = arith.constant 0 : i32
    %c0_i32_0 = arith.constant 0 : i32
    %c0_i32_1 = arith.constant 0 : i32
    return %c0_i32, %c0_i32_0 : i32, i32
  }
  func.func @transform_4(%arg0: i32) -> (i32, i32) {
    %c0_i32 = arith.constant 0 : i32
    %c0_i32_0 = arith.constant 0 : i32
    %c0_i32_1 = arith.constant 0 : i32
    return %c0_i32, %c0_i32_0 : i32, i32
  }
  func.func @transform_5(%arg0: i32) -> (i32, i32) {
    %c0_i32 = arith.constant 0 : i32
    %c0_i32_0 = arith.constant 0 : i32
    %c0_i32_1 = arith.constant 0 : i32
    return %c0_i32, %c0_i32_0 : i32, i32
  }
  func.func @transform_6(%arg0: i32) -> (i32, i32) {
    %c0_i32 = arith.constant 0 : i32
    %c0_i32_0 = arith.constant 0 : i32
    %c0_i32_1 = arith.constant 0 : i32
    return %c0_i32, %c0_i32_0 : i32, i32
  }
  func.func @transform_7(%arg0: i32) -> (i32, i32) {
    %c0_i32 = arith.constant 0 : i32
    %c0_i32_0 = arith.constant 0 : i32
    %c0_i32_1 = arith.constant 0 : i32
    return %c0_i32, %c0_i32_0 : i32, i32
  }
  func.func @transform_8(%arg0: i32) -> (i32, i32, i32) {
    %c0_i32 = arith.constant 0 : i32
    %c0_i32_0 = arith.constant 0 : i32
    %c0_i32_1 = arith.constant 0 : i32
    return %arg0, %c0_i32, %c0_i32_0 : i32, i32, i32
  }
  func.func @transform_9(%arg0: i32) -> (i32, i32) {
    %c0_i32 = arith.constant 0 : i32
    %c0_i32_0 = arith.constant 0 : i32
    %c0_i32_1 = arith.constant 0 : i32
    return %c0_i32, %c0_i32_0 : i32, i32
  }
}

</mosaic_0001>

<llo_original>
// kernel: tpu_custom_call.1
$region0: #{tpu_custom_call.1}
  #allocation0 [shape = 'u32[]', space=smem, size = 0x4, offset = 0x4, fixed_abs, tag = 'smem constant byte address 0x4 - core index']
  #allocation1 [shape = 'u32[144,128]{1,0:T(1,128)}', space=vmem, size = 0x12000, scoped, tag = 'internal scratch']
  #allocation2 [shape = 'f32[8,8,384]{2,1,0:T(8,128)}', space=vmem, size = 0x18000, scoped, tag = 'scratch operand']
  #allocation3 [shape = 'f32[8,8,128]{2,1,0:T(8,128)}', space=vmem, size = 0x8000, scoped, tag = 'scratch operand']
  #allocation4 [shape = 'f32[8,128]{1,0:T(8,128)}', space=vmem, size = 0x1000, scoped, tag = 'scratch operand']
  %s0 = inlined_call_operand.hbm [shape: bf16[8,8,128], index: 0, kind: input, shape index: {}]
  %s1 = inlined_call_operand.hbm [shape: f32[8,128], index: 1, kind: input, shape index: {}]
  %s2 = inlined_call_operand.hbm [shape: bf16[128,384], index: 2, kind: input, shape index: {}]
  %s3 = inlined_call_operand.vmem [shape: f32[1,384], index: 3, kind: input, shape index: {}]
  %s4 = inlined_call_operand.hbm [shape: bf16[128,256], index: 4, kind: input, shape index: {}]
  %s5 = inlined_call_operand.hbm [shape: bf16[128,128], index: 5, kind: input, shape index: {}]
  %s6 = inlined_call_operand.hbm [shape: bf16[128,128], index: 6, kind: input, shape index: {}]
  %s7 = inlined_call_operand.vmem [shape: f32[1,128], index: 7, kind: input, shape index: {}]
  %s8 = inlined_call_operand.hbm [shape: f32[8,8,128], index: 8, kind: output, shape index: {0}]
  %s9 = inlined_call_operand.hbm [shape: f32[8,128], index: 9, kind: output, shape index: {1}]
  %10 = xla_tuple %s8, %s9
  %s11 = sld [smem:[#allocation0]]
  $region82: #{tpu_custom_call.1} parent=0
    _
  %s13 = ssub.s32 1, %s11
  %s14 = scalar_select 0, %s13, %s11
  $region1: #{tpu_custom_call.1} parent=0
    #allocation5 [shape = 'u8[16384]{0}', space=vmem, size = 0x4000, scoped, tag = 'input window, operand 0, single buffered']
    #allocation6 [shape = 's32[1]{0}', space=sflag, size = 0x4, scoped, tag = 'scoped memory for tpu_custom_call.1']
    #allocation7 [shape = 's32[1]{0}', space=sflag, size = 0x4, scoped, tag = 'scoped memory for tpu_custom_call.1']
    #allocation8 [shape = 'u8[4096]{0}', space=vmem, size = 0x1000, scoped, tag = 'input window, operand 1, single buffered']
    #allocation9 [shape = 's32[1]{0}', space=sflag, size = 0x4, scoped, tag = 'scoped memory for tpu_custom_call.1']
    #allocation10 [shape = 'u8[98304]{0}', space=vmem, size = 0x18000, scoped, tag = 'input window, operand 2, single buffered']
    #allocation11 [shape = 'u8[65536]{0}', space=vmem, size = 0x10000, scoped, tag = 'input window, operand 4, single buffered']
    #allocation12 [shape = 's32[1]{0}', space=sflag, size = 0x4, scoped, tag = 'scoped memory for tpu_custom_call.1']
    #allocation13 [shape = 'u8[32768]{0}', space=vmem, size = 0x8000, scoped, tag = 'input window, operand 5, single buffered']
    #allocation14 [shape = 'u8[32768]{0}', space=vmem, size = 0x8000, scoped, tag = 'input window, operand 6, single buffered']
    #allocation15 [shape = 's32[1]{0}', space=sflag, size = 0x4, scoped, tag = 'scoped memory for tpu_custom_call.1']
    #allocation16 [shape = 'u8[32768]{0}', space=vmem, size = 0x8000, scoped, tag = 'output window, operand 0, single buffered']
    #allocation17 [shape = 'u8[4096]{0}', space=vmem, size = 0x1000, scoped, tag = 'output window, operand 1, single buffered']
    #allocation18 [shape = 's32[1]{0}', space=sflag, size = 0x4, scoped, tag = 'scoped memory for tpu_custom_call.1']
    %15 = vsyncpa [#allocation6], 0
    %16 = vsyncpa [#allocation9], 0
    %17 = vsyncpa [#allocation12], 0
    %18 = vsyncpa [#allocation15], 0
    %19 = vsyncpa [#allocation7], 0
    %20 = vsyncpa [#allocation18], 0
    // Predicated region
    $region2: #{tpu_custom_call.1} parent=1 // pred_check
      _
    $region3: #{tpu_custom_call.1} parent=1 // pred_check_branch
      %22 = sbr.rel (0) target = $region5
    $region4: #{tpu_custom_call.1} parent=1 // pred_region
      %s24 = ssub.s32 512, 512
      %25 = vsyncadd [#allocation6], %s24
      %s26 = sshll.u32 [#allocation5], 4
      %s27 = int_to_ptr.vmem [resolvable:$true] %s26
      %32 = dma.hbm_to_vmem [thread:$0]  %s0, 512, %s27, [#allocation6], 64, 64, 4
    $region5: #{tpu_custom_call.1} parent=1 // pred_fallthru
      _
    // Predicated region
    $region6: #{tpu_custom_call.1} parent=1 // pred_check
      _
    $region7: #{tpu_custom_call.1} parent=1 // pred_check_branch
      %34 = sbr.rel (0) target = $region9
    $region8: #{tpu_custom_call.1} parent=1 // pred_region
      %s36 = ssub.s32 128, 128
      %37 = vsyncadd [#allocation9], %s36
      %s39 = sshll.u32 [#allocation8], 4
      %s40 = int_to_ptr.vmem [resolvable:$true] %s39
      %42 = dma.hbm_to_vmem [thread:$0]  %s1, 128, %s40, [#allocation9]
    $region9: #{tpu_custom_call.1} parent=1 // pred_fallthru
      _
    // Predicated region
    $region10: #{tpu_custom_call.1} parent=1 // pred_check
      _
    $region11: #{tpu_custom_call.1} parent=1 // pred_check_branch
      %44 = sbr.rel (0) target = $region13
    $region12: #{tpu_custom_call.1} parent=1 // pred_region
      %s46 = ssub.s32 3072, 3072
      %47 = vsyncadd [#allocation9], %s46
      %s48 = sshll.u32 [#allocation10], 4
      %s49 = int_to_ptr.vmem [resolvable:$true] %s48
      %54 = dma.hbm_to_vmem [thread:$0]  %s2, 3072, %s49, [#allocation9], 192, 192, 12
    $region13: #{tpu_custom_call.1} parent=1 // pred_fallthru
      _
    // Predicated region
    $region14: #{tpu_custom_call.1} parent=1 // pred_check
      _
    $region15: #{tpu_custom_call.1} parent=1 // pred_check_branch
      %56 = sbr.rel (0) target = $region17
    $region16: #{tpu_custom_call.1} parent=1 // pred_region
      _
    $region17: #{tpu_custom_call.1} parent=1 // pred_fallthru
      _
    // Predicated region
    $region18: #{tpu_custom_call.1} parent=1 // pred_check
      _
    $region19: #{tpu_custom_call.1} parent=1 // pred_check_branch
      %58 = sbr.rel (0) target = $region21
    $region20: #{tpu_custom_call.1} parent=1 // pred_region
      %s60 = ssub.s32 2048, 2048
      %61 = vsyncadd [#allocation12], %s60
      %s62 = sshll.u32 [#allocation11], 4
      %s63 = int_to_ptr.vmem [resolvable:$true] %s62
      %68 = dma.hbm_to_vmem [thread:$0]  %s4, 2048, %s63, [#allocation12], 128, 128, 8
    $region21: #{tpu_custom_call.1} parent=1 // pred_fallthru
      _
    // Predicated region
    $region22: #{tpu_custom_call.1} parent=1 // pred_check
      _
    $region23: #{tpu_custom_call.1} parent=1 // pred_check_branch
      %70 = sbr.rel (0) target = $region25
    $region24: #{tpu_custom_call.1} parent=1 // pred_region
      %s72 = ssub.s32 1024, 1024
      %73 = vsyncadd [#allocation12], %s72
      %s74 = sshll.u32 [#allocation13], 4
      %s75 = int_to_ptr.vmem [resolvable:$true] %s74
      %80 = dma.hbm_to_vmem [thread:$0]  %s5, 1024, %s75, [#allocation12], 64, 64, 4
    $region25: #{tpu_custom_call.1} parent=1 // pred_fallthru
      _
    // Predicated region
    $region26: #{tpu_custom_call.1} parent=1 // pred_check
      _
    $region27: #{tpu_custom_call.1} parent=1 // pred_check_branch
      %82 = sbr.rel (0) target = $region29
    $region28: #{tpu_custom_call.1} parent=1 // pred_region
      %s84 = ssub.s32 1024, 1024
      %85 = vsyncadd [#allocation15], %s84
      %s86 = sshll.u32 [#allocation14], 4
      %s87 = int_to_ptr.vmem [resolvable:$true] %s86
      %92 = dma.hbm_to_vmem [thread:$0]  %s6, 1024, %s87, [#allocation15], 64, 64, 4
    $region29: #{tpu_custom_call.1} parent=1 // pred_fallthru
      _
    // Predicated region
    $region30: #{tpu_custom_call.1} parent=1 // pred_check
      _
    $region31: #{tpu_custom_call.1} parent=1 // pred_check_branch
      %94 = sbr.rel (0) target = $region33
    $region32: #{tpu_custom_call.1} parent=1 // pred_region
      _
    $region33: #{tpu_custom_call.1} parent=1 // pred_fallthru
      _
    // Predicated region
    $region34: #{tpu_custom_call.1} parent=1 // pred_check
      _
    $region35: #{tpu_custom_call.1} parent=1 // pred_check_branch
      %96 = sbr.rel (0) target = $region37
    $region36: #{tpu_custom_call.1} parent=1 // pred_region
      %97 = dma.done [#allocation6], 512
    $region37: #{tpu_custom_call.1} parent=1 // pred_fallthru
      _
    // Predicated region
    $region38: #{tpu_custom_call.1} parent=1 // pred_check
      _
    $region39: #{tpu_custom_call.1} parent=1 // pred_check_branch
      %99 = sbr.rel (0) target = $region41
    $region40: #{tpu_custom_call.1} parent=1 // pred_region
      %100 = dma.done [#allocation9], 128
    $region41: #{tpu_custom_call.1} parent=1 // pred_fallthru
      _
    // Predicated region
    $region42: #{tpu_custom_call.1} parent=1 // pred_check
      _
    $region43: #{tpu_custom_call.1} parent=1 // pred_check_branch
      %102 = sbr.rel (0) target = $region45
    $region44: #{tpu_custom_call.1} parent=1 // pred_region
      %103 = dma.done [#allocation9], 3072
    $region45: #{tpu_custom_call.1} parent=1 // pred_fallthru
      _
    // Predicated region
    $region46: #{tpu_custom_call.1} parent=1 // pred_check
      _
    $region47: #{tpu_custom_call.1} parent=1 // pred_check_branch
      %105 = sbr.rel (0) target = $region49
    $region48: #{tpu_custom_call.1} parent=1 // pred_region
      %106 = dma.done [#allocation12], 2048
    $region49: #{tpu_custom_call.1} parent=1 // pred_fallthru
      _
    // Predicated region
    $region50: #{tpu_custom_call.1} parent=1 // pred_check
      _
    $region51: #{tpu_custom_call.1} parent=1 // pred_check_branch
      %108 = sbr.rel (0) target = $region53
    $region52: #{tpu_custom_call.1} parent=1 // pred_region
      %109 = dma.done [#allocation12], 1024
    $region53: #{tpu_custom_call.1} parent=1 // pred_fallthru
      _
    // Predicated region
    $region54: #{tpu_custom_call.1} parent=1 // pred_check
      _
    $region55: #{tpu_custom_call.1} parent=1 // pred_check_branch
      %111 = sbr.rel (0) target = $region57
    $region56: #{tpu_custom_call.1} parent=1 // pred_region
      %112 = dma.done [#allocation15], 1024
    $region57: #{tpu_custom_call.1} parent=1 // pred_fallthru
      _
    %p114 = scmp.eq.s32.totalorder 0, 0
    // Predicated region
    $region58: #{tpu_custom_call.1} parent=1 // pred_check
      %p115 = pneg %p114
    $region59: #{tpu_custom_call.1} parent=1 // pred_check_branch
      %117 = sbr.rel (%p115) target = $region61
    $region60: #{tpu_custom_call.1} parent=1 // pred_region
      %v118 = vld [vmem:[#allocation8] sm:$0xff]
      %119 = vst [vmem:[#allocation4] sm:$0xff] %v118
    $region61: #{tpu_custom_call.1} parent=1 // pred_fallthru
      _
    %v120 = vld [vmem:[#allocation5] sm:$0xf]
    %v121 = vld [vmem:[#allocation5 + $0x4] sm:$0xf]
    %v122 = vld [vmem:[#allocation5 + $0x8] sm:$0xf]
    %v123 = vld [vmem:[#allocation5 + $0xc] sm:$0xf]
    %v124 = vld [vmem:[#allocation5 + $0x10] sm:$0xf]
    %v125 = vld [vmem:[#allocation5 + $0x14] sm:$0xf]
    %v126 = vld [vmem:[#allocation5 + $0x18] sm:$0xf]
    %v127 = vld [vmem:[#allocation5 + $0x1c] sm:$0xf]
    %v128 = vld [vmem:[#allocation10] sm:$0xff]
    %v129 = vld [vmem:[#allocation10 + $0x8] sm:$0xf]
    %v130 = vld [vmem:[#allocation10 + $0xc] sm:$0xff]
    %v131 = vld [vmem:[#allocation10 + $0x14] sm:$0xf]
    %v132 = vld [vmem:[#allocation10 + $0x18] sm:$0xff]
    %v133 = vld [vmem:[#allocation10 + $0x20] sm:$0xf]
    %v134 = vld [vmem:[#allocation10 + $0x24] sm:$0xff]
    %v135 = vld [vmem:[#allocation10 + $0x2c] sm:$0xf]
    %v136 = vld [vmem:[#allocation10 + $0x30] sm:$0xff]
    %v137 = vld [vmem:[#allocation10 + $0x38] sm:$0xf]
    %v138 = vld [vmem:[#allocation10 + $0x3c] sm:$0xff]
    %v139 = vld [vmem:[#allocation10 + $0x44] sm:$0xf]
    %v140 = vld [vmem:[#allocation10 + $0x48] sm:$0xff]
    %v141 = vld [vmem:[#allocation10 + $0x50] sm:$0xf]
    %v142 = vld [vmem:[#allocation10 + $0x54] sm:$0xff]
    %v143 = vld [vmem:[#allocation10 + $0x5c] sm:$0xf]
    %v144 = vld [vmem:[#allocation10 + $0x60] sm:$0xff]
    %v145 = vld [vmem:[#allocation10 + $0x68] sm:$0xf]
    %v146 = vld [vmem:[#allocation10 + $0x6c] sm:$0xff]
    %v147 = vld [vmem:[#allocation10 + $0x74] sm:$0xf]
    %v148 = vld [vmem:[#allocation10 + $0x78] sm:$0xff]
    %v149 = vld [vmem:[#allocation10 + $0x80] sm:$0xf]
    %v150 = vld [vmem:[#allocation10 + $0x84] sm:$0xff]
    %v151 = vld [vmem:[#allocation10 + $0x8c] sm:$0xf]
    %v152 = vld [vmem:[#allocation10 + $0x90] sm:$0xff]
    %v153 = vld [vmem:[#allocation10 + $0x98] sm:$0xf]
    %v154 = vld [vmem:[#allocation10 + $0x9c] sm:$0xff]
    %v155 = vld [vmem:[#allocation10 + $0xa4] sm:$0xf]
    %v156 = vld [vmem:[#allocation10 + $0xa8] sm:$0xff]
    %v157 = vld [vmem:[#allocation10 + $0xb0] sm:$0xf]
    %v158 = vld [vmem:[#allocation10 + $0xb4] sm:$0xff]
    %v159 = vld [vmem:[#allocation10 + $0xbc] sm:$0xf]
    %v160 = vld [vmem:[%s3] sm:$0x7]
    %v162 = vlaneseq
    %v163 = vshrl.u32 %v162, 7
    %v164 = vsub.s32 0, %v163
    %v165 = vrot.slane %v160, %v164
    %v166 = vlaneseq
    %v167 = vshrl.u32 %v166, 7
    %v168 = vsub.s32 1, %v167
    %v169 = vrot.slane %v160, %v168
    %v170 = vlaneseq
    %v171 = vshrl.u32 %v170, 7
    %v172 = vsub.s32 2, %v171
    %v173 = vrot.slane %v160, %v172
    %v185 = vunpack.c.l.b16 %v120
    %v186 = vunpack.c.l.b16 %v121
    %v187 = vunpack.c.l.b16 %v122
    %v188 = vunpack.c.l.b16 %v123
    %v189 = vunpack.c.l.b16 %v124
    %v190 = vunpack.c.l.b16 %v125
    %v191 = vunpack.c.l.b16 %v126
    %v192 = vunpack.c.l.b16 %v127
    %v193 = vpack.c.b16 %v186, %v185
    %v194 = vpack.c.b16 %v188, %v187
    %v195 = vpack.c.b16 %v190, %v189
    %v196 = vpack.c.b16 %v192, %v191
    %v233 = vunpack.c.l.b16 %v128
    %v234 = vunpack.c.h.b16 %v128
    %v235 = vunpack.c.l.b16 %v129
    %v236 = vunpack.c.l.b16 %v130
    %v237 = vunpack.c.h.b16 %v130
    %v238 = vunpack.c.l.b16 %v131
    %v239 = vunpack.c.l.b16 %v132
    %v240 = vunpack.c.h.b16 %v132
    %v241 = vunpack.c.l.b16 %v133
    %v242 = vunpack.c.l.b16 %v134
    %v243 = vunpack.c.h.b16 %v134
    %v244 = vunpack.c.l.b16 %v135
    %v245 = vunpack.c.l.b16 %v136
    %v246 = vunpack.c.h.b16 %v136
    %v247 = vunpack.c.l.b16 %v137
    %v248 = vunpack.c.l.b16 %v138
    %v249 = vunpack.c.h.b16 %v138
    %v250 = vunpack.c.l.b16 %v139
    %v251 = vunpack.c.l.b16 %v140
    %v252 = vunpack.c.h.b16 %v140
    %v253 = vunpack.c.l.b16 %v141
    %v254 = vunpack.c.l.b16 %v142
    %v255 = vunpack.c.h.b16 %v142
    %v256 = vunpack.c.l.b16 %v143
    %v257 = vunpack.c.l.b16 %v144
    %v258 = vunpack.c.h.b16 %v144
    %v259 = vunpack.c.l.b16 %v145
    %v260 = vunpack.c.l.b16 %v146
    %v261 = vunpack.c.h.b16 %v146
    %v262 = vunpack.c.l.b16 %v147
    %v263 = vunpack.c.l.b16 %v148
    %v264 = vunpack.c.h.b16 %v148
    %v265 = vunpack.c.l.b16 %v149
    %v266 = vunpack.c.l.b16 %v150
    %v267 = vunpack.c.h.b16 %v150
    %v268 = vunpack.c.l.b16 %v151
    %v269 = vunpack.c.l.b16 %v152
    %v270 = vunpack.c.h.b16 %v152
    %v271 = vunpack.c.l.b16 %v153
    %v272 = vunpack.c.l.b16 %v154
    %v273 = vunpack.c.h.b16 %v154
    %v274 = vunpack.c.l.b16 %v155
    %v275 = vunpack.c.l.b16 %v156
    %v276 = vunpack.c.h.b16 %v156
    %v277 = vunpack.c.l.b16 %v157
    %v278 = vunpack.c.l.b16 %v158
    %v279 = vunpack.c.h.b16 %v158
    %v280 = vunpack.c.l.b16 %v159
    %v281 = vpack.c.b16 %v236, %v233
    %v282 = vpack.c.b16 %v237, %v234
    %v283 = vpack.c.b16 %v238, %v235
    %v284 = vpack.c.b16 %v242, %v239
    %v285 = vpack.c.b16 %v243, %v240
    %v286 = vpack.c.b16 %v244, %v241
    %v287 = vpack.c.b16 %v248, %v245
    %v288 = vpack.c.b16 %v249, %v246
    %v289 = vpack.c.b16 %v250, %v247
    %v290 = vpack.c.b16 %v254, %v251
    %v291 = vpack.c.b16 %v255, %v252
    %v292 = vpack.c.b16 %v256, %v253
    %v293 = vpack.c.b16 %v260, %v257
    %v294 = vpack.c.b16 %v261, %v258
    %v295 = vpack.c.b16 %v262, %v259
    %v296 = vpack.c.b16 %v266, %v263
    %v297 = vpack.c.b16 %v267, %v264
    %v298 = vpack.c.b16 %v268, %v265
    %v299 = vpack.c.b16 %v272, %v269
    %v300 = vpack.c.b16 %v273, %v270
    %v301 = vpack.c.b16 %v274, %v271
    %v302 = vpack.c.b16 %v278, %v275
    %v303 = vpack.c.b16 %v279, %v276
    %v304 = vpack.c.b16 %v280, %v277
    %329 = vmatprep.subr.bf16.mxu0 %v303
    %330 = vmatpush1.bf16.msra.mxu0 %v302
    %331 = vmatprep.subr.bf16.mxu0 %v300
    %332 = vmatpush1.bf16.msra.mxu0 %v299
    %333 = vmatprep.subr.bf16.mxu0 %v297
    %334 = vmatpush1.bf16.msra.mxu0 %v296
    %335 = vmatprep.subr.bf16.mxu0 %v294
    %336 = vmatpush1.bf16.msra.mxu0 %v293
    %337 = vmatprep.subr.bf16.mxu0 %v291
    %338 = vmatpush1.bf16.msra.mxu0 %v290
    %339 = vmatprep.subr.bf16.mxu0 %v288
    %340 = vmatpush1.bf16.msra.mxu0 %v287
    %341 = vmatprep.subr.bf16.mxu0 %v285
    %342 = vmatpush1.bf16.msra.mxu0 %v284
    %343 = vmatprep.subr.bf16.mxu0 %v282
    %344 = vmatpush1.bf16.msra.mxu0 %v281
    %345 = vmatprep.subr.bf16.mxu0 0
    %346 = vmatpush2.bf16.msra.mxu0 0
    %347 = vmatprep.subr.bf16.mxu0 0
    %348 = vmatpush2.bf16.msra.mxu0 0
    %349 = vmatprep.subr.bf16.mxu0 0
    %350 = vmatpush2.bf16.msra.mxu0 0
    %351 = vmatprep.subr.bf16.mxu0 0
    %352 = vmatpush2.bf16.msra.mxu0 0
    %353 = vmatprep.subr.bf16.mxu0 0
    %354 = vmatpush2.bf16.msra.mxu0 0
    %355 = vmatprep.subr.bf16.mxu0 0
    %356 = vmatpush2.bf16.msra.mxu0 0
    %357 = vmatprep.subr.bf16.mxu0 0
    %358 = vmatpush2.bf16.msra.mxu0 0
    %359 = vmatprep.subr.bf16.mxu0 0
    %360 = vmatpush2.bf16.msra.mxu0 0
    %361 = vmatprep.mubr.bf16.mxu0 0
    %362 = vmatmul.mubr.bf16.gmra.mxu0 %v193
    %v363 = vpop.f32.mrf.mxu0
    %v364 = vadd.f32 %v165, %v363
    %v365 = vpop.f32.mrf.mxu0
    %v366 = vadd.f32 %v169, %v365
    %v367 = vpop.f32.mrf.mxu0
    %v368 = vadd.f32 %v165, %v367
    %v369 = vpop.f32.mrf.mxu0
    %v370 = vadd.f32 %v169, %v369
    %371 = vmatprep.mubr.bf16.mxu0 0
    %372 = vmatmul.mubr.bf16.gmra.mxu0 %v194
    %v373 = vpop.f32.mrf.mxu0
    %v374 = vadd.f32 %v165, %v373
    %v375 = vpop.f32.mrf.mxu0
    %v376 = vadd.f32 %v169, %v375
    %v377 = vpop.f32.mrf.mxu0
    %v378 = vadd.f32 %v165, %v377
    %v379 = vpop.f32.mrf.mxu0
    %v380 = vadd.f32 %v169, %v379
    %381 = vmatprep.mubr.bf16.mxu0 0
    %382 = vmatmul.mubr.bf16.gmra.mxu0 %v195
    %v383 = vpop.f32.mrf.mxu0
    %v384 = vadd.f32 %v165, %v383
    %v385 = vpop.f32.mrf.mxu0
    %v386 = vadd.f32 %v169, %v385
    %v387 = vpop.f32.mrf.mxu0
    %v388 = vadd.f32 %v165, %v387
    %v389 = vpop.f32.mrf.mxu0
    %v390 = vadd.f32 %v169, %v389
    %391 = vmatprep.mubr.bf16.mxu0 0
    %392 = vmatmul.mubr.bf16.gmra.mxu0 %v196
    %v393 = vpop.f32.mrf.mxu0
    %v394 = vadd.f32 %v165, %v393
    %v395 = vpop.f32.mrf.mxu0
    %v396 = vadd.f32 %v169, %v395
    %v397 = vpop.f32.mrf.mxu0
    %v398 = vadd.f32 %v165, %v397
    %v399 = vpop.f32.mrf.mxu0
    %v400 = vadd.f32 %v169, %v399
    %401 = vdwg.mxu0
    %402 = vmatprep.subr.bf16.mxu0 0
    %403 = vmatpush1.bf16.msra.mxu0 %v304
    %404 = vmatprep.subr.bf16.mxu0 0
    %405 = vmatpush1.bf16.msra.mxu0 %v301
    %406 = vmatprep.subr.bf16.mxu0 0
    %407 = vmatpush1.bf16.msra.mxu0 %v298
    %408 = vmatprep.subr.bf16.mxu0 0
    %409 = vmatpush1.bf16.msra.mxu0 %v295
    %410 = vmatprep.subr.bf16.mxu0 0
    %411 = vmatpush1.bf16.msra.mxu0 %v292
    %412 = vmatprep.subr.bf16.mxu0 0
    %413 = vmatpush1.bf16.msra.mxu0 %v289
    %414 = vmatprep.subr.bf16.mxu0 0
    %415 = vmatpush1.bf16.msra.mxu0 %v286
    %416 = vmatprep.subr.bf16.mxu0 0
    %417 = vmatpush1.bf16.msra.mxu0 %v283
    %418 = vmatprep.subr.bf16.mxu0 0
    %419 = vmatpush2.bf16.msra.mxu0 0
    %420 = vmatprep.subr.bf16.mxu0 0
    %421 = vmatpush2.bf16.msra.mxu0 0
    %422 = vmatprep.subr.bf16.mxu0 0
    %423 = vmatpush2.bf16.msra.mxu0 0
    %424 = vmatprep.subr.bf16.mxu0 0
    %425 = vmatpush2.bf16.msra.mxu0 0
    %426 = vmatprep.subr.bf16.mxu0 0
    %427 = vmatpush2.bf16.msra.mxu0 0
    %428 = vmatprep.subr.bf16.mxu0 0
    %429 = vmatpush2.bf16.msra.mxu0 0
    %430 = vmatprep.subr.bf16.mxu0 0
    %431 = vmatpush2.bf16.msra.mxu0 0
    %432 = vmatprep.subr.bf16.mxu0 0
    %433 = vmatpush2.bf16.msra.mxu0 0
    %434 = vmatprep.mubr.bf16.mxu0 0
    %435 = vmatmul.mubr.bf16.gmra.mxu0 %v193
    %v436 = vpop.f32.mrf.mxu0
    %v437 = vadd.f32 %v173, %v436
    %v438 = vpop.f32.mrf.mxu0
    %v439 = vpop.f32.mrf.mxu0
    %v440 = vadd.f32 %v173, %v439
    %v441 = vpop.f32.mrf.mxu0
    %442 = vmatprep.mubr.bf16.mxu0 0
    %443 = vmatmul.mubr.bf16.gmra.mxu0 %v194
    %v444 = vpop.f32.mrf.mxu0
    %v445 = vadd.f32 %v173, %v444
    %v446 = vpop.f32.mrf.mxu0
    %v447 = vpop.f32.mrf.mxu0
    %v448 = vadd.f32 %v173, %v447
    %v449 = vpop.f32.mrf.mxu0
    %450 = vmatprep.mubr.bf16.mxu0 0
    %451 = vmatmul.mubr.bf16.gmra.mxu0 %v195
    %v452 = vpop.f32.mrf.mxu0
    %v453 = vadd.f32 %v173, %v452
    %v454 = vpop.f32.mrf.mxu0
    %v455 = vpop.f32.mrf.mxu0
    %v456 = vadd.f32 %v173, %v455
    %v457 = vpop.f32.mrf.mxu0
    %458 = vmatprep.mubr.bf16.mxu0 0
    %459 = vmatmul.mubr.bf16.gmra.mxu0 %v196
    %v460 = vpop.f32.mrf.mxu0
    %v461 = vadd.f32 %v173, %v460
    %v462 = vpop.f32.mrf.mxu0
    %v463 = vpop.f32.mrf.mxu0
    %v464 = vadd.f32 %v173, %v463
    %v465 = vpop.f32.mrf.mxu0
    %466 = vdwg.mxu0
    %467 = vst [vmem:[#allocation2] sm:$0xff] %v364
    %468 = vst [vmem:[#allocation2 + $0x8] sm:$0xff] %v366
    %469 = vst [vmem:[#allocation2 + $0x10] sm:$0xff] %v437
    %470 = vst [vmem:[#allocation2 + $0x18] sm:$0xff] %v368
    %471 = vst [vmem:[#allocation2 + $0x20] sm:$0xff] %v370
    %472 = vst [vmem:[#allocation2 + $0x28] sm:$0xff] %v440
    %473 = vst [vmem:[#allocation2 + $0x30] sm:$0xff] %v374
    %474 = vst [vmem:[#allocation2 + $0x38] sm:$0xff] %v376
    %475 = vst [vmem:[#allocation2 + $0x40] sm:$0xff] %v445
    %476 = vst [vmem:[#allocation2 + $0x48] sm:$0xff] %v378
    %477 = vst [vmem:[#allocation2 + $0x50] sm:$0xff] %v380
    %478 = vst [vmem:[#allocation2 + $0x58] sm:$0xff] %v448
    %479 = vst [vmem:[#allocation2 + $0x60] sm:$0xff] %v384
    %480 = vst [vmem:[#allocation2 + $0x68] sm:$0xff] %v386
    %481 = vst [vmem:[#allocation2 + $0x70] sm:$0xff] %v453
    %482 = vst [vmem:[#allocation2 + $0x78] sm:$0xff] %v388
    %483 = vst [vmem:[#allocation2 + $0x80] sm:$0xff] %v390
    %484 = vst [vmem:[#allocation2 + $0x88] sm:$0xff] %v456
    %485 = vst [vmem:[#allocation2 + $0x90] sm:$0xff] %v394
    %486 = vst [vmem:[#allocation2 + $0x98] sm:$0xff] %v396
    %487 = vst [vmem:[#allocation2 + $0xa0] sm:$0xff] %v461
    %488 = vst [vmem:[#allocation2 + $0xa8] sm:$0xff] %v398
    %489 = vst [vmem:[#allocation2 + $0xb0] sm:$0xff] %v400
    %490 = vst [vmem:[#allocation2 + $0xb8] sm:$0xff] %v464
    %v491 = vld [vmem:[#allocation4] sm:$0xff]
    %v492 = vld [vmem:[#allocation2] sm:$0xff]
    %v493 = vld [vmem:[#allocation2 + $0x8] sm:$0xff]
    %v494 = vld [vmem:[#allocation2 + $0x10] sm:$0xff]
    %v495 = vpack.c.bf16 %v491, %v491
    %v496 = vld [vmem:[#allocation11] sm:$0xff]
    %v497 = vld [vmem:[#allocation11 + $0x8] sm:$0xff]
    %v498 = vld [vmem:[#allocation11 + $0x10] sm:$0xff]
    %v499 = vld [vmem:[#allocation11 + $0x18] sm:$0xff]
    %v500 = vld [vmem:[#allocation11 + $0x20] sm:$0xff]
    %v501 = vld [vmem:[#allocation11 + $0x28] sm:$0xff]
    %v502 = vld [vmem:[#allocation11 + $0x30] sm:$0xff]
    %v503 = vld [vmem:[#allocation11 + $0x38] sm:$0xff]
    %v504 = vld [vmem:[#allocation11 + $0x40] sm:$0xff]
    %v505 = vld [vmem:[#allocation11 + $0x48] sm:$0xff]
    %v506 = vld [vmem:[#allocation11 + $0x50] sm:$0xff]
    %v507 = vld [vmem:[#allocation11 + $0x58] sm:$0xff]
    %v508 = vld [vmem:[#allocation11 + $0x60] sm:$0xff]
    %v509 = vld [vmem:[#allocation11 + $0x68] sm:$0xff]
    %v510 = vld [vmem:[#allocation11 + $0x70] sm:$0xff]
    %v511 = vld [vmem:[#allocation11 + $0x78] sm:$0xff]
    %v528 = vunpack.c.l.b16 %v496
    %v529 = vunpack.c.h.b16 %v496
    %v530 = vunpack.c.l.b16 %v497
    %v531 = vunpack.c.h.b16 %v497
    %v532 = vunpack.c.l.b16 %v498
    %v533 = vunpack.c.h.b16 %v498
    %v534 = vunpack.c.l.b16 %v499
    %v535 = vunpack.c.h.b16 %v499
    %v536 = vunpack.c.l.b16 %v500
    %v537 = vunpack.c.h.b16 %v500
    %v538 = vunpack.c.l.b16 %v501
    %v539 = vunpack.c.h.b16 %v501
    %v540 = vunpack.c.l.b16 %v502
    %v541 = vunpack.c.h.b16 %v502
    %v542 = vunpack.c.l.b16 %v503
    %v543 = vunpack.c.h.b16 %v503
    %v544 = vunpack.c.l.b16 %v504
    %v545 = vunpack.c.h.b16 %v504
    %v546 = vunpack.c.l.b16 %v505
    %v547 = vunpack.c.h.b16 %v505
    %v548 = vunpack.c.l.b16 %v506
    %v549 = vunpack.c.h.b16 %v506
    %v550 = vunpack.c.l.b16 %v507
    %v551 = vunpack.c.h.b16 %v507
    %v552 = vunpack.c.l.b16 %v508
    %v553 = vunpack.c.h.b16 %v508
    %v554 = vunpack.c.l.b16 %v509
    %v555 = vunpack.c.h.b16 %v509
    %v556 = vunpack.c.l.b16 %v510
    %v557 = vunpack.c.h.b16 %v510
    %v558 = vunpack.c.l.b16 %v511
    %v559 = vunpack.c.h.b16 %v511
    %v560 = vpack.c.b16 %v530, %v528
    %v561 = vpack.c.b16 %v531, %v529
    %v562 = vpack.c.b16 %v534, %v532
    %v563 = vpack.c.b16 %v535, %v533
    %v564 = vpack.c.b16 %v538, %v536
    %v565 = vpack.c.b16 %v539, %v537
    %v566 = vpack.c.b16 %v542, %v540
    %v567 = vpack.c.b16 %v543, %v541
    %v568 = vpack.c.b16 %v546, %v544
    %v569 = vpack.c.b16 %v547, %v545
    %v570 = vpack.c.b16 %v550, %v548
    %v571 = vpack.c.b16 %v551, %v549
    %v572 = vpack.c.b16 %v554, %v552
    %v573 = vpack.c.b16 %v555, %v553
    %v574 = vpack.c.b16 %v558, %v556
    %v575 = vpack.c.b16 %v559, %v557
    %592 = vmatprep.subr.bf16.mxu0 %v575
    %593 = vmatpush1.bf16.msra.mxu0 %v574
    %594 = vmatprep.subr.bf16.mxu0 %v573
    %595 = vmatpush1.bf16.msra.mxu0 %v572
    %596 = vmatprep.subr.bf16.mxu0 %v571
    %597 = vmatpush1.bf16.msra.mxu0 %v570
    %598 = vmatprep.subr.bf16.mxu0 %v569
    %599 = vmatpush1.bf16.msra.mxu0 %v568
    %600 = vmatprep.subr.bf16.mxu0 %v567
    %601 = vmatpush1.bf16.msra.mxu0 %v566
    %602 = vmatprep.subr.bf16.mxu0 %v565
    %603 = vmatpush1.bf16.msra.mxu0 %v564
    %604 = vmatprep.subr.bf16.mxu0 %v563
    %605 = vmatpush1.bf16.msra.mxu0 %v562
    %606 = vmatprep.subr.bf16.mxu0 %v561
    %607 = vmatpush1.bf16.msra.mxu0 %v560
    %608 = vmatprep.subr.bf16.mxu0 0
    %609 = vmatpush2.bf16.msra.mxu0 0
    %610 = vmatprep.subr.bf16.mxu0 0
    %611 = vmatpush2.bf16.msra.mxu0 0
    %612 = vmatprep.subr.bf16.mxu0 0
    %613 = vmatpush2.bf16.msra.mxu0 0
    %614 = vmatprep.subr.bf16.mxu0 0
    %615 = vmatpush2.bf16.msra.mxu0 0
    %616 = vmatprep.subr.bf16.mxu0 0
    %617 = vmatpush2.bf16.msra.mxu0 0
    %618 = vmatprep.subr.bf16.mxu0 0
    %619 = vmatpush2.bf16.msra.mxu0 0
    %620 = vmatprep.subr.bf16.mxu0 0
    %621 = vmatpush2.bf16.msra.mxu0 0
    %622 = vmatprep.subr.bf16.mxu0 0
    %623 = vmatpush2.bf16.msra.mxu0 0
    %624 = vmatprep.mubr.bf16.mxu0 0
    %625 = vmatmul.mubr.bf16.gmra.mxu0 %v495
    %v626 = vpop.f32.mrf.mxu0
    %v627 = vadd.f32 %v492, %v626
    %v628 = vpop.f32.mrf.mxu0
    %v629 = vadd.f32 %v493, %v628
    %v630 = vpop.f32.mrf.mxu0
    %v631 = vpop.f32.mrf.mxu0
    %632 = vdwg.mxu0
    %v633 = vxor.u32 %v627, 2147483648
    %v634 = vxor.u32 %v629, 2147483648
    %v635 = vmul.f32 %v633, 1.442695
    %v636 = vpow.pop %v635
    %v637 = vmul.f32 %v634, 1.442695
    %v638 = vpow.pop %v637
    %v639 = vadd.f32 %v636, 1.0
    %v640 = vadd.f32 %v638, 1.0
    %v641 = vrcp.pop %v639
    %v642 = vmul.f32 1.0, %v641
    %v643 = vrcp.pop %v640
    %v644 = vmul.f32 1.0, %v643
    %v645 = vmul.f32 %v642, %v491
    %v646 = vpack.c.bf16 %v645, %v645
    %v647 = vld [vmem:[#allocation13] sm:$0xf]
    %v648 = vld [vmem:[#allocation13 + $0x4] sm:$0xf]
    %v649 = vld [vmem:[#allocation13 + $0x8] sm:$0xf]
    %v650 = vld [vmem:[#allocation13 + $0xc] sm:$0xf]
    %v651 = vld [vmem:[#allocation13 + $0x10] sm:$0xf]
    %v652 = vld [vmem:[#allocation13 + $0x14] sm:$0xf]
    %v653 = vld [vmem:[#allocation13 + $0x18] sm:$0xf]
    %v654 = vld [vmem:[#allocation13 + $0x1c] sm:$0xf]
    %v655 = vld [vmem:[#allocation13 + $0x20] sm:$0xf]
    %v656 = vld [vmem:[#allocation13 + $0x24] sm:$0xf]
    %v657 = vld [vmem:[#allocation13 + $0x28] sm:$0xf]
    %v658 = vld [vmem:[#allocation13 + $0x2c] sm:$0xf]
    %v659 = vld [vmem:[#allocation13 + $0x30] sm:$0xf]
    %v660 = vld [vmem:[#allocation13 + $0x34] sm:$0xf]
    %v661 = vld [vmem:[#allocation13 + $0x38] sm:$0xf]
    %v662 = vld [vmem:[#allocation13 + $0x3c] sm:$0xf]
    %v679 = vunpack.c.l.b16 %v647
    %v680 = vunpack.c.l.b16 %v648
    %v681 = vunpack.c.l.b16 %v649
    %v682 = vunpack.c.l.b16 %v650
    %v683 = vunpack.c.l.b16 %v651
    %v684 = vunpack.c.l.b16 %v652
    %v685 = vunpack.c.l.b16 %v653
    %v686 = vunpack.c.l.b16 %v654
    %v687 = vunpack.c.l.b16 %v655
    %v688 = vunpack.c.l.b16 %v656
    %v689 = vunpack.c.l.b16 %v657
    %v690 = vunpack.c.l.b16 %v658
    %v691 = vunpack.c.l.b16 %v659
    %v692 = vunpack.c.l.b16 %v660
    %v693 = vunpack.c.l.b16 %v661
    %v694 = vunpack.c.l.b16 %v662
    %v695 = vpack.c.b16 %v680, %v679
    %v696 = vpack.c.b16 %v682, %v681
    %v697 = vpack.c.b16 %v684, %v683
    %v698 = vpack.c.b16 %v686, %v685
    %v699 = vpack.c.b16 %v688, %v687
    %v700 = vpack.c.b16 %v690, %v689
    %v701 = vpack.c.b16 %v692, %v691
    %v702 = vpack.c.b16 %v694, %v693
    %711 = vmatprep.subr.bf16.mxu0 0
    %712 = vmatpush1.bf16.msra.mxu0 %v702
    %713 = vmatprep.subr.bf16.mxu0 0
    %714 = vmatpush1.bf16.msra.mxu0 %v701
    %715 = vmatprep.subr.bf16.mxu0 0
    %716 = vmatpush1.bf16.msra.mxu0 %v700
    %717 = vmatprep.subr.bf16.mxu0 0
    %718 = vmatpush1.bf16.msra.mxu0 %v699
    %719 = vmatprep.subr.bf16.mxu0 0
    %720 = vmatpush1.bf16.msra.mxu0 %v698
    %721 = vmatprep.subr.bf16.mxu0 0
    %722 = vmatpush1.bf16.msra.mxu0 %v697
    %723 = vmatprep.subr.bf16.mxu0 0
    %724 = vmatpush1.bf16.msra.mxu0 %v696
    %725 = vmatprep.subr.bf16.mxu0 0
    %726 = vmatpush1.bf16.msra.mxu0 %v695
    %727 = vmatprep.subr.bf16.mxu0 0
    %728 = vmatpush2.bf16.msra.mxu0 0
    %729 = vmatprep.subr.bf16.mxu0 0
    %730 = vmatpush2.bf16.msra.mxu0 0
    %731 = vmatprep.subr.bf16.mxu0 0
    %732 = vmatpush2.bf16.msra.mxu0 0
    %733 = vmatprep.subr.bf16.mxu0 0
    %734 = vmatpush2.bf16.msra.mxu0 0
    %735 = vmatprep.subr.bf16.mxu0 0
    %736 = vmatpush2.bf16.msra.mxu0 0
    %737 = vmatprep.subr.bf16.mxu0 0
    %738 = vmatpush2.bf16.msra.mxu0 0
    %739 = vmatprep.subr.bf16.mxu0 0
    %740 = vmatpush2.bf16.msra.mxu0 0
    %741 = vmatprep.subr.bf16.mxu0 0
    %742 = vmatpush2.bf16.msra.mxu0 0
    %743 = vmatprep.mubr.bf16.mxu0 0
    %744 = vmatmul.mubr.bf16.gmra.mxu0 %v646
    %v745 = vpop.f32.mrf.mxu0
    %v746 = vadd.f32 %v494, %v745
    %v747 = vpop.f32.mrf.mxu0
    %v748 = vpop.f32.mrf.mxu0
    %v749 = vpop.f32.mrf.mxu0
    %750 = vdwg.mxu0
    %v751 = vtanh.pop %v746
    %v752 = vsub.f32 1.0, %v644
    %v753 = vmul.f32 %v752, %v751
    %v754 = vmul.f32 %v644, %v491
    %v755 = vadd.f32 %v753, %v754
    %756 = vst [vmem:[#allocation3] sm:$0xff] %v755
    %s757 = scalar_lea.vmem [#allocation2], 24
    %v758 = vld [vmem:[%s757] sm:$0xff]
    %v759 = vld [vmem:[%s757 + $0x8] sm:$0xff]
    %v760 = vld [vmem:[%s757 + $0x10] sm:$0xff]
    %v761 = vpack.c.bf16 %v755, %v755
    %v762 = vld [vmem:[#allocation11] sm:$0xff]
    %v763 = vld [vmem:[#allocation11 + $0x8] sm:$0xff]
    %v764 = vld [vmem:[#allocation11 + $0x10] sm:$0xff]
    %v765 = vld [vmem:[#allocation11 + $0x18] sm:$0xff]
    %v766 = vld [vmem:[#allocation11 + $0x20] sm:$0xff]
    %v767 = vld [vmem:[#allocation11 + $0x28] sm:$0xff]
    %v768 = vld [vmem:[#allocation11 + $0x30] sm:$0xff]
    %v769 = vld [vmem:[#allocation11 + $0x38] sm:$0xff]
    %v770 = vld [vmem:[#allocation11 + $0x40] sm:$0xff]
    %v771 = vld [vmem:[#allocation11 + $0x48] sm:$0xff]
    %v772 = vld [vmem:[#allocation11 + $0x50] sm:$0xff]
    %v773 = vld [vmem:[#allocation11 + $0x58] sm:$0xff]
    %v774 = vld [vmem:[#allocation11 + $0x60] sm:$0xff]
    %v775 = vld [vmem:[#allocation11 + $0x68] sm:$0xff]
    %v776 = vld [vmem:[#allocation11 + $0x70] sm:$0xff]
    %v777 = vld [vmem:[#allocation11 + $0x78] sm:$0xff]
    %v794 = vunpack.c.l.b16 %v762
    %v795 = vunpack.c.h.b16 %v762
    %v796 = vunpack.c.l.b16 %v763
    %v797 = vunpack.c.h.b16 %v763
    %v798 = vunpack.c.l.b16 %v764
    %v799 = vunpack.c.h.b16 %v764
    %v800 = vunpack.c.l.b16 %v765
    %v801 = vunpack.c.h.b16 %v765
    %v802 = vunpack.c.l.b16 %v766
    %v803 = vunpack.c.h.b16 %v766
    %v804 = vunpack.c.l.b16 %v767
    %v805 = vunpack.c.h.b16 %v767
    %v806 = vunpack.c.l.b16 %v768
    %v807 = vunpack.c.h.b16 %v768
    %v808 = vunpack.c.l.b16 %v769
    %v809 = vunpack.c.h.b16 %v769
    %v810 = vunpack.c.l.b16 %v770
    %v811 = vunpack.c.h.b16 %v770
    %v812 = vunpack.c.l.b16 %v771
    %v813 = vunpack.c.h.b16 %v771
    %v814 = vunpack.c.l.b16 %v772
    %v815 = vunpack.c.h.b16 %v772
    %v816 = vunpack.c.l.b16 %v773
    %v817 = vunpack.c.h.b16 %v773
    %v818 = vunpack.c.l.b16 %v774
    %v819 = vunpack.c.h.b16 %v774
    %v820 = vunpack.c.l.b16 %v775
    %v821 = vunpack.c.h.b16 %v775
    %v822 = vunpack.c.l.b16 %v776
    %v823 = vunpack.c.h.b16 %v776
    %v824 = vunpack.c.l.b16 %v777
    %v825 = vunpack.c.h.b16 %v777
    %v826 = vpack.c.b16 %v796, %v794
    %v827 = vpack.c.b16 %v797, %v795
    %v828 = vpack.c.b16 %v800, %v798
    %v829 = vpack.c.b16 %v801, %v799
    %v830 = vpack.c.b16 %v804, %v802
    %v831 = vpack.c.b16 %v805, %v803
    %v832 = vpack.c.b16 %v808, %v806
    %v833 = vpack.c.b16 %v809, %v807
    %v834 = vpack.c.b16 %v812, %v810
    %v835 = vpack.c.b16 %v813, %v811
    %v836 = vpack.c.b16 %v816, %v814
    %v837 = vpack.c.b16 %v817, %v815
    %v838 = vpack.c.b16 %v820, %v818
    %v839 = vpack.c.b16 %v821, %v819
    %v840 = vpack.c.b16 %v824, %v822
    %v841 = vpack.c.b16 %v825, %v823
    %858 = vmatprep.subr.bf16.mxu0 %v841
    %859 = vmatpush1.bf16.msra.mxu0 %v840
    %860 = vmatprep.subr.bf16.mxu0 %v839
    %861 = vmatpush1.bf16.msra.mxu0 %v838
    %862 = vmatprep.subr.bf16.mxu0 %v837
    %863 = vmatpush1.bf16.msra.mxu0 %v836
    %864 = vmatprep.subr.bf16.mxu0 %v835
    %865 = vmatpush1.bf16.msra.mxu0 %v834
    %866 = vmatprep.subr.bf16.mxu0 %v833
    %867 = vmatpush1.bf16.msra.mxu0 %v832
    %868 = vmatprep.subr.bf16.mxu0 %v831
    %869 = vmatpush1.bf16.msra.mxu0 %v830
    %870 = vmatprep.subr.bf16.mxu0 %v829
    %871 = vmatpush1.bf16.msra.mxu0 %v828
    %872 = vmatprep.subr.bf16.mxu0 %v827
    %873 = vmatpush1.bf16.msra.mxu0 %v826
    %874 = vmatprep.subr.bf16.mxu0 0
    %875 = vmatpush2.bf16.msra.mxu0 0
    %876 = vmatprep.subr.bf16.mxu0 0
    %877 = vmatpush2.bf16.msra.mxu0 0
    %878 = vmatprep.subr.bf16.mxu0 0
    %879 = vmatpush2.bf16.msra.mxu0 0
    %880 = vmatprep.subr.bf16.mxu0 0
    %881 = vmatpush2.bf16.msra.mxu0 0
    %882 = vmatprep.subr.bf16.mxu0 0
    %883 = vmatpush2.bf16.msra.mxu0 0
    %884 = vmatprep.subr.bf16.mxu0 0
    %885 = vmatpush2.bf16.msra.mxu0 0
    %886 = vmatprep.subr.bf16.mxu0 0
    %887 = vmatpush2.bf16.msra.mxu0 0
    %888 = vmatprep.subr.bf16.mxu0 0
    %889 = vmatpush2.bf16.msra.mxu0 0
    %890 = vmatprep.mubr.bf16.mxu0 0
    %891 = vmatmul.mubr.bf16.gmra.mxu0 %v761
    %v892 = vpop.f32.mrf.mxu0
    %v893 = vadd.f32 %v758, %v892
    %v894 = vpop.f32.mrf.mxu0
    %v895 = vadd.f32 %v759, %v894
    %v896 = vpop.f32.mrf.mxu0
    %v897 = vpop.f32.mrf.mxu0
    %898 = vdwg.mxu0
    %v899 = vxor.u32 %v893, 2147483648
    %v900 = vxor.u32 %v895, 2147483648
    %v901 = vmul.f32 %v899, 1.442695
    %v902 = vpow.pop %v901
    %v903 = vmul.f32 %v900, 1.442695
    %v904 = vpow.pop %v903
    %v905 = vadd.f32 %v902, 1.0
    %v906 = vadd.f32 %v904, 1.0
    %v907 = vrcp.pop %v905
    %v908 = vmul.f32 1.0, %v907
    %v909 = vrcp.pop %v906
    %v910 = vmul.f32 1.0, %v909
    %v911 = vmul.f32 %v908, %v755
    %v912 = vpack.c.bf16 %v911, %v911
    %v913 = vld [vmem:[#allocation13] sm:$0xf]
    %v914 = vld [vmem:[#allocation13 + $0x4] sm:$0xf]
    %v915 = vld [vmem:[#allocation13 + $0x8] sm:$0xf]
    %v916 = vld [vmem:[#allocation13 + $0xc] sm:$0xf]
    %v917 = vld [vmem:[#allocation13 + $0x10] sm:$0xf]
    %v918 = vld [vmem:[#allocation13 + $0x14] sm:$0xf]
    %v919 = vld [vmem:[#allocation13 + $0x18] sm:$0xf]
    %v920 = vld [vmem:[#allocation13 + $0x1c] sm:$0xf]
    %v921 = vld [vmem:[#allocation13 + $0x20] sm:$0xf]
    %v922 = vld [vmem:[#allocation13 + $0x24] sm:$0xf]
    %v923 = vld [vmem:[#allocation13 + $0x28] sm:$0xf]
    %v924 = vld [vmem:[#allocation13 + $0x2c] sm:$0xf]
    %v925 = vld [vmem:[#allocation13 + $0x30] sm:$0xf]
    %v926 = vld [vmem:[#allocation13 + $0x34] sm:$0xf]
    %v927 = vld [vmem:[#allocation13 + $0x38] sm:$0xf]
    %v928 = vld [vmem:[#allocation13 + $0x3c] sm:$0xf]
    %v945 = vunpack.c.l.b16 %v913
    %v946 = vunpack.c.l.b16 %v914
    %v947 = vunpack.c.l.b16 %v915
    %v948 = vunpack.c.l.b16 %v916
    %v949 = vunpack.c.l.b16 %v917
    %v950 = vunpack.c.l.b16 %v918
    %v951 = vunpack.c.l.b16 %v919
    %v952 = vunpack.c.l.b16 %v920
    %v953 = vunpack.c.l.b16 %v921
    %v954 = vunpack.c.l.b16 %v922
    %v955 = vunpack.c.l.b16 %v923
    %v956 = vunpack.c.l.b16 %v924
    %v957 = vunpack.c.l.b16 %v925
    %v958 = vunpack.c.l.b16 %v926
    %v959 = vunpack.c.l.b16 %v927
    %v960 = vunpack.c.l.b16 %v928
    %v961 = vpack.c.b16 %v946, %v945
    %v962 = vpack.c.b16 %v948, %v947
    %v963 = vpack.c.b16 %v950, %v949
    %v964 = vpack.c.b16 %v952, %v951
    %v965 = vpack.c.b16 %v954, %v953
    %v966 = vpack.c.b16 %v956, %v955
    %v967 = vpack.c.b16 %v958, %v957
    %v968 = vpack.c.b16 %v960, %v959
    %977 = vmatprep.subr.bf16.mxu0 0
    %978 = vmatpush1.bf16.msra.mxu0 %v968
    %979 = vmatprep.subr.bf16.mxu0 0
    %980 = vmatpush1.bf16.msra.mxu0 %v967
    %981 = vmatprep.subr.bf16.mxu0 0
    %982 = vmatpush1.bf16.msra.mxu0 %v966
    %983 = vmatprep.subr.bf16.mxu0 0
    %984 = vmatpush1.bf16.msra.mxu0 %v965
    %985 = vmatprep.subr.bf16.mxu0 0
    %986 = vmatpush1.bf16.msra.mxu0 %v964
    %987 = vmatprep.subr.bf16.mxu0 0
    %988 = vmatpush1.bf16.msra.mxu0 %v963
    %989 = vmatprep.subr.bf16.mxu0 0
    %990 = vmatpush1.bf16.msra.mxu0 %v962
    %991 = vmatprep.subr.bf16.mxu0 0
    %992 = vmatpush1.bf16.msra.mxu0 %v961
    %993 = vmatprep.subr.bf16.mxu0 0
    %994 = vmatpush2.bf16.msra.mxu0 0
    %995 = vmatprep.subr.bf16.mxu0 0
    %996 = vmatpush2.bf16.msra.mxu0 0
    %997 = vmatprep.subr.bf16.mxu0 0
    %998 = vmatpush2.bf16.msra.mxu0 0
    %999 = vmatprep.subr.bf16.mxu0 0
    %1000 = vmatpush2.bf16.msra.mxu0 0
    %1001 = vmatprep.subr.bf16.mxu0 0
    %1002 = vmatpush2.bf16.msra.mxu0 0
    %1003 = vmatprep.subr.bf16.mxu0 0
    %1004 = vmatpush2.bf16.msra.mxu0 0
    %1005 = vmatprep.subr.bf16.mxu0 0
    %1006 = vmatpush2.bf16.msra.mxu0 0
    %1007 = vmatprep.subr.bf16.mxu0 0
    %1008 = vmatpush2.bf16.msra.mxu0 0
    %1009 = vmatprep.mubr.bf16.mxu0 0
    %1010 = vmatmul.mubr.bf16.gmra.mxu0 %v912
    %v1011 = vpop.f32.mrf.mxu0
    %v1012 = vadd.f32 %v760, %v1011
    %v1013 = vpop.f32.mrf.mxu0
    %v1014 = vpop.f32.mrf.mxu0
    %v1015 = vpop.f32.mrf.mxu0
    %1016 = vdwg.mxu0
    %v1017 = vtanh.pop %v1012
    %v1018 = vsub.f32 1.0, %v910
    %v1019 = vmul.f32 %v1018, %v1017
    %v1020 = vmul.f32 %v910, %v755
    %v1021 = vadd.f32 %v1019, %v1020
    %s1022 = scalar_lea.vmem [#allocation3], 8
    %1023 = vst [vmem:[%s1022] sm:$0xff] %v1021
    %s1024 = scalar_lea.vmem [#allocation2], 48
    %v1025 = vld [vmem:[%s1024] sm:$0xff]
    %v1026 = vld [vmem:[%s1024 + $0x8] sm:$0xff]
    %v1027 = vld [vmem:[%s1024 + $0x10] sm:$0xff]
    %v1028 = vpack.c.bf16 %v1021, %v1021
    %v1029 = vld [vmem:[#allocation11] sm:$0xff]
    %v1030 = vld [vmem:[#allocation11 + $0x8] sm:$0xff]
    %v1031 = vld [vmem:[#allocation11 + $0x10] sm:$0xff]
    %v1032 = vld [vmem:[#allocation11 + $0x18] sm:$0xff]
    %v1033 = vld [vmem:[#allocation11 + $0x20] sm:$0xff]
    %v1034 = vld [vmem:[#allocation11 + $0x28] sm:$0xff]
    %v1035 = vld [vmem:[#allocation11 + $0x30] sm:$0xff]
    %v1036 = vld [vmem:[#allocation11 + $0x38] sm:$0xff]
    %v1037 = vld [vmem:[#allocation11 + $0x40] sm:$0xff]
    %v1038 = vld [vmem:[#allocation11 + $0x48] sm:$0xff]
    %v1039 = vld [vmem:[#allocation11 + $0x50] sm:$0xff]
    %v1040 = vld [vmem:[#allocation11 + $0x58] sm:$0xff]
    %v1041 = vld [vmem:[#allocation11 + $0x60] sm:$0xff]
    %v1042 = vld [vmem:[#allocation11 + $0x68] sm:$0xff]
    %v1043 = vld [vmem:[#allocation11 + $0x70] sm:$0xff]
    %v1044 = vld [vmem:[#allocation11 + $0x78] sm:$0xff]
    %v1061 = vunpack.c.l.b16 %v1029
    %v1062 = vunpack.c.h.b16 %v1029
    %v1063 = vunpack.c.l.b16 %v1030
    %v1064 = vunpack.c.h.b16 %v1030
    %v1065 = vunpack.c.l.b16 %v1031
    %v1066 = vunpack.c.h.b16 %v1031
    %v1067 = vunpack.c.l.b16 %v1032
    %v1068 = vunpack.c.h.b16 %v1032
    %v1069 = vunpack.c.l.b16 %v1033
    %v1070 = vunpack.c.h.b16 %v1033
    %v1071 = vunpack.c.l.b16 %v1034
    %v1072 = vunpack.c.h.b16 %v1034
    %v1073 = vunpack.c.l.b16 %v1035
    %v1074 = vunpack.c.h.b16 %v1035
    %v1075 = vunpack.c.l.b16 %v1036
    %v1076 = vunpack.c.h.b16 %v1036
    %v1077 = vunpack.c.l.b16 %v1037
    %v1078 = vunpack.c.h.b16 %v1037
    %v1079 = vunpack.c.l.b16 %v1038
    %v1080 = vunpack.c.h.b16 %v1038
    %v1081 = vunpack.c.l.b16 %v1039
    %v1082 = vunpack.c.h.b16 %v1039
    %v1083 = vunpack.c.l.b16 %v1040
    %v1084 = vunpack.c.h.b16 %v1040
    %v1085 = vunpack.c.l.b16 %v1041
    %v1086 = vunpack.c.h.b16 %v1041
    %v1087 = vunpack.c.l.b16 %v1042
    %v1088 = vunpack.c.h.b16 %v1042
    %v1089 = vunpack.c.l.b16 %v1043
    %v1090 = vunpack.c.h.b16 %v1043
    %v1091 = vunpack.c.l.b16 %v1044
    %v1092 = vunpack.c.h.b16 %v1044
    %v1093 = vpack.c.b16 %v1063, %v1061
    %v1094 = vpack.c.b16 %v1064, %v1062
    %v1095 = vpack.c.b16 %v1067, %v1065
    %v1096 = vpack.c.b16 %v1068, %v1066
    %v1097 = vpack.c.b16 %v1071, %v1069
    %v1098 = vpack.c.b16 %v1072, %v1070
    %v1099 = vpack.c.b16 %v1075, %v1073
    %v1100 = vpack.c.b16 %v1076, %v1074
    %v1101 = vpack.c.b16 %v1079, %v1077
    %v1102 = vpack.c.b16 %v1080, %v1078
    %v1103 = vpack.c.b16 %v1083, %v1081
    %v1104 = vpack.c.b16 %v1084, %v1082
    %v1105 = vpack.c.b16 %v1087, %v1085
    %v1106 = vpack.c.b16 %v1088, %v1086
    %v1107 = vpack.c.b16 %v1091, %v1089
    %v1108 = vpack.c.b16 %v1092, %v1090
    %1125 = vmatprep.subr.bf16.mxu0 %v1108
    %1126 = vmatpush1.bf16.msra.mxu0 %v1107
    %1127 = vmatprep.subr.bf16.mxu0 %v1106
    %1128 = vmatpush1.bf16.msra.mxu0 %v1105
    %1129 = vmatprep.subr.bf16.mxu0 %v1104
    %1130 = vmatpush1.bf16.msra.mxu0 %v1103
    %1131 = vmatprep.subr.bf16.mxu0 %v1102
    %1132 = vmatpush1.bf16.msra.mxu0 %v1101
    %1133 = vmatprep.subr.bf16.mxu0 %v1100
    %1134 = vmatpush1.bf16.msra.mxu0 %v1099
    %1135 = vmatprep.subr.bf16.mxu0 %v1098
    %1136 = vmatpush1.bf16.msra.mxu0 %v1097
    %1137 = vmatprep.subr.bf16.mxu0 %v1096
    %1138 = vmatpush1.bf16.msra.mxu0 %v1095
    %1139 = vmatprep.subr.bf16.mxu0 %v1094
    %1140 = vmatpush1.bf16.msra.mxu0 %v1093
    %1141 = vmatprep.subr.bf16.mxu0 0
    %1142 = vmatpush2.bf16.msra.mxu0 0
    %1143 = vmatprep.subr.bf16.mxu0 0
    %1144 = vmatpush2.bf16.msra.mxu0 0
    %1145 = vmatprep.subr.bf16.mxu0 0
    %1146 = vmatpush2.bf16.msra.mxu0 0
    %1147 = vmatprep.subr.bf16.mxu0 0
    %1148 = vmatpush2.bf16.msra.mxu0 0
    %1149 = vmatprep.subr.bf16.mxu0 0
    %1150 = vmatpush2.bf16.msra.mxu0 0
    %1151 = vmatprep.subr.bf16.mxu0 0
    %1152 = vmatpush2.bf16.msra.mxu0 0
    %1153 = vmatprep.subr.bf16.mxu0 0
    %1154 = vmatpush2.bf16.msra.mxu0 0
    %1155 = vmatprep.subr.bf16.mxu0 0
    %1156 = vmatpush2.bf16.msra.mxu0 0
    %1157 = vmatprep.mubr.bf16.mxu0 0
    %1158 = vmatmul.mubr.bf16.gmra.mxu0 %v1028
    %v1159 = vpop.f32.mrf.mxu0
    %v1160 = vadd.f32 %v1025, %v1159
    %v1161 = vpop.f32.mrf.mxu0
    %v1162 = vadd.f32 %v1026, %v1161
    %v1163 = vpop.f32.mrf.mxu0
    %v1164 = vpop.f32.mrf.mxu0
    %1165 = vdwg.mxu0
    %v1166 = vxor.u32 %v1160, 2147483648
    %v1167 = vxor.u32 %v1162, 2147483648
    %v1168 = vmul.f32 %v1166, 1.442695
    %v1169 = vpow.pop %v1168
    %v1170 = vmul.f32 %v1167, 1.442695
    %v1171 = vpow.pop %v1170
    %v1172 = vadd.f32 %v1169, 1.0
    %v1173 = vadd.f32 %v1171, 1.0
    %v1174 = vrcp.pop %v1172
    %v1175 = vmul.f32 1.0, %v1174
    %v1176 = vrcp.pop %v1173
    %v1177 = vmul.f32 1.0, %v1176
    %v1178 = vmul.f32 %v1175, %v1021
    %v1179 = vpack.c.bf16 %v1178, %v1178
    %v1180 = vld [vmem:[#allocation13] sm:$0xf]
    %v1181 = vld [vmem:[#allocation13 + $0x4] sm:$0xf]
    %v1182 = vld [vmem:[#allocation13 + $0x8] sm:$0xf]
    %v1183 = vld [vmem:[#allocation13 + $0xc] sm:$0xf]
    %v1184 = vld [vmem:[#allocation13 + $0x10] sm:$0xf]
    %v1185 = vld [vmem:[#allocation13 + $0x14] sm:$0xf]
    %v1186 = vld [vmem:[#allocation13 + $0x18] sm:$0xf]
    %v1187 = vld [vmem:[#allocation13 + $0x1c] sm:$0xf]
    %v1188 = vld [vmem:[#allocation13 + $0x20] sm:$0xf]
    %v1189 = vld [vmem:[#allocation13 + $0x24] sm:$0xf]
    %v1190 = vld [vmem:[#allocation13 + $0x28] sm:$0xf]
    %v1191 = vld [vmem:[#allocation13 + $0x2c] sm:$0xf]
    %v1192 = vld [vmem:[#allocation13 + $0x30] sm:$0xf]
    %v1193 = vld [vmem:[#allocation13 + $0x34] sm:$0xf]
    %v1194 = vld [vmem:[#allocation13 + $0x38] sm:$0xf]
    %v1195 = vld [vmem:[#allocation13 + $0x3c] sm:$0xf]
    %v1212 = vunpack.c.l.b16 %v1180
    %v1213 = vunpack.c.l.b16 %v1181
    %v1214 = vunpack.c.l.b16 %v1182
    %v1215 = vunpack.c.l.b16 %v1183
    %v1216 = vunpack.c.l.b16 %v1184
    %v1217 = vunpack.c.l.b16 %v1185
    %v1218 = vunpack.c.l.b16 %v1186
    %v1219 = vunpack.c.l.b16 %v1187
    %v1220 = vunpack.c.l.b16 %v1188
    %v1221 = vunpack.c.l.b16 %v1189
    %v1222 = vunpack.c.l.b16 %v1190
    %v1223 = vunpack.c.l.b16 %v1191
    %v1224 = vunpack.c.l.b16 %v1192
    %v1225 = vunpack.c.l.b16 %v1193
    %v1226 = vunpack.c.l.b16 %v1194
    %v1227 = vunpack.c.l.b16 %v1195
    %v1228 = vpack.c.b16 %v1213, %v1212
    %v1229 = vpack.c.b16 %v1215, %v1214
    %v1230 = vpack.c.b16 %v1217, %v1216
    %v1231 = vpack.c.b16 %v1219, %v1218
    %v1232 = vpack.c.b16 %v1221, %v1220
    %v1233 = vpack.c.b16 %v1223, %v1222
    %v1234 = vpack.c.b16 %v1225, %v1224
    %v1235 = vpack.c.b16 %v1227, %v1226
    %1244 = vmatprep.subr.bf16.mxu0 0
    %1245 = vmatpush1.bf16.msra.mxu0 %v1235
    %1246 = vmatprep.subr.bf16.mxu0 0
    %1247 = vmatpush1.bf16.msra.mxu0 %v1234
    %1248 = vmatprep.subr.bf16.mxu0 0
    %1249 = vmatpush1.bf16.msra.mxu0 %v1233
    %1250 = vmatprep.subr.bf16.mxu0 0
    %1251 = vmatpush1.bf16.msra.mxu0 %v1232
    %1252 = vmatprep.subr.bf16.mxu0 0
    %1253 = vmatpush1.bf16.msra.mxu0 %v1231
    %1254 = vmatprep.subr.bf16.mxu0 0
    %1255 = vmatpush1.bf16.msra.mxu0 %v1230
    %1256 = vmatprep.subr.bf16.mxu0 0
    %1257 = vmatpush1.bf16.msra.mxu0 %v1229
    %1258 = vmatprep.subr.bf16.mxu0 0
    %1259 = vmatpush1.bf16.msra.mxu0 %v1228
    %1260 = vmatprep.subr.bf16.mxu0 0
    %1261 = vmatpush2.bf16.msra.mxu0 0
    %1262 = vmatprep.subr.bf16.mxu0 0
    %1263 = vmatpush2.bf16.msra.mxu0 0
    %1264 = vmatprep.subr.bf16.mxu0 0
    %1265 = vmatpush2.bf16.msra.mxu0 0
    %1266 = vmatprep.subr.bf16.mxu0 0
    %1267 = vmatpush2.bf16.msra.mxu0 0
    %1268 = vmatprep.subr.bf16.mxu0 0
    %1269 = vmatpush2.bf16.msra.mxu0 0
    %1270 = vmatprep.subr.bf16.mxu0 0
    %1271 = vmatpush2.bf16.msra.mxu0 0
    %1272 = vmatprep.subr.bf16.mxu0 0
    %1273 = vmatpush2.bf16.msra.mxu0 0
    %1274 = vmatprep.subr.bf16.mxu0 0
    %1275 = vmatpush2.bf16.msra.mxu0 0
    %1276 = vmatprep.mubr.bf16.mxu0 0
    %1277 = vmatmul.mubr.bf16.gmra.mxu0 %v1179
    %v1278 = vpop.f32.mrf.mxu0
    %v1279 = vadd.f32 %v1027, %v1278
    %v1280 = vpop.f32.mrf.mxu0
    %v1281 = vpop.f32.mrf.mxu0
    %v1282 = vpop.f32.mrf.mxu0
    %1283 = vdwg.mxu0
    %v1284 = vtanh.pop %v1279
    %v1285 = vsub.f32 1.0, %v1177
    %v1286 = vmul.f32 %v1285, %v1284
    %v1287 = vmul.f32 %v1177, %v1021
    %v1288 = vadd.f32 %v1286, %v1287
    %s1289 = scalar_lea.vmem [#allocation3], 16
    %1290 = vst [vmem:[%s1289] sm:$0xff] %v1288
    %s1291 = scalar_lea.vmem [#allocation2], 72
    %v1292 = vld [vmem:[%s1291] sm:$0xff]
    %v1293 = vld [vmem:[%s1291 + $0x8] sm:$0xff]
    %v1294 = vld [vmem:[%s1291 + $0x10] sm:$0xff]
    %v1295 = vpack.c.bf16 %v1288, %v1288
    %v1296 = vld [vmem:[#allocation11] sm:$0xff]
    %v1297 = vld [vmem:[#allocation11 + $0x8] sm:$0xff]
    %v1298 = vld [vmem:[#allocation11 + $0x10] sm:$0xff]
    %v1299 = vld [vmem:[#allocation11 + $0x18] sm:$0xff]
    %v1300 = vld [vmem:[#allocation11 + $0x20] sm:$0xff]
    %v1301 = vld [vmem:[#allocation11 + $0x28] sm:$0xff]
    %v1302 = vld [vmem:[#allocation11 + $0x30] sm:$0xff]
    %v1303 = vld [vmem:[#allocation11 + $0x38] sm:$0xff]
    %v1304 = vld [vmem:[#allocation11 + $0x40] sm:$0xff]
    %v1305 = vld [vmem:[#allocation11 + $0x48] sm:$0xff]
    %v1306 = vld [vmem:[#allocation11 + $0x50] sm:$0xff]
    %v1307 = vld [vmem:[#allocation11 + $0x58] sm:$0xff]
    %v1308 = vld [vmem:[#allocation11 + $0x60] sm:$0xff]
    %v1309 = vld [vmem:[#allocation11 + $0x68] sm:$0xff]
    %v1310 = vld [vmem:[#allocation11 + $0x70] sm:$0xff]
    %v1311 = vld [vmem:[#allocation11 + $0x78] sm:$0xff]
    %v1328 = vunpack.c.l.b16 %v1296
    %v1329 = vunpack.c.h.b16 %v1296
    %v1330 = vunpack.c.l.b16 %v1297
    %v1331 = vunpack.c.h.b16 %v1297
    %v1332 = vunpack.c.l.b16 %v1298
    %v1333 = vunpack.c.h.b16 %v1298
    %v1334 = vunpack.c.l.b16 %v1299
    %v1335 = vunpack.c.h.b16 %v1299
    %v1336 = vunpack.c.l.b16 %v1300
    %v1337 = vunpack.c.h.b16 %v1300
    %v1338 = vunpack.c.l.b16 %v1301
    %v1339 = vunpack.c.h.b16 %v1301
    %v1340 = vunpack.c.l.b16 %v1302
    %v1341 = vunpack.c.h.b16 %v1302
    %v1342 = vunpack.c.l.b16 %v1303
    %v1343 = vunpack.c.h.b16 %v1303
    %v1344 = vunpack.c.l.b16 %v1304
    %v1345 = vunpack.c.h.b16 %v1304
    %v1346 = vunpack.c.l.b16 %v1305
    %v1347 = vunpack.c.h.b16 %v1305
    %v1348 = vunpack.c.l.b16 %v1306
    %v1349 = vunpack.c.h.b16 %v1306
    %v1350 = vunpack.c.l.b16 %v1307
    %v1351 = vunpack.c.h.b16 %v1307
    %v1352 = vunpack.c.l.b16 %v1308
    %v1353 = vunpack.c.h.b16 %v1308
    %v1354 = vunpack.c.l.b16 %v1309
    %v1355 = vunpack.c.h.b16 %v1309
    %v1356 = vunpack.c.l.b16 %v1310
    %v1357 = vunpack.c.h.b16 %v1310
    %v1358 = vunpack.c.l.b16 %v1311
    %v1359 = vunpack.c.h.b16 %v1311
    %v1360 = vpack.c.b16 %v1330, %v1328
    %v1361 = vpack.c.b16 %v1331, %v1329
    %v1362 = vpack.c.b16 %v1334, %v1332
    %v1363 = vpack.c.b16 %v1335, %v1333
    %v1364 = vpack.c.b16 %v1338, %v1336
    %v1365 = vpack.c.b16 %v1339, %v1337
    %v1366 = vpack.c.b16 %v1342, %v1340
    %v1367 = vpack.c.b16 %v1343, %v1341
    %v1368 = vpack.c.b16 %v1346, %v1344
    %v1369 = vpack.c.b16 %v1347, %v1345
    %v1370 = vpack.c.b16 %v1350, %v1348
    %v1371 = vpack.c.b16 %v1351, %v1349
    %v1372 = vpack.c.b16 %v1354, %v1352
    %v1373 = vpack.c.b16 %v1355, %v1353
    %v1374 = vpack.c.b16 %v1358, %v1356
    %v1375 = vpack.c.b16 %v1359, %v1357
    %1392 = vmatprep.subr.bf16.mxu0 %v1375
    %1393 = vmatpush1.bf16.msra.mxu0 %v1374
    %1394 = vmatprep.subr.bf16.mxu0 %v1373
    %1395 = vmatpush1.bf16.msra.mxu0 %v1372
    %1396 = vmatprep.subr.bf16.mxu0 %v1371
    %1397 = vmatpush1.bf16.msra.mxu0 %v1370
    %1398 = vmatprep.subr.bf16.mxu0 %v1369
    %1399 = vmatpush1.bf16.msra.mxu0 %v1368
    %1400 = vmatprep.subr.bf16.mxu0 %v1367
    %1401 = vmatpush1.bf16.msra.mxu0 %v1366
    %1402 = vmatprep.subr.bf16.mxu0 %v1365
    %1403 = vmatpush1.bf16.msra.mxu0 %v1364
    %1404 = vmatprep.subr.bf16.mxu0 %v1363
    %1405 = vmatpush1.bf16.msra.mxu0 %v1362
    %1406 = vmatprep.subr.bf16.mxu0 %v1361
    %1407 = vmatpush1.bf16.msra.mxu0 %v1360
    %1408 = vmatprep.subr.bf16.mxu0 0
    %1409 = vmatpush2.bf16.msra.mxu0 0
    %1410 = vmatprep.subr.bf16.mxu0 0
    %1411 = vmatpush2.bf16.msra.mxu0 0
    %1412 = vmatprep.subr.bf16.mxu0 0
    %1413 = vmatpush2.bf16.msra.mxu0 0
    %1414 = vmatprep.subr.bf16.mxu0 0
    %1415 = vmatpush2.bf16.msra.mxu0 0
    %1416 = vmatprep.subr.bf16.mxu0 0
    %1417 = vmatpush2.bf16.msra.mxu0 0
    %1418 = vmatprep.subr.bf16.mxu0 0
    %1419 = vmatpush2.bf16.msra.mxu0 0
    %1420 = vmatprep.subr.bf16.mxu0 0
    %1421 = vmatpush2.bf16.msra.mxu0 0
    %1422 = vmatprep.subr.bf16.mxu0 0
    %1423 = vmatpush2.bf16.msra.mxu0 0
    %1424 = vmatprep.mubr.bf16.mxu0 0
    %1425 = vmatmul.mubr.bf16.gmra.mxu0 %v1295
    %v1426 = vpop.f32.mrf.mxu0
    %v1427 = vadd.f32 %v1292, %v1426
    %v1428 = vpop.f32.mrf.mxu0
    %v1429 = vadd.f32 %v1293, %v1428
    %v1430 = vpop.f32.mrf.mxu0
    %v1431 = vpop.f32.mrf.mxu0
    %1432 = vdwg.mxu0
    %v1433 = vxor.u32 %v1427, 2147483648
    %v1434 = vxor.u32 %v1429, 2147483648
    %v1435 = vmul.f32 %v1433, 1.442695
    %v1436 = vpow.pop %v1435
    %v1437 = vmul.f32 %v1434, 1.442695
    %v1438 = vpow.pop %v1437
    %v1439 = vadd.f32 %v1436, 1.0
    %v1440 = vadd.f32 %v1438, 1.0
    %v1441 = vrcp.pop %v1439
    %v1442 = vmul.f32 1.0, %v1441
    %v1443 = vrcp.pop %v1440
    %v1444 = vmul.f32 1.0, %v1443
    %v1445 = vmul.f32 %v1442, %v1288
    %v1446 = vpack.c.bf16 %v1445, %v1445
    %v1447 = vld [vmem:[#allocation13] sm:$0xf]
    %v1448 = vld [vmem:[#allocation13 + $0x4] sm:$0xf]
    %v1449 = vld [vmem:[#allocation13 + $0x8] sm:$0xf]
    %v1450 = vld [vmem:[#allocation13 + $0xc] sm:$0xf]
    %v1451 = vld [vmem:[#allocation13 + $0x10] sm:$0xf]
    %v1452 = vld [vmem:[#allocation13 + $0x14] sm:$0xf]
    %v1453 = vld [vmem:[#allocation13 + $0x18] sm:$0xf]
    %v1454 = vld [vmem:[#allocation13 + $0x1c] sm:$0xf]
    %v1455 = vld [vmem:[#allocation13 + $0x20] sm:$0xf]
    %v1456 = vld [vmem:[#allocation13 + $0x24] sm:$0xf]
    %v1457 = vld [vmem:[#allocation13 + $0x28] sm:$0xf]
    %v1458 = vld [vmem:[#allocation13 + $0x2c] sm:$0xf]
    %v1459 = vld [vmem:[#allocation13 + $0x30] sm:$0xf]
    %v1460 = vld [vmem:[#allocation13 + $0x34] sm:$0xf]
    %v1461 = vld [vmem:[#allocation13 + $0x38] sm:$0xf]
    %v1462 = vld [vmem:[#allocation13 + $0x3c] sm:$0xf]
    %v1479 = vunpack.c.l.b16 %v1447
    %v1480 = vunpack.c.l.b16 %v1448
    %v1481 = vunpack.c.l.b16 %v1449
    %v1482 = vunpack.c.l.b16 %v1450
    %v1483 = vunpack.c.l.b16 %v1451
    %v1484 = vunpack.c.l.b16 %v1452
    %v1485 = vunpack.c.l.b16 %v1453
    %v1486 = vunpack.c.l.b16 %v1454
    %v1487 = vunpack.c.l.b16 %v1455
    %v1488 = vunpack.c.l.b16 %v1456
    %v1489 = vunpack.c.l.b16 %v1457
    %v1490 = vunpack.c.l.b16 %v1458
    %v1491 = vunpack.c.l.b16 %v1459
    %v1492 = vunpack.c.l.b16 %v1460
    %v1493 = vunpack.c.l.b16 %v1461
    %v1494 = vunpack.c.l.b16 %v1462
    %v1495 = vpack.c.b16 %v1480, %v1479
    %v1496 = vpack.c.b16 %v1482, %v1481
    %v1497 = vpack.c.b16 %v1484, %v1483
    %v1498 = vpack.c.b16 %v1486, %v1485
    %v1499 = vpack.c.b16 %v1488, %v1487
    %v1500 = vpack.c.b16 %v1490, %v1489
    %v1501 = vpack.c.b16 %v1492, %v1491
    %v1502 = vpack.c.b16 %v1494, %v1493
    %1511 = vmatprep.subr.bf16.mxu0 0
    %1512 = vmatpush1.bf16.msra.mxu0 %v1502
    %1513 = vmatprep.subr.bf16.mxu0 0
    %1514 = vmatpush1.bf16.msra.mxu0 %v1501
    %1515 = vmatprep.subr.bf16.mxu0 0
    %1516 = vmatpush1.bf16.msra.mxu0 %v1500
    %1517 = vmatprep.subr.bf16.mxu0 0
    %1518 = vmatpush1.bf16.msra.mxu0 %v1499
    %1519 = vmatprep.subr.bf16.mxu0 0
    %1520 = vmatpush1.bf16.msra.mxu0 %v1498
    %1521 = vmatprep.subr.bf16.mxu0 0
    %1522 = vmatpush1.bf16.msra.mxu0 %v1497
    %1523 = vmatprep.subr.bf16.mxu0 0
    %1524 = vmatpush1.bf16.msra.mxu0 %v1496
    %1525 = vmatprep.subr.bf16.mxu0 0
    %1526 = vmatpush1.bf16.msra.mxu0 %v1495
    %1527 = vmatprep.subr.bf16.mxu0 0
    %1528 = vmatpush2.bf16.msra.mxu0 0
    %1529 = vmatprep.subr.bf16.mxu0 0
    %1530 = vmatpush2.bf16.msra.mxu0 0
    %1531 = vmatprep.subr.bf16.mxu0 0
    %1532 = vmatpush2.bf16.msra.mxu0 0
    %1533 = vmatprep.subr.bf16.mxu0 0
    %1534 = vmatpush2.bf16.msra.mxu0 0
    %1535 = vmatprep.subr.bf16.mxu0 0
    %1536 = vmatpush2.bf16.msra.mxu0 0
    %1537 = vmatprep.subr.bf16.mxu0 0
    %1538 = vmatpush2.bf16.msra.mxu0 0
    %1539 = vmatprep.subr.bf16.mxu0 0
    %1540 = vmatpush2.bf16.msra.mxu0 0
    %1541 = vmatprep.subr.bf16.mxu0 0
    %1542 = vmatpush2.bf16.msra.mxu0 0
    %1543 = vmatprep.mubr.bf16.mxu0 0
    %1544 = vmatmul.mubr.bf16.gmra.mxu0 %v1446
    %v1545 = vpop.f32.mrf.mxu0
    %v1546 = vadd.f32 %v1294, %v1545
    %v1547 = vpop.f32.mrf.mxu0
    %v1548 = vpop.f32.mrf.mxu0
    %v1549 = vpop.f32.mrf.mxu0
    %1550 = vdwg.mxu0
    %v1551 = vtanh.pop %v1546
    %v1552 = vsub.f32 1.0, %v1444
    %v1553 = vmul.f32 %v1552, %v1551
    %v1554 = vmul.f32 %v1444, %v1288
    %v1555 = vadd.f32 %v1553, %v1554
    %s1556 = scalar_lea.vmem [#allocation3], 24
    %1557 = vst [vmem:[%s1556] sm:$0xff] %v1555
    %s1558 = scalar_lea.vmem [#allocation2], 96
    %v1559 = vld [vmem:[%s1558] sm:$0xff]
    %v1560 = vld [vmem:[%s1558 + $0x8] sm:$0xff]
    %v1561 = vld [vmem:[%s1558 + $0x10] sm:$0xff]
    %v1562 = vpack.c.bf16 %v1555, %v1555
    %v1563 = vld [vmem:[#allocation11] sm:$0xff]
    %v1564 = vld [vmem:[#allocation11 + $0x8] sm:$0xff]
    %v1565 = vld [vmem:[#allocation11 + $0x10] sm:$0xff]
    %v1566 = vld [vmem:[#allocation11 + $0x18] sm:$0xff]
    %v1567 = vld [vmem:[#allocation11 + $0x20] sm:$0xff]
    %v1568 = vld [vmem:[#allocation11 + $0x28] sm:$0xff]
    %v1569 = vld [vmem:[#allocation11 + $0x30] sm:$0xff]
    %v1570 = vld [vmem:[#allocation11 + $0x38] sm:$0xff]
    %v1571 = vld [vmem:[#allocation11 + $0x40] sm:$0xff]
    %v1572 = vld [vmem:[#allocation11 + $0x48] sm:$0xff]
    %v1573 = vld [vmem:[#allocation11 + $0x50] sm:$0xff]
    %v1574 = vld [vmem:[#allocation11 + $0x58] sm:$0xff]
    %v1575 = vld [vmem:[#allocation11 + $0x60] sm:$0xff]
    %v1576 = vld [vmem:[#allocation11 + $0x68] sm:$0xff]
    %v1577 = vld [vmem:[#allocation11 + $0x70] sm:$0xff]
    %v1578 = vld [vmem:[#allocation11 + $0x78] sm:$0xff]
    %v1595 = vunpack.c.l.b16 %v1563
    %v1596 = vunpack.c.h.b16 %v1563
    %v1597 = vunpack.c.l.b16 %v1564
    %v1598 = vunpack.c.h.b16 %v1564
    %v1599 = vunpack.c.l.b16 %v1565
    %v1600 = vunpack.c.h.b16 %v1565
    %v1601 = vunpack.c.l.b16 %v1566
    %v1602 = vunpack.c.h.b16 %v1566
    %v1603 = vunpack.c.l.b16 %v1567
    %v1604 = vunpack.c.h.b16 %v1567
    %v1605 = vunpack.c.l.b16 %v1568
    %v1606 = vunpack.c.h.b16 %v1568
    %v1607 = vunpack.c.l.b16 %v1569
    %v1608 = vunpack.c.h.b16 %v1569
    %v1609 = vunpack.c.l.b16 %v1570
    %v1610 = vunpack.c.h.b16 %v1570
    %v1611 = vunpack.c.l.b16 %v1571
    %v1612 = vunpack.c.h.b16 %v1571
    %v1613 = vunpack.c.l.b16 %v1572
    %v1614 = vunpack.c.h.b16 %v1572
    %v1615 = vunpack.c.l.b16 %v1573
    %v1616 = vunpack.c.h.b16 %v1573
    %v1617 = vunpack.c.l.b16 %v1574
    %v1618 = vunpack.c.h.b16 %v1574
    %v1619 = vunpack.c.l.b16 %v1575
    %v1620 = vunpack.c.h.b16 %v1575
    %v1621 = vunpack.c.l.b16 %v1576
    %v1622 = vunpack.c.h.b16 %v1576
    %v1623 = vunpack.c.l.b16 %v1577
    %v1624 = vunpack.c.h.b16 %v1577
    %v1625 = vunpack.c.l.b16 %v1578
    %v1626 = vunpack.c.h.b16 %v1578
    %v1627 = vpack.c.b16 %v1597, %v1595
    %v1628 = vpack.c.b16 %v1598, %v1596
    %v1629 = vpack.c.b16 %v1601, %v1599
    %v1630 = vpack.c.b16 %v1602, %v1600
    %v1631 = vpack.c.b16 %v1605, %v1603
    %v1632 = vpack.c.b16 %v1606, %v1604
    %v1633 = vpack.c.b16 %v1609, %v1607
    %v1634 = vpack.c.b16 %v1610, %v1608
    %v1635 = vpack.c.b16 %v1613, %v1611
    %v1636 = vpack.c.b16 %v1614, %v1612
    %v1637 = vpack.c.b16 %v1617, %v1615
    %v1638 = vpack.c.b16 %v1618, %v1616
    %v1639 = vpack.c.b16 %v1621, %v1619
    %v1640 = vpack.c.b16 %v1622, %v1620
    %v1641 = vpack.c.b16 %v1625, %v1623
    %v1642 = vpack.c.b16 %v1626, %v1624
    %1659 = vmatprep.subr.bf16.mxu0 %v1642
    %1660 = vmatpush1.bf16.msra.mxu0 %v1641
    %1661 = vmatprep.subr.bf16.mxu0 %v1640
    %1662 = vmatpush1.bf16.msra.mxu0 %v1639
    %1663 = vmatprep.subr.bf16.mxu0 %v1638
    %1664 = vmatpush1.bf16.msra.mxu0 %v1637
    %1665 = vmatprep.subr.bf16.mxu0 %v1636
    %1666 = vmatpush1.bf16.msra.mxu0 %v1635
    %1667 = vmatprep.subr.bf16.mxu0 %v1634
    %1668 = vmatpush1.bf16.msra.mxu0 %v1633
    %1669 = vmatprep.subr.bf16.mxu0 %v1632
    %1670 = vmatpush1.bf16.msra.mxu0 %v1631
    %1671 = vmatprep.subr.bf16.mxu0 %v1630
    %1672 = vmatpush1.bf16.msra.mxu0 %v1629
    %1673 = vmatprep.subr.bf16.mxu0 %v1628
    %1674 = vmatpush1.bf16.msra.mxu0 %v1627
    %1675 = vmatprep.subr.bf16.mxu0 0
    %1676 = vmatpush2.bf16.msra.mxu0 0
    %1677 = vmatprep.subr.bf16.mxu0 0
    %1678 = vmatpush2.bf16.msra.mxu0 0
    %1679 = vmatprep.subr.bf16.mxu0 0
    %1680 = vmatpush2.bf16.msra.mxu0 0
    %1681 = vmatprep.subr.bf16.mxu0 0
    %1682 = vmatpush2.bf16.msra.mxu0 0
    %1683 = vmatprep.subr.bf16.mxu0 0
    %1684 = vmatpush2.bf16.msra.mxu0 0
    %1685 = vmatprep.subr.bf16.mxu0 0
    %1686 = vmatpush2.bf16.msra.mxu0 0
    %1687 = vmatprep.subr.bf16.mxu0 0
    %1688 = vmatpush2.bf16.msra.mxu0 0
    %1689 = vmatprep.subr.bf16.mxu0 0
    %1690 = vmatpush2.bf16.msra.mxu0 0
    %1691 = vmatprep.mubr.bf16.mxu0 0
    %1692 = vmatmul.mubr.bf16.gmra.mxu0 %v1562
    %v1693 = vpop.f32.mrf.mxu0
    %v1694 = vadd.f32 %v1559, %v1693
    %v1695 = vpop.f32.mrf.mxu0
    %v1696 = vadd.f32 %v1560, %v1695
    %v1697 = vpop.f32.mrf.mxu0
    %v1698 = vpop.f32.mrf.mxu0
    %1699 = vdwg.mxu0
    %v1700 = vxor.u32 %v1694, 2147483648
    %v1701 = vxor.u32 %v1696, 2147483648
    %v1702 = vmul.f32 %v1700, 1.442695
    %v1703 = vpow.pop %v1702
    %v1704 = vmul.f32 %v1701, 1.442695
    %v1705 = vpow.pop %v1704
    %v1706 = vadd.f32 %v1703, 1.0
    %v1707 = vadd.f32 %v1705, 1.0
    %v1708 = vrcp.pop %v1706
    %v1709 = vmul.f32 1.0, %v1708
    %v1710 = vrcp.pop %v1707
    %v1711 = vmul.f32 1.0, %v1710
    %v1712 = vmul.f32 %v1709, %v1555
    %v1713 = vpack.c.bf16 %v1712, %v1712
    %v1714 = vld [vmem:[#allocation13] sm:$0xf]
    %v1715 = vld [vmem:[#allocation13 + $0x4] sm:$0xf]
    %v1716 = vld [vmem:[#allocation13 + $0x8] sm:$0xf]
    %v1717 = vld [vmem:[#allocation13 + $0xc] sm:$0xf]
    %v1718 = vld [vmem:[#allocation13 + $0x10] sm:$0xf]
    %v1719 = vld [vmem:[#allocation13 + $0x14] sm:$0xf]
    %v1720 = vld [vmem:[#allocation13 + $0x18] sm:$0xf]
    %v1721 = vld [vmem:[#allocation13 + $0x1c] sm:$0xf]
    %v1722 = vld [vmem:[#allocation13 + $0x20] sm:$0xf]
    %v1723 = vld [vmem:[#allocation13 + $0x24] sm:$0xf]
    %v1724 = vld [vmem:[#allocation13 + $0x28] sm:$0xf]
    %v1725 = vld [vmem:[#allocation13 + $0x2c] sm:$0xf]
    %v1726 = vld [vmem:[#allocation13 + $0x30] sm:$0xf]
    %v1727 = vld [vmem:[#allocation13 + $0x34] sm:$0xf]
    %v1728 = vld [vmem:[#allocation13 + $0x38] sm:$0xf]
    %v1729 = vld [vmem:[#allocation13 + $0x3c] sm:$0xf]
    %v1746 = vunpack.c.l.b16 %v1714
    %v1747 = vunpack.c.l.b16 %v1715
    %v1748 = vunpack.c.l.b16 %v1716
    %v1749 = vunpack.c.l.b16 %v1717
    %v1750 = vunpack.c.l.b16 %v1718
    %v1751 = vunpack.c.l.b16 %v1719
    %v1752 = vunpack.c.l.b16 %v1720
    %v1753 = vunpack.c.l.b16 %v1721
    %v1754 = vunpack.c.l.b16 %v1722
    %v1755 = vunpack.c.l.b16 %v1723
    %v1756 = vunpack.c.l.b16 %v1724
    %v1757 = vunpack.c.l.b16 %v1725
    %v1758 = vunpack.c.l.b16 %v1726
    %v1759 = vunpack.c.l.b16 %v1727
    %v1760 = vunpack.c.l.b16 %v1728
    %v1761 = vunpack.c.l.b16 %v1729
    %v1762 = vpack.c.b16 %v1747, %v1746
    %v1763 = vpack.c.b16 %v1749, %v1748
    %v1764 = vpack.c.b16 %v1751, %v1750
    %v1765 = vpack.c.b16 %v1753, %v1752
    %v1766 = vpack.c.b16 %v1755, %v1754
    %v1767 = vpack.c.b16 %v1757, %v1756
    %v1768 = vpack.c.b16 %v1759, %v1758
    %v1769 = vpack.c.b16 %v1761, %v1760
    %1778 = vmatprep.subr.bf16.mxu0 0
    %1779 = vmatpush1.bf16.msra.mxu0 %v1769
    %1780 = vmatprep.subr.bf16.mxu0 0
    %1781 = vmatpush1.bf16.msra.mxu0 %v1768
    %1782 = vmatprep.subr.bf16.mxu0 0
    %1783 = vmatpush1.bf16.msra.mxu0 %v1767
    %1784 = vmatprep.subr.bf16.mxu0 0
    %1785 = vmatpush1.bf16.msra.mxu0 %v1766
    %1786 = vmatprep.subr.bf16.mxu0 0
    %1787 = vmatpush1.bf16.msra.mxu0 %v1765
    %1788 = vmatprep.subr.bf16.mxu0 0
    %1789 = vmatpush1.bf16.msra.mxu0 %v1764
    %1790 = vmatprep.subr.bf16.mxu0 0
    %1791 = vmatpush1.bf16.msra.mxu0 %v1763
    %1792 = vmatprep.subr.bf16.mxu0 0
    %1793 = vmatpush1.bf16.msra.mxu0 %v1762
    %1794 = vmatprep.subr.bf16.mxu0 0
    %1795 = vmatpush2.bf16.msra.mxu0 0
    %1796 = vmatprep.subr.bf16.mxu0 0
    %1797 = vmatpush2.bf16.msra.mxu0 0
    %1798 = vmatprep.subr.bf16.mxu0 0
    %1799 = vmatpush2.bf16.msra.mxu0 0
    %1800 = vmatprep.subr.bf16.mxu0 0
    %1801 = vmatpush2.bf16.msra.mxu0 0
    %1802 = vmatprep.subr.bf16.mxu0 0
    %1803 = vmatpush2.bf16.msra.mxu0 0
    %1804 = vmatprep.subr.bf16.mxu0 0
    %1805 = vmatpush2.bf16.msra.mxu0 0
    %1806 = vmatprep.subr.bf16.mxu0 0
    %1807 = vmatpush2.bf16.msra.mxu0 0
    %1808 = vmatprep.subr.bf16.mxu0 0
    %1809 = vmatpush2.bf16.msra.mxu0 0
    %1810 = vmatprep.mubr.bf16.mxu0 0
    %1811 = vmatmul.mubr.bf16.gmra.mxu0 %v1713
    %v1812 = vpop.f32.mrf.mxu0
    %v1813 = vadd.f32 %v1561, %v1812
    %v1814 = vpop.f32.mrf.mxu0
    %v1815 = vpop.f32.mrf.mxu0
    %v1816 = vpop.f32.mrf.mxu0
    %1817 = vdwg.mxu0
    %v1818 = vtanh.pop %v1813
    %v1819 = vsub.f32 1.0, %v1711
    %v1820 = vmul.f32 %v1819, %v1818
    %v1821 = vmul.f32 %v1711, %v1555
    %v1822 = vadd.f32 %v1820, %v1821
    %s1823 = scalar_lea.vmem [#allocation3], 32
    %1824 = vst [vmem:[%s1823] sm:$0xff] %v1822
    %s1825 = scalar_lea.vmem [#allocation2], 120
    %v1826 = vld [vmem:[%s1825] sm:$0xff]
    %v1827 = vld [vmem:[%s1825 + $0x8] sm:$0xff]
    %v1828 = vld [vmem:[%s1825 + $0x10] sm:$0xff]
    %v1829 = vpack.c.bf16 %v1822, %v1822
    %v1830 = vld [vmem:[#allocation11] sm:$0xff]
    %v1831 = vld [vmem:[#allocation11 + $0x8] sm:$0xff]
    %v1832 = vld [vmem:[#allocation11 + $0x10] sm:$0xff]
    %v1833 = vld [vmem:[#allocation11 + $0x18] sm:$0xff]
    %v1834 = vld [vmem:[#allocation11 + $0x20] sm:$0xff]
    %v1835 = vld [vmem:[#allocation11 + $0x28] sm:$0xff]
    %v1836 = vld [vmem:[#allocation11 + $0x30] sm:$0xff]
    %v1837 = vld [vmem:[#allocation11 + $0x38] sm:$0xff]
    %v1838 = vld [vmem:[#allocation11 + $0x40] sm:$0xff]
    %v1839 = vld [vmem:[#allocation11 + $0x48] sm:$0xff]
    %v1840 = vld [vmem:[#allocation11 + $0x50] sm:$0xff]
    %v1841 = vld [vmem:[#allocation11 + $0x58] sm:$0xff]
    %v1842 = vld [vmem:[#allocation11 + $0x60] sm:$0xff]
    %v1843 = vld [vmem:[#allocation11 + $0x68] sm:$0xff]
    %v1844 = vld [vmem:[#allocation11 + $0x70] sm:$0xff]
    %v1845 = vld [vmem:[#allocation11 + $0x78] sm:$0xff]
    %v1862 = vunpack.c.l.b16 %v1830
    %v1863 = vunpack.c.h.b16 %v1830
    %v1864 = vunpack.c.l.b16 %v1831
    %v1865 = vunpack.c.h.b16 %v1831
    %v1866 = vunpack.c.l.b16 %v1832
    %v1867 = vunpack.c.h.b16 %v1832
    %v1868 = vunpack.c.l.b16 %v1833
    %v1869 = vunpack.c.h.b16 %v1833
    %v1870 = vunpack.c.l.b16 %v1834
    %v1871 = vunpack.c.h.b16 %v1834
    %v1872 = vunpack.c.l.b16 %v1835
    %v1873 = vunpack.c.h.b16 %v1835
    %v1874 = vunpack.c.l.b16 %v1836
    %v1875 = vunpack.c.h.b16 %v1836
    %v1876 = vunpack.c.l.b16 %v1837
    %v1877 = vunpack.c.h.b16 %v1837
    %v1878 = vunpack.c.l.b16 %v1838
    %v1879 = vunpack.c.h.b16 %v1838
    %v1880 = vunpack.c.l.b16 %v1839
    %v1881 = vunpack.c.h.b16 %v1839
    %v1882 = vunpack.c.l.b16 %v1840
    %v1883 = vunpack.c.h.b16 %v1840
    %v1884 = vunpack.c.l.b16 %v1841
    %v1885 = vunpack.c.h.b16 %v1841
    %v1886 = vunpack.c.l.b16 %v1842
    %v1887 = vunpack.c.h.b16 %v1842
    %v1888 = vunpack.c.l.b16 %v1843
    %v1889 = vunpack.c.h.b16 %v1843
    %v1890 = vunpack.c.l.b16 %v1844
    %v1891 = vunpack.c.h.b16 %v1844
    %v1892 = vunpack.c.l.b16 %v1845
    %v1893 = vunpack.c.h.b16 %v1845
    %v1894 = vpack.c.b16 %v1864, %v1862
    %v1895 = vpack.c.b16 %v1865, %v1863
    %v1896 = vpack.c.b16 %v1868, %v1866
    %v1897 = vpack.c.b16 %v1869, %v1867
    %v1898 = vpack.c.b16 %v1872, %v1870
    %v1899 = vpack.c.b16 %v1873, %v1871
    %v1900 = vpack.c.b16 %v1876, %v1874
    %v1901 = vpack.c.b16 %v1877, %v1875
    %v1902 = vpack.c.b16 %v1880, %v1878
    %v1903 = vpack.c.b16 %v1881, %v1879
    %v1904 = vpack.c.b16 %v1884, %v1882
    %v1905 = vpack.c.b16 %v1885, %v1883
    %v1906 = vpack.c.b16 %v1888, %v1886
    %v1907 = vpack.c.b16 %v1889, %v1887
    %v1908 = vpack.c.b16 %v1892, %v1890
    %v1909 = vpack.c.b16 %v1893, %v1891
    %1926 = vmatprep.subr.bf16.mxu0 %v1909
    %1927 = vmatpush1.bf16.msra.mxu0 %v1908
    %1928 = vmatprep.subr.bf16.mxu0 %v1907
    %1929 = vmatpush1.bf16.msra.mxu0 %v1906
    %1930 = vmatprep.subr.bf16.mxu0 %v1905
    %1931 = vmatpush1.bf16.msra.mxu0 %v1904
    %1932 = vmatprep.subr.bf16.mxu0 %v1903
    %1933 = vmatpush1.bf16.msra.mxu0 %v1902
    %1934 = vmatprep.subr.bf16.mxu0 %v1901
    %1935 = vmatpush1.bf16.msra.mxu0 %v1900
    %1936 = vmatprep.subr.bf16.mxu0 %v1899
    %1937 = vmatpush1.bf16.msra.mxu0 %v1898
    %1938 = vmatprep.subr.bf16.mxu0 %v1897
    %1939 = vmatpush1.bf16.msra.mxu0 %v1896
    %1940 = vmatprep.subr.bf16.mxu0 %v1895
    %1941 = vmatpush1.bf16.msra.mxu0 %v1894
    %1942 = vmatprep.subr.bf16.mxu0 0
    %1943 = vmatpush2.bf16.msra.mxu0 0
    %1944 = vmatprep.subr.bf16.mxu0 0
    %1945 = vmatpush2.bf16.msra.mxu0 0
    %1946 = vmatprep.subr.bf16.mxu0 0
    %1947 = vmatpush2.bf16.msra.mxu0 0
    %1948 = vmatprep.subr.bf16.mxu0 0
    %1949 = vmatpush2.bf16.msra.mxu0 0
    %1950 = vmatprep.subr.bf16.mxu0 0
    %1951 = vmatpush2.bf16.msra.mxu0 0
    %1952 = vmatprep.subr.bf16.mxu0 0
    %1953 = vmatpush2.bf16.msra.mxu0 0
    %1954 = vmatprep.subr.bf16.mxu0 0
    %1955 = vmatpush2.bf16.msra.mxu0 0
    %1956 = vmatprep.subr.bf16.mxu0 0
    %1957 = vmatpush2.bf16.msra.mxu0 0
    %1958 = vmatprep.mubr.bf16.mxu0 0
    %1959 = vmatmul.mubr.bf16.gmra.mxu0 %v1829
    %v1960 = vpop.f32.mrf.mxu0
    %v1961 = vadd.f32 %v1826, %v1960
    %v1962 = vpop.f32.mrf.mxu0
    %v1963 = vadd.f32 %v1827, %v1962
    %v1964 = vpop.f32.mrf.mxu0
    %v1965 = vpop.f32.mrf.mxu0
    %1966 = vdwg.mxu0
    %v1967 = vxor.u32 %v1961, 2147483648
    %v1968 = vxor.u32 %v1963, 2147483648
    %v1969 = vmul.f32 %v1967, 1.442695
    %v1970 = vpow.pop %v1969
    %v1971 = vmul.f32 %v1968, 1.442695
    %v1972 = vpow.pop %v1971
    %v1973 = vadd.f32 %v1970, 1.0
    %v1974 = vadd.f32 %v1972, 1.0
    %v1975 = vrcp.pop %v1973
    %v1976 = vmul.f32 1.0, %v1975
    %v1977 = vrcp.pop %v1974
    %v1978 = vmul.f32 1.0, %v1977
    %v1979 = vmul.f32 %v1976, %v1822
    %v1980 = vpack.c.bf16 %v1979, %v1979
    %v1981 = vld [vmem:[#allocation13] sm:$0xf]
    %v1982 = vld [vmem:[#allocation13 + $0x4] sm:$0xf]
    %v1983 = vld [vmem:[#allocation13 + $0x8] sm:$0xf]
    %v1984 = vld [vmem:[#allocation13 + $0xc] sm:$0xf]
    %v1985 = vld [vmem:[#allocation13 + $0x10] sm:$0xf]
    %v1986 = vld [vmem:[#allocation13 + $0x14] sm:$0xf]
    %v1987 = vld [vmem:[#allocation13 + $0x18] sm:$0xf]
    %v1988 = vld [vmem:[#allocation13 + $0x1c] sm:$0xf]
    %v1989 = vld [vmem:[#allocation13 + $0x20] sm:$0xf]
    %v1990 = vld [vmem:[#allocation13 + $0x24] sm:$0xf]
    %v1991 = vld [vmem:[#allocation13 + $0x28] sm:$0xf]
    %v1992 = vld [vmem:[#allocation13 + $0x2c] sm:$0xf]
    %v1993 = vld [vmem:[#allocation13 + $0x30] sm:$0xf]
    %v1994 = vld [vmem:[#allocation13 + $0x34] sm:$0xf]
    %v1995 = vld [vmem:[#allocation13 + $0x38] sm:$0xf]
    %v1996 = vld [vmem:[#allocation13 + $0x3c] sm:$0xf]
    %v2013 = vunpack.c.l.b16 %v1981
    %v2014 = vunpack.c.l.b16 %v1982
    %v2015 = vunpack.c.l.b16 %v1983
    %v2016 = vunpack.c.l.b16 %v1984
    %v2017 = vunpack.c.l.b16 %v1985
    %v2018 = vunpack.c.l.b16 %v1986
    %v2019 = vunpack.c.l.b16 %v1987
    %v2020 = vunpack.c.l.b16 %v1988
    %v2021 = vunpack.c.l.b16 %v1989
    %v2022 = vunpack.c.l.b16 %v1990
    %v2023 = vunpack.c.l.b16 %v1991
    %v2024 = vunpack.c.l.b16 %v1992
    %v2025 = vunpack.c.l.b16 %v1993
    %v2026 = vunpack.c.l.b16 %v1994
    %v2027 = vunpack.c.l.b16 %v1995
    %v2028 = vunpack.c.l.b16 %v1996
    %v2029 = vpack.c.b16 %v2014, %v2013
    %v2030 = vpack.c.b16 %v2016, %v2015
    %v2031 = vpack.c.b16 %v2018, %v2017
    %v2032 = vpack.c.b16 %v2020, %v2019
    %v2033 = vpack.c.b16 %v2022, %v2021
    %v2034 = vpack.c.b16 %v2024, %v2023
    %v2035 = vpack.c.b16 %v2026, %v2025
    %v2036 = vpack.c.b16 %v2028, %v2027
    %2045 = vmatprep.subr.bf16.mxu0 0
    %2046 = vmatpush1.bf16.msra.mxu0 %v2036
    %2047 = vmatprep.subr.bf16.mxu0 0
    %2048 = vmatpush1.bf16.msra.mxu0 %v2035
    %2049 = vmatprep.subr.bf16.mxu0 0
    %2050 = vmatpush1.bf16.msra.mxu0 %v2034
    %2051 = vmatprep.subr.bf16.mxu0 0
    %2052 = vmatpush1.bf16.msra.mxu0 %v2033
    %2053 = vmatprep.subr.bf16.mxu0 0
    %2054 = vmatpush1.bf16.msra.mxu0 %v2032
    %2055 = vmatprep.subr.bf16.mxu0 0
    %2056 = vmatpush1.bf16.msra.mxu0 %v2031
    %2057 = vmatprep.subr.bf16.mxu0 0
    %2058 = vmatpush1.bf16.msra.mxu0 %v2030
    %2059 = vmatprep.subr.bf16.mxu0 0
    %2060 = vmatpush1.bf16.msra.mxu0 %v2029
    %2061 = vmatprep.subr.bf16.mxu0 0
    %2062 = vmatpush2.bf16.msra.mxu0 0
    %2063 = vmatprep.subr.bf16.mxu0 0
    %2064 = vmatpush2.bf16.msra.mxu0 0
    %2065 = vmatprep.subr.bf16.mxu0 0
    %2066 = vmatpush2.bf16.msra.mxu0 0
    %2067 = vmatprep.subr.bf16.mxu0 0
    %2068 = vmatpush2.bf16.msra.mxu0 0
    %2069 = vmatprep.subr.bf16.mxu0 0
    %2070 = vmatpush2.bf16.msra.mxu0 0
    %2071 = vmatprep.subr.bf16.mxu0 0
    %2072 = vmatpush2.bf16.msra.mxu0 0
    %2073 = vmatprep.subr.bf16.mxu0 0
    %2074 = vmatpush2.bf16.msra.mxu0 0
    %2075 = vmatprep.subr.bf16.mxu0 0
    %2076 = vmatpush2.bf16.msra.mxu0 0
    %2077 = vmatprep.mubr.bf16.mxu0 0
    %2078 = vmatmul.mubr.bf16.gmra.mxu0 %v1980
    %v2079 = vpop.f32.mrf.mxu0
    %v2080 = vadd.f32 %v1828, %v2079
    %v2081 = vpop.f32.mrf.mxu0
    %v2082 = vpop.f32.mrf.mxu0
    %v2083 = vpop.f32.mrf.mxu0
    %2084 = vdwg.mxu0
    %v2085 = vtanh.pop %v2080
    %v2086 = vsub.f32 1.0, %v1978
    %v2087 = vmul.f32 %v2086, %v2085
    %v2088 = vmul.f32 %v1978, %v1822
    %v2089 = vadd.f32 %v2087, %v2088
    %s2090 = scalar_lea.vmem [#allocation3], 40
    %2091 = vst [vmem:[%s2090] sm:$0xff] %v2089
    %s2092 = scalar_lea.vmem [#allocation2], 144
    %v2093 = vld [vmem:[%s2092] sm:$0xff]
    %v2094 = vld [vmem:[%s2092 + $0x8] sm:$0xff]
    %v2095 = vld [vmem:[%s2092 + $0x10] sm:$0xff]
    %v2096 = vpack.c.bf16 %v2089, %v2089
    %v2097 = vld [vmem:[#allocation11] sm:$0xff]
    %v2098 = vld [vmem:[#allocation11 + $0x8] sm:$0xff]
    %v2099 = vld [vmem:[#allocation11 + $0x10] sm:$0xff]
    %v2100 = vld [vmem:[#allocation11 + $0x18] sm:$0xff]
    %v2101 = vld [vmem:[#allocation11 + $0x20] sm:$0xff]
    %v2102 = vld [vmem:[#allocation11 + $0x28] sm:$0xff]
    %v2103 = vld [vmem:[#allocation11 + $0x30] sm:$0xff]
    %v2104 = vld [vmem:[#allocation11 + $0x38] sm:$0xff]
    %v2105 = vld [vmem:[#allocation11 + $0x40] sm:$0xff]
    %v2106 = vld [vmem:[#allocation11 + $0x48] sm:$0xff]
    %v2107 = vld [vmem:[#allocation11 + $0x50] sm:$0xff]
    %v2108 = vld [vmem:[#allocation11 + $0x58] sm:$0xff]
    %v2109 = vld [vmem:[#allocation11 + $0x60] sm:$0xff]
    %v2110 = vld [vmem:[#allocation11 + $0x68] sm:$0xff]
    %v2111 = vld [vmem:[#allocation11 + $0x70] sm:$0xff]
    %v2112 = vld [vmem:[#allocation11 + $0x78] sm:$0xff]
    %v2129 = vunpack.c.l.b16 %v2097
    %v2130 = vunpack.c.h.b16 %v2097
    %v2131 = vunpack.c.l.b16 %v2098
    %v2132 = vunpack.c.h.b16 %v2098
    %v2133 = vunpack.c.l.b16 %v2099
    %v2134 = vunpack.c.h.b16 %v2099
    %v2135 = vunpack.c.l.b16 %v2100
    %v2136 = vunpack.c.h.b16 %v2100
    %v2137 = vunpack.c.l.b16 %v2101
    %v2138 = vunpack.c.h.b16 %v2101
    %v2139 = vunpack.c.l.b16 %v2102
    %v2140 = vunpack.c.h.b16 %v2102
    %v2141 = vunpack.c.l.b16 %v2103
    %v2142 = vunpack.c.h.b16 %v2103
    %v2143 = vunpack.c.l.b16 %v2104
    %v2144 = vunpack.c.h.b16 %v2104
    %v2145 = vunpack.c.l.b16 %v2105
    %v2146 = vunpack.c.h.b16 %v2105
    %v2147 = vunpack.c.l.b16 %v2106
    %v2148 = vunpack.c.h.b16 %v2106
    %v2149 = vunpack.c.l.b16 %v2107
    %v2150 = vunpack.c.h.b16 %v2107
    %v2151 = vunpack.c.l.b16 %v2108
    %v2152 = vunpack.c.h.b16 %v2108
    %v2153 = vunpack.c.l.b16 %v2109
    %v2154 = vunpack.c.h.b16 %v2109
    %v2155 = vunpack.c.l.b16 %v2110
    %v2156 = vunpack.c.h.b16 %v2110
    %v2157 = vunpack.c.l.b16 %v2111
    %v2158 = vunpack.c.h.b16 %v2111
    %v2159 = vunpack.c.l.b16 %v2112
    %v2160 = vunpack.c.h.b16 %v2112
    %v2161 = vpack.c.b16 %v2131, %v2129
    %v2162 = vpack.c.b16 %v2132, %v2130
    %v2163 = vpack.c.b16 %v2135, %v2133
    %v2164 = vpack.c.b16 %v2136, %v2134
    %v2165 = vpack.c.b16 %v2139, %v2137
    %v2166 = vpack.c.b16 %v2140, %v2138
    %v2167 = vpack.c.b16 %v2143, %v2141
    %v2168 = vpack.c.b16 %v2144, %v2142
    %v2169 = vpack.c.b16 %v2147, %v2145
    %v2170 = vpack.c.b16 %v2148, %v2146
    %v2171 = vpack.c.b16 %v2151, %v2149
    %v2172 = vpack.c.b16 %v2152, %v2150
    %v2173 = vpack.c.b16 %v2155, %v2153
    %v2174 = vpack.c.b16 %v2156, %v2154
    %v2175 = vpack.c.b16 %v2159, %v2157
    %v2176 = vpack.c.b16 %v2160, %v2158
    %2193 = vmatprep.subr.bf16.mxu0 %v2176
    %2194 = vmatpush1.bf16.msra.mxu0 %v2175
    %2195 = vmatprep.subr.bf16.mxu0 %v2174
    %2196 = vmatpush1.bf16.msra.mxu0 %v2173
    %2197 = vmatprep.subr.bf16.mxu0 %v2172
    %2198 = vmatpush1.bf16.msra.mxu0 %v2171
    %2199 = vmatprep.subr.bf16.mxu0 %v2170
    %2200 = vmatpush1.bf16.msra.mxu0 %v2169
    %2201 = vmatprep.subr.bf16.mxu0 %v2168
    %2202 = vmatpush1.bf16.msra.mxu0 %v2167
    %2203 = vmatprep.subr.bf16.mxu0 %v2166
    %2204 = vmatpush1.bf16.msra.mxu0 %v2165
    %2205 = vmatprep.subr.bf16.mxu0 %v2164
    %2206 = vmatpush1.bf16.msra.mxu0 %v2163
    %2207 = vmatprep.subr.bf16.mxu0 %v2162
    %2208 = vmatpush1.bf16.msra.mxu0 %v2161
    %2209 = vmatprep.subr.bf16.mxu0 0
    %2210 = vmatpush2.bf16.msra.mxu0 0
    %2211 = vmatprep.subr.bf16.mxu0 0
    %2212 = vmatpush2.bf16.msra.mxu0 0
    %2213 = vmatprep.subr.bf16.mxu0 0
    %2214 = vmatpush2.bf16.msra.mxu0 0
    %2215 = vmatprep.subr.bf16.mxu0 0
    %2216 = vmatpush2.bf16.msra.mxu0 0
    %2217 = vmatprep.subr.bf16.mxu0 0
    %2218 = vmatpush2.bf16.msra.mxu0 0
    %2219 = vmatprep.subr.bf16.mxu0 0
    %2220 = vmatpush2.bf16.msra.mxu0 0
    %2221 = vmatprep.subr.bf16.mxu0 0
    %2222 = vmatpush2.bf16.msra.mxu0 0
    %2223 = vmatprep.subr.bf16.mxu0 0
    %2224 = vmatpush2.bf16.msra.mxu0 0
    %2225 = vmatprep.mubr.bf16.mxu0 0
    %2226 = vmatmul.mubr.bf16.gmra.mxu0 %v2096
    %v2227 = vpop.f32.mrf.mxu0
    %v2228 = vadd.f32 %v2093, %v2227
    %v2229 = vpop.f32.mrf.mxu0
    %v2230 = vadd.f32 %v2094, %v2229
    %v2231 = vpop.f32.mrf.mxu0
    %v2232 = vpop.f32.mrf.mxu0
    %2233 = vdwg.mxu0
    %v2234 = vxor.u32 %v2228, 2147483648
    %v2235 = vxor.u32 %v2230, 2147483648
    %v2236 = vmul.f32 %v2234, 1.442695
    %v2237 = vpow.pop %v2236
    %v2238 = vmul.f32 %v2235, 1.442695
    %v2239 = vpow.pop %v2238
    %v2240 = vadd.f32 %v2237, 1.0
    %v2241 = vadd.f32 %v2239, 1.0
    %v2242 = vrcp.pop %v2240
    %v2243 = vmul.f32 1.0, %v2242
    %v2244 = vrcp.pop %v2241
    %v2245 = vmul.f32 1.0, %v2244
    %v2246 = vmul.f32 %v2243, %v2089
    %v2247 = vpack.c.bf16 %v2246, %v2246
    %v2248 = vld [vmem:[#allocation13] sm:$0xf]
    %v2249 = vld [vmem:[#allocation13 + $0x4] sm:$0xf]
    %v2250 = vld [vmem:[#allocation13 + $0x8] sm:$0xf]
    %v2251 = vld [vmem:[#allocation13 + $0xc] sm:$0xf]
    %v2252 = vld [vmem:[#allocation13 + $0x10] sm:$0xf]
    %v2253 = vld [vmem:[#allocation13 + $0x14] sm:$0xf]
    %v2254 = vld [vmem:[#allocation13 + $0x18] sm:$0xf]
    %v2255 = vld [vmem:[#allocation13 + $0x1c] sm:$0xf]
    %v2256 = vld [vmem:[#allocation13 + $0x20] sm:$0xf]
    %v2257 = vld [vmem:[#allocation13 + $0x24] sm:$0xf]
    %v2258 = vld [vmem:[#allocation13 + $0x28] sm:$0xf]
    %v2259 = vld [vmem:[#allocation13 + $0x2c] sm:$0xf]
    %v2260 = vld [vmem:[#allocation13 + $0x30] sm:$0xf]
    %v2261 = vld [vmem:[#allocation13 + $0x34] sm:$0xf]
    %v2262 = vld [vmem:[#allocation13 + $0x38] sm:$0xf]
    %v2263 = vld [vmem:[#allocation13 + $0x3c] sm:$0xf]
    %v2280 = vunpack.c.l.b16 %v2248
    %v2281 = vunpack.c.l.b16 %v2249
    %v2282 = vunpack.c.l.b16 %v2250
    %v2283 = vunpack.c.l.b16 %v2251
    %v2284 = vunpack.c.l.b16 %v2252
    %v2285 = vunpack.c.l.b16 %v2253
    %v2286 = vunpack.c.l.b16 %v2254
    %v2287 = vunpack.c.l.b16 %v2255
    %v2288 = vunpack.c.l.b16 %v2256
    %v2289 = vunpack.c.l.b16 %v2257
    %v2290 = vunpack.c.l.b16 %v2258
    %v2291 = vunpack.c.l.b16 %v2259
    %v2292 = vunpack.c.l.b16 %v2260
    %v2293 = vunpack.c.l.b16 %v2261
    %v2294 = vunpack.c.l.b16 %v2262
    %v2295 = vunpack.c.l.b16 %v2263
    %v2296 = vpack.c.b16 %v2281, %v2280
    %v2297 = vpack.c.b16 %v2283, %v2282
    %v2298 = vpack.c.b16 %v2285, %v2284
    %v2299 = vpack.c.b16 %v2287, %v2286
    %v2300 = vpack.c.b16 %v2289, %v2288
    %v2301 = vpack.c.b16 %v2291, %v2290
    %v2302 = vpack.c.b16 %v2293, %v2292
    %v2303 = vpack.c.b16 %v2295, %v2294
    %2312 = vmatprep.subr.bf16.mxu0 0
    %2313 = vmatpush1.bf16.msra.mxu0 %v2303
    %2314 = vmatprep.subr.bf16.mxu0 0
    %2315 = vmatpush1.bf16.msra.mxu0 %v2302
    %2316 = vmatprep.subr.bf16.mxu0 0
    %2317 = vmatpush1.bf16.msra.mxu0 %v2301
    %2318 = vmatprep.subr.bf16.mxu0 0
    %2319 = vmatpush1.bf16.msra.mxu0 %v2300
    %2320 = vmatprep.subr.bf16.mxu0 0
    %2321 = vmatpush1.bf16.msra.mxu0 %v2299
    %2322 = vmatprep.subr.bf16.mxu0 0
    %2323 = vmatpush1.bf16.msra.mxu0 %v2298
    %2324 = vmatprep.subr.bf16.mxu0 0
    %2325 = vmatpush1.bf16.msra.mxu0 %v2297
    %2326 = vmatprep.subr.bf16.mxu0 0
    %2327 = vmatpush1.bf16.msra.mxu0 %v2296
    %2328 = vmatprep.subr.bf16.mxu0 0
    %2329 = vmatpush2.bf16.msra.mxu0 0
    %2330 = vmatprep.subr.bf16.mxu0 0
    %2331 = vmatpush2.bf16.msra.mxu0 0
    %2332 = vmatprep.subr.bf16.mxu0 0
    %2333 = vmatpush2.bf16.msra.mxu0 0
    %2334 = vmatprep.subr.bf16.mxu0 0
    %2335 = vmatpush2.bf16.msra.mxu0 0
    %2336 = vmatprep.subr.bf16.mxu0 0
    %2337 = vmatpush2.bf16.msra.mxu0 0
    %2338 = vmatprep.subr.bf16.mxu0 0
    %2339 = vmatpush2.bf16.msra.mxu0 0
    %2340 = vmatprep.subr.bf16.mxu0 0
    %2341 = vmatpush2.bf16.msra.mxu0 0
    %2342 = vmatprep.subr.bf16.mxu0 0
    %2343 = vmatpush2.bf16.msra.mxu0 0
    %2344 = vmatprep.mubr.bf16.mxu0 0
    %2345 = vmatmul.mubr.bf16.gmra.mxu0 %v2247
    %v2346 = vpop.f32.mrf.mxu0
    %v2347 = vadd.f32 %v2095, %v2346
    %v2348 = vpop.f32.mrf.mxu0
    %v2349 = vpop.f32.mrf.mxu0
    %v2350 = vpop.f32.mrf.mxu0
    %2351 = vdwg.mxu0
    %v2352 = vtanh.pop %v2347
    %v2353 = vsub.f32 1.0, %v2245
    %v2354 = vmul.f32 %v2353, %v2352
    %v2355 = vmul.f32 %v2245, %v2089
    %v2356 = vadd.f32 %v2354, %v2355
    %s2357 = scalar_lea.vmem [#allocation3], 48
    %2358 = vst [vmem:[%s2357] sm:$0xff] %v2356
    %s2359 = scalar_lea.vmem [#allocation2], 168
    %v2360 = vld [vmem:[%s2359] sm:$0xff]
    %v2361 = vld [vmem:[%s2359 + $0x8] sm:$0xff]
    %v2362 = vld [vmem:[%s2359 + $0x10] sm:$0xff]
    %v2363 = vpack.c.bf16 %v2356, %v2356
    %v2364 = vld [vmem:[#allocation11] sm:$0xff]
    %v2365 = vld [vmem:[#allocation11 + $0x8] sm:$0xff]
    %v2366 = vld [vmem:[#allocation11 + $0x10] sm:$0xff]
    %v2367 = vld [vmem:[#allocation11 + $0x18] sm:$0xff]
    %v2368 = vld [vmem:[#allocation11 + $0x20] sm:$0xff]
    %v2369 = vld [vmem:[#allocation11 + $0x28] sm:$0xff]
    %v2370 = vld [vmem:[#allocation11 + $0x30] sm:$0xff]
    %v2371 = vld [vmem:[#allocation11 + $0x38] sm:$0xff]
    %v2372 = vld [vmem:[#allocation11 + $0x40] sm:$0xff]
    %v2373 = vld [vmem:[#allocation11 + $0x48] sm:$0xff]
    %v2374 = vld [vmem:[#allocation11 + $0x50] sm:$0xff]
    %v2375 = vld [vmem:[#allocation11 + $0x58] sm:$0xff]
    %v2376 = vld [vmem:[#allocation11 + $0x60] sm:$0xff]
    %v2377 = vld [vmem:[#allocation11 + $0x68] sm:$0xff]
    %v2378 = vld [vmem:[#allocation11 + $0x70] sm:$0xff]
    %v2379 = vld [vmem:[#allocation11 + $0x78] sm:$0xff]
    %v2396 = vunpack.c.l.b16 %v2364
    %v2397 = vunpack.c.h.b16 %v2364
    %v2398 = vunpack.c.l.b16 %v2365
    %v2399 = vunpack.c.h.b16 %v2365
    %v2400 = vunpack.c.l.b16 %v2366
    %v2401 = vunpack.c.h.b16 %v2366
    %v2402 = vunpack.c.l.b16 %v2367
    %v2403 = vunpack.c.h.b16 %v2367
    %v2404 = vunpack.c.l.b16 %v2368
    %v2405 = vunpack.c.h.b16 %v2368
    %v2406 = vunpack.c.l.b16 %v2369
    %v2407 = vunpack.c.h.b16 %v2369
    %v2408 = vunpack.c.l.b16 %v2370
    %v2409 = vunpack.c.h.b16 %v2370
    %v2410 = vunpack.c.l.b16 %v2371
    %v2411 = vunpack.c.h.b16 %v2371
    %v2412 = vunpack.c.l.b16 %v2372
    %v2413 = vunpack.c.h.b16 %v2372
    %v2414 = vunpack.c.l.b16 %v2373
    %v2415 = vunpack.c.h.b16 %v2373
    %v2416 = vunpack.c.l.b16 %v2374
    %v2417 = vunpack.c.h.b16 %v2374
    %v2418 = vunpack.c.l.b16 %v2375
    %v2419 = vunpack.c.h.b16 %v2375
    %v2420 = vunpack.c.l.b16 %v2376
    %v2421 = vunpack.c.h.b16 %v2376
    %v2422 = vunpack.c.l.b16 %v2377
    %v2423 = vunpack.c.h.b16 %v2377
    %v2424 = vunpack.c.l.b16 %v2378
    %v2425 = vunpack.c.h.b16 %v2378
    %v2426 = vunpack.c.l.b16 %v2379
    %v2427 = vunpack.c.h.b16 %v2379
    %v2428 = vpack.c.b16 %v2398, %v2396
    %v2429 = vpack.c.b16 %v2399, %v2397
    %v2430 = vpack.c.b16 %v2402, %v2400
    %v2431 = vpack.c.b16 %v2403, %v2401
    %v2432 = vpack.c.b16 %v2406, %v2404
    %v2433 = vpack.c.b16 %v2407, %v2405
    %v2434 = vpack.c.b16 %v2410, %v2408
    %v2435 = vpack.c.b16 %v2411, %v2409
    %v2436 = vpack.c.b16 %v2414, %v2412
    %v2437 = vpack.c.b16 %v2415, %v2413
    %v2438 = vpack.c.b16 %v2418, %v2416
    %v2439 = vpack.c.b16 %v2419, %v2417
    %v2440 = vpack.c.b16 %v2422, %v2420
    %v2441 = vpack.c.b16 %v2423, %v2421
    %v2442 = vpack.c.b16 %v2426, %v2424
    %v2443 = vpack.c.b16 %v2427, %v2425
    %2460 = vmatprep.subr.bf16.mxu0 %v2443
    %2461 = vmatpush1.bf16.msra.mxu0 %v2442
    %2462 = vmatprep.subr.bf16.mxu0 %v2441
    %2463 = vmatpush1.bf16.msra.mxu0 %v2440
    %2464 = vmatprep.subr.bf16.mxu0 %v2439
    %2465 = vmatpush1.bf16.msra.mxu0 %v2438
    %2466 = vmatprep.subr.bf16.mxu0 %v2437
    %2467 = vmatpush1.bf16.msra.mxu0 %v2436
    %2468 = vmatprep.subr.bf16.mxu0 %v2435
    %2469 = vmatpush1.bf16.msra.mxu0 %v2434
    %2470 = vmatprep.subr.bf16.mxu0 %v2433
    %2471 = vmatpush1.bf16.msra.mxu0 %v2432
    %2472 = vmatprep.subr.bf16.mxu0 %v2431
    %2473 = vmatpush1.bf16.msra.mxu0 %v2430
    %2474 = vmatprep.subr.bf16.mxu0 %v2429
    %2475 = vmatpush1.bf16.msra.mxu0 %v2428
    %2476 = vmatprep.subr.bf16.mxu0 0
    %2477 = vmatpush2.bf16.msra.mxu0 0
    %2478 = vmatprep.subr.bf16.mxu0 0
    %2479 = vmatpush2.bf16.msra.mxu0 0
    %2480 = vmatprep.subr.bf16.mxu0 0
    %2481 = vmatpush2.bf16.msra.mxu0 0
    %2482 = vmatprep.subr.bf16.mxu0 0
    %2483 = vmatpush2.bf16.msra.mxu0 0
    %2484 = vmatprep.subr.bf16.mxu0 0
    %2485 = vmatpush2.bf16.msra.mxu0 0
    %2486 = vmatprep.subr.bf16.mxu0 0
    %2487 = vmatpush2.bf16.msra.mxu0 0
    %2488 = vmatprep.subr.bf16.mxu0 0
    %2489 = vmatpush2.bf16.msra.mxu0 0
    %2490 = vmatprep.subr.bf16.mxu0 0
    %2491 = vmatpush2.bf16.msra.mxu0 0
    %2492 = vmatprep.mubr.bf16.mxu0 0
    %2493 = vmatmul.mubr.bf16.gmra.mxu0 %v2363
    %v2494 = vpop.f32.mrf.mxu0
    %v2495 = vadd.f32 %v2360, %v2494
    %v2496 = vpop.f32.mrf.mxu0
    %v2497 = vadd.f32 %v2361, %v2496
    %v2498 = vpop.f32.mrf.mxu0
    %v2499 = vpop.f32.mrf.mxu0
    %2500 = vdwg.mxu0
    %v2501 = vxor.u32 %v2495, 2147483648
    %v2502 = vxor.u32 %v2497, 2147483648
    %v2503 = vmul.f32 %v2501, 1.442695
    %v2504 = vpow.pop %v2503
    %v2505 = vmul.f32 %v2502, 1.442695
    %v2506 = vpow.pop %v2505
    %v2507 = vadd.f32 %v2504, 1.0
    %v2508 = vadd.f32 %v2506, 1.0
    %v2509 = vrcp.pop %v2507
    %v2510 = vmul.f32 1.0, %v2509
    %v2511 = vrcp.pop %v2508
    %v2512 = vmul.f32 1.0, %v2511
    %v2513 = vmul.f32 %v2510, %v2356
    %v2514 = vpack.c.bf16 %v2513, %v2513
    %v2515 = vld [vmem:[#allocation13] sm:$0xf]
    %v2516 = vld [vmem:[#allocation13 + $0x4] sm:$0xf]
    %v2517 = vld [vmem:[#allocation13 + $0x8] sm:$0xf]
    %v2518 = vld [vmem:[#allocation13 + $0xc] sm:$0xf]
    %v2519 = vld [vmem:[#allocation13 + $0x10] sm:$0xf]
    %v2520 = vld [vmem:[#allocation13 + $0x14] sm:$0xf]
    %v2521 = vld [vmem:[#allocation13 + $0x18] sm:$0xf]
    %v2522 = vld [vmem:[#allocation13 + $0x1c] sm:$0xf]
    %v2523 = vld [vmem:[#allocation13 + $0x20] sm:$0xf]
    %v2524 = vld [vmem:[#allocation13 + $0x24] sm:$0xf]
    %v2525 = vld [vmem:[#allocation13 + $0x28] sm:$0xf]
    %v2526 = vld [vmem:[#allocation13 + $0x2c] sm:$0xf]
    %v2527 = vld [vmem:[#allocation13 + $0x30] sm:$0xf]
    %v2528 = vld [vmem:[#allocation13 + $0x34] sm:$0xf]
    %v2529 = vld [vmem:[#allocation13 + $0x38] sm:$0xf]
    %v2530 = vld [vmem:[#allocation13 + $0x3c] sm:$0xf]
    %v2547 = vunpack.c.l.b16 %v2515
    %v2548 = vunpack.c.l.b16 %v2516
    %v2549 = vunpack.c.l.b16 %v2517
    %v2550 = vunpack.c.l.b16 %v2518
    %v2551 = vunpack.c.l.b16 %v2519
    %v2552 = vunpack.c.l.b16 %v2520
    %v2553 = vunpack.c.l.b16 %v2521
    %v2554 = vunpack.c.l.b16 %v2522
    %v2555 = vunpack.c.l.b16 %v2523
    %v2556 = vunpack.c.l.b16 %v2524
    %v2557 = vunpack.c.l.b16 %v2525
    %v2558 = vunpack.c.l.b16 %v2526
    %v2559 = vunpack.c.l.b16 %v2527
    %v2560 = vunpack.c.l.b16 %v2528
    %v2561 = vunpack.c.l.b16 %v2529
    %v2562 = vunpack.c.l.b16 %v2530
    %v2563 = vpack.c.b16 %v2548, %v2547
    %v2564 = vpack.c.b16 %v2550, %v2549
    %v2565 = vpack.c.b16 %v2552, %v2551
    %v2566 = vpack.c.b16 %v2554, %v2553
    %v2567 = vpack.c.b16 %v2556, %v2555
    %v2568 = vpack.c.b16 %v2558, %v2557
    %v2569 = vpack.c.b16 %v2560, %v2559
    %v2570 = vpack.c.b16 %v2562, %v2561
    %2579 = vmatprep.subr.bf16.mxu0 0
    %2580 = vmatpush1.bf16.msra.mxu0 %v2570
    %2581 = vmatprep.subr.bf16.mxu0 0
    %2582 = vmatpush1.bf16.msra.mxu0 %v2569
    %2583 = vmatprep.subr.bf16.mxu0 0
    %2584 = vmatpush1.bf16.msra.mxu0 %v2568
    %2585 = vmatprep.subr.bf16.mxu0 0
    %2586 = vmatpush1.bf16.msra.mxu0 %v2567
    %2587 = vmatprep.subr.bf16.mxu0 0
    %2588 = vmatpush1.bf16.msra.mxu0 %v2566
    %2589 = vmatprep.subr.bf16.mxu0 0
    %2590 = vmatpush1.bf16.msra.mxu0 %v2565
    %2591 = vmatprep.subr.bf16.mxu0 0
    %2592 = vmatpush1.bf16.msra.mxu0 %v2564
    %2593 = vmatprep.subr.bf16.mxu0 0
    %2594 = vmatpush1.bf16.msra.mxu0 %v2563
    %2595 = vmatprep.subr.bf16.mxu0 0
    %2596 = vmatpush2.bf16.msra.mxu0 0
    %2597 = vmatprep.subr.bf16.mxu0 0
    %2598 = vmatpush2.bf16.msra.mxu0 0
    %2599 = vmatprep.subr.bf16.mxu0 0
    %2600 = vmatpush2.bf16.msra.mxu0 0
    %2601 = vmatprep.subr.bf16.mxu0 0
    %2602 = vmatpush2.bf16.msra.mxu0 0
    %2603 = vmatprep.subr.bf16.mxu0 0
    %2604 = vmatpush2.bf16.msra.mxu0 0
    %2605 = vmatprep.subr.bf16.mxu0 0
    %2606 = vmatpush2.bf16.msra.mxu0 0
    %2607 = vmatprep.subr.bf16.mxu0 0
    %2608 = vmatpush2.bf16.msra.mxu0 0
    %2609 = vmatprep.subr.bf16.mxu0 0
    %2610 = vmatpush2.bf16.msra.mxu0 0
    %2611 = vmatprep.mubr.bf16.mxu0 0
    %2612 = vmatmul.mubr.bf16.gmra.mxu0 %v2514
    %v2613 = vpop.f32.mrf.mxu0
    %v2614 = vadd.f32 %v2362, %v2613
    %v2615 = vpop.f32.mrf.mxu0
    %v2616 = vpop.f32.mrf.mxu0
    %v2617 = vpop.f32.mrf.mxu0
    %2618 = vdwg.mxu0
    %v2619 = vtanh.pop %v2614
    %v2620 = vsub.f32 1.0, %v2512
    %v2621 = vmul.f32 %v2620, %v2619
    %v2622 = vmul.f32 %v2512, %v2356
    %v2623 = vadd.f32 %v2621, %v2622
    %s2624 = scalar_lea.vmem [#allocation3], 56
    %2625 = vst [vmem:[%s2624] sm:$0xff] %v2623
    %2626 = vst [vmem:[#allocation4] sm:$0xff] %v2623
    %v2627 = vld [vmem:[#allocation3] sm:$0xff]
    %v2628 = vld [vmem:[#allocation3 + $0x8] sm:$0xff]
    %v2629 = vld [vmem:[#allocation3 + $0x10] sm:$0xff]
    %v2630 = vld [vmem:[#allocation3 + $0x18] sm:$0xff]
    %v2631 = vld [vmem:[#allocation3 + $0x20] sm:$0xff]
    %v2632 = vld [vmem:[#allocation3 + $0x28] sm:$0xff]
    %v2633 = vld [vmem:[#allocation3 + $0x30] sm:$0xff]
    %v2634 = vld [vmem:[#allocation3 + $0x38] sm:$0xff]
    %v2635 = vpack.c.bf16 %v2628, %v2627
    %v2636 = vpack.c.bf16 %v2630, %v2629
    %v2637 = vpack.c.bf16 %v2632, %v2631
    %v2638 = vpack.c.bf16 %v2634, %v2633
    %v2639 = vld [vmem:[#allocation14] sm:$0xf]
    %v2640 = vld [vmem:[#allocation14 + $0x4] sm:$0xf]
    %v2641 = vld [vmem:[#allocation14 + $0x8] sm:$0xf]
    %v2642 = vld [vmem:[#allocation14 + $0xc] sm:$0xf]
    %v2643 = vld [vmem:[#allocation14 + $0x10] sm:$0xf]
    %v2644 = vld [vmem:[#allocation14 + $0x14] sm:$0xf]
    %v2645 = vld [vmem:[#allocation14 + $0x18] sm:$0xf]
    %v2646 = vld [vmem:[#allocation14 + $0x1c] sm:$0xf]
    %v2647 = vld [vmem:[#allocation14 + $0x20] sm:$0xf]
    %v2648 = vld [vmem:[#allocation14 + $0x24] sm:$0xf]
    %v2649 = vld [vmem:[#allocation14 + $0x28] sm:$0xf]
    %v2650 = vld [vmem:[#allocation14 + $0x2c] sm:$0xf]
    %v2651 = vld [vmem:[#allocation14 + $0x30] sm:$0xf]
    %v2652 = vld [vmem:[#allocation14 + $0x34] sm:$0xf]
    %v2653 = vld [vmem:[#allocation14 + $0x38] sm:$0xf]
    %v2654 = vld [vmem:[#allocation14 + $0x3c] sm:$0xf]
    %v2655 = vld [vmem:[%s7] sm:$0x1]
    %v2657 = vlaneseq
    %v2658 = vshrl.u32 %v2657, 7
    %v2659 = vsub.s32 0, %v2658
    %v2660 = vrot.slane %v2655, %v2659
    %v2678 = vunpack.c.l.b16 %v2639
    %v2679 = vunpack.c.l.b16 %v2640
    %v2680 = vunpack.c.l.b16 %v2641
    %v2681 = vunpack.c.l.b16 %v2642
    %v2682 = vunpack.c.l.b16 %v2643
    %v2683 = vunpack.c.l.b16 %v2644
    %v2684 = vunpack.c.l.b16 %v2645
    %v2685 = vunpack.c.l.b16 %v2646
    %v2686 = vunpack.c.l.b16 %v2647
    %v2687 = vunpack.c.l.b16 %v2648
    %v2688 = vunpack.c.l.b16 %v2649
    %v2689 = vunpack.c.l.b16 %v2650
    %v2690 = vunpack.c.l.b16 %v2651
    %v2691 = vunpack.c.l.b16 %v2652
    %v2692 = vunpack.c.l.b16 %v2653
    %v2693 = vunpack.c.l.b16 %v2654
    %v2694 = vpack.c.b16 %v2679, %v2678
    %v2695 = vpack.c.b16 %v2681, %v2680
    %v2696 = vpack.c.b16 %v2683, %v2682
    %v2697 = vpack.c.b16 %v2685, %v2684
    %v2698 = vpack.c.b16 %v2687, %v2686
    %v2699 = vpack.c.b16 %v2689, %v2688
    %v2700 = vpack.c.b16 %v2691, %v2690
    %v2701 = vpack.c.b16 %v2693, %v2692
    %2710 = vmatprep.subr.bf16.mxu0 0
    %2711 = vmatpush1.bf16.msra.mxu0 %v2701
    %2712 = vmatprep.subr.bf16.mxu0 0
    %2713 = vmatpush1.bf16.msra.mxu0 %v2700
    %2714 = vmatprep.subr.bf16.mxu0 0
    %2715 = vmatpush1.bf16.msra.mxu0 %v2699
    %2716 = vmatprep.subr.bf16.mxu0 0
    %2717 = vmatpush1.bf16.msra.mxu0 %v2698
    %2718 = vmatprep.subr.bf16.mxu0 0
    %2719 = vmatpush1.bf16.msra.mxu0 %v2697
    %2720 = vmatprep.subr.bf16.mxu0 0
    %2721 = vmatpush1.bf16.msra.mxu0 %v2696
    %2722 = vmatprep.subr.bf16.mxu0 0
    %2723 = vmatpush1.bf16.msra.mxu0 %v2695
    %2724 = vmatprep.subr.bf16.mxu0 0
    %2725 = vmatpush1.bf16.msra.mxu0 %v2694
    %2726 = vmatprep.subr.bf16.mxu0 0
    %2727 = vmatpush2.bf16.msra.mxu0 0
    %2728 = vmatprep.subr.bf16.mxu0 0
    %2729 = vmatpush2.bf16.msra.mxu0 0
    %2730 = vmatprep.subr.bf16.mxu0 0
    %2731 = vmatpush2.bf16.msra.mxu0 0
    %2732 = vmatprep.subr.bf16.mxu0 0
    %2733 = vmatpush2.bf16.msra.mxu0 0
    %2734 = vmatprep.subr.bf16.mxu0 0
    %2735 = vmatpush2.bf16.msra.mxu0 0
    %2736 = vmatprep.subr.bf16.mxu0 0
    %2737 = vmatpush2.bf16.msra.mxu0 0
    %2738 = vmatprep.subr.bf16.mxu0 0
    %2739 = vmatpush2.bf16.msra.mxu0 0
    %2740 = vmatprep.subr.bf16.mxu0 0
    %2741 = vmatpush2.bf16.msra.mxu0 0
    %2742 = vmatprep.mubr.bf16.mxu0 0
    %2743 = vmatmul.mubr.bf16.gmra.mxu0 %v2635
    %v2744 = vpop.f32.mrf.mxu0
    %v2745 = vadd.f32 %v2660, %v2744
    %v2746 = vpop.f32.mrf.mxu0
    %v2747 = vpop.f32.mrf.mxu0
    %v2748 = vadd.f32 %v2660, %v2747
    %v2749 = vpop.f32.mrf.mxu0
    %2750 = vmatprep.mubr.bf16.mxu0 0
    %2751 = vmatmul.mubr.bf16.gmra.mxu0 %v2636
    %v2752 = vpop.f32.mrf.mxu0
    %v2753 = vadd.f32 %v2660, %v2752
    %v2754 = vpop.f32.mrf.mxu0
    %v2755 = vpop.f32.mrf.mxu0
    %v2756 = vadd.f32 %v2660, %v2755
    %v2757 = vpop.f32.mrf.mxu0
    %2758 = vmatprep.mubr.bf16.mxu0 0
    %2759 = vmatmul.mubr.bf16.gmra.mxu0 %v2637
    %v2760 = vpop.f32.mrf.mxu0
    %v2761 = vadd.f32 %v2660, %v2760
    %v2762 = vpop.f32.mrf.mxu0
    %v2763 = vpop.f32.mrf.mxu0
    %v2764 = vadd.f32 %v2660, %v2763
    %v2765 = vpop.f32.mrf.mxu0
    %2766 = vmatprep.mubr.bf16.mxu0 0
    %2767 = vmatmul.mubr.bf16.gmra.mxu0 %v2638
    %v2768 = vpop.f32.mrf.mxu0
    %v2769 = vadd.f32 %v2660, %v2768
    %v2770 = vpop.f32.mrf.mxu0
    %v2771 = vpop.f32.mrf.mxu0
    %v2772 = vadd.f32 %v2660, %v2771
    %v2773 = vpop.f32.mrf.mxu0
    %2774 = vdwg.mxu0
    %2775 = vmax.xlane.f32.xlu0 %v2745
    %v2776 = vpop.xlane.xlu0 %2775
    %2777 = vmax.xlane.f32.xlu0 %v2748
    %v2778 = vpop.xlane.xlu0 %2777
    %2779 = vmax.xlane.f32.xlu0 %v2753
    %v2780 = vpop.xlane.xlu0 %2779
    %2781 = vmax.xlane.f32.xlu0 %v2756
    %v2782 = vpop.xlane.xlu0 %2781
    %2783 = vmax.xlane.f32.xlu0 %v2761
    %v2784 = vpop.xlane.xlu0 %2783
    %2785 = vmax.xlane.f32.xlu0 %v2764
    %v2786 = vpop.xlane.xlu0 %2785
    %2787 = vmax.xlane.f32.xlu0 %v2769
    %v2788 = vpop.xlane.xlu0 %2787
    %2789 = vmax.xlane.f32.xlu0 %v2772
    %v2790 = vpop.xlane.xlu0 %2789
    %v2791 = vsub.f32 %v2745, %v2776
    %v2792 = vsub.f32 %v2748, %v2778
    %v2793 = vsub.f32 %v2753, %v2780
    %v2794 = vsub.f32 %v2756, %v2782
    %v2795 = vsub.f32 %v2761, %v2784
    %v2796 = vsub.f32 %v2764, %v2786
    %v2797 = vsub.f32 %v2769, %v2788
    %v2798 = vsub.f32 %v2772, %v2790
    %v2799 = vmul.f32 %v2791, 1.442695
    %v2800 = vpow.pop %v2799
    %v2801 = vmul.f32 %v2792, 1.442695
    %v2802 = vpow.pop %v2801
    %v2803 = vmul.f32 %v2793, 1.442695
    %v2804 = vpow.pop %v2803
    %v2805 = vmul.f32 %v2794, 1.442695
    %v2806 = vpow.pop %v2805
    %v2807 = vmul.f32 %v2795, 1.442695
    %v2808 = vpow.pop %v2807
    %v2809 = vmul.f32 %v2796, 1.442695
    %v2810 = vpow.pop %v2809
    %v2811 = vmul.f32 %v2797, 1.442695
    %v2812 = vpow.pop %v2811
    %v2813 = vmul.f32 %v2798, 1.442695
    %v2814 = vpow.pop %v2813
    %2815 = vadd.xlane.f32.xlu0 %v2800
    %v2816 = vpop.xlane.xlu0 %2815
    %2817 = vadd.xlane.f32.xlu0 %v2802
    %v2818 = vpop.xlane.xlu0 %2817
    %2819 = vadd.xlane.f32.xlu0 %v2804
    %v2820 = vpop.xlane.xlu0 %2819
    %2821 = vadd.xlane.f32.xlu0 %v2806
    %v2822 = vpop.xlane.xlu0 %2821
    %2823 = vadd.xlane.f32.xlu0 %v2808
    %v2824 = vpop.xlane.xlu0 %2823
    %2825 = vadd.xlane.f32.xlu0 %v2810
    %v2826 = vpop.xlane.xlu0 %2825
    %2827 = vadd.xlane.f32.xlu0 %v2812
    %v2828 = vpop.xlane.xlu0 %2827
    %2829 = vadd.xlane.f32.xlu0 %v2814
    %v2830 = vpop.xlane.xlu0 %2829
    %v2831 = vlog2.pop %v2816
    %v2832 = vmul.f32 %v2831, 0.6931472
    %v2833 = vlog2.pop %v2818
    %v2834 = vmul.f32 %v2833, 0.6931472
    %v2835 = vlog2.pop %v2820
    %v2836 = vmul.f32 %v2835, 0.6931472
    %v2837 = vlog2.pop %v2822
    %v2838 = vmul.f32 %v2837, 0.6931472
    %v2839 = vlog2.pop %v2824
    %v2840 = vmul.f32 %v2839, 0.6931472
    %v2841 = vlog2.pop %v2826
    %v2842 = vmul.f32 %v2841, 0.6931472
    %v2843 = vlog2.pop %v2828
    %v2844 = vmul.f32 %v2843, 0.6931472
    %v2845 = vlog2.pop %v2830
    %v2846 = vmul.f32 %v2845, 0.6931472
    %v2847 = vadd.f32 %v2776, %v2832
    %v2848 = vadd.f32 %v2778, %v2834
    %v2849 = vadd.f32 %v2780, %v2836
    %v2850 = vadd.f32 %v2782, %v2838
    %v2851 = vadd.f32 %v2784, %v2840
    %v2852 = vadd.f32 %v2786, %v2842
    %v2853 = vadd.f32 %v2788, %v2844
    %v2854 = vadd.f32 %v2790, %v2846
    %v2855 = vsub.f32 %v2745, %v2847
    %v2856 = vsub.f32 %v2748, %v2848
    %v2857 = vsub.f32 %v2753, %v2849
    %v2858 = vsub.f32 %v2756, %v2850
    %v2859 = vsub.f32 %v2761, %v2851
    %v2860 = vsub.f32 %v2764, %v2852
    %v2861 = vsub.f32 %v2769, %v2853
    %v2862 = vsub.f32 %v2772, %v2854
    %2863 = vst [vmem:[#allocation16] sm:$0xff] %v2855
    %2864 = vst [vmem:[#allocation16 + $0x8] sm:$0xff] %v2856
    %2865 = vst [vmem:[#allocation16 + $0x10] sm:$0xff] %v2857
    %2866 = vst [vmem:[#allocation16 + $0x18] sm:$0xff] %v2858
    %2867 = vst [vmem:[#allocation16 + $0x20] sm:$0xff] %v2859
    %2868 = vst [vmem:[#allocation16 + $0x28] sm:$0xff] %v2860
    %2869 = vst [vmem:[#allocation16 + $0x30] sm:$0xff] %v2861
    %2870 = vst [vmem:[#allocation16 + $0x38] sm:$0xff] %v2862
    // Predicated region
    $region62: #{tpu_custom_call.1} parent=1 // pred_check
      %p2871 = pneg %p114
    $region63: #{tpu_custom_call.1} parent=1 // pred_check_branch
      %2873 = sbr.rel (%p2871) target = $region65
    $region64: #{tpu_custom_call.1} parent=1 // pred_region
      %2874 = vst [vmem:[#allocation17] sm:$0xff] %v2623
    $region65: #{tpu_custom_call.1} parent=1 // pred_fallthru
      _
    // Predicated region
    $region66: #{tpu_custom_call.1} parent=1 // pred_check
      _
    $region67: #{tpu_custom_call.1} parent=1 // pred_check_branch
      %2876 = sbr.rel (0) target = $region69
    $region68: #{tpu_custom_call.1} parent=1 // pred_region
      %s2878 = ssub.s32 1024, 1024
      %2879 = vsyncadd [#allocation7], %s2878
      %s2880 = sshll.u32 [#allocation16], 4
      %s2881 = int_to_ptr.vmem [resolvable:$true] %s2880
      %2886 = dma.vmem_to_hbm [thread:$0]  %s2881, 1024, %s8, [#allocation7], 128, 128, 8
    $region69: #{tpu_custom_call.1} parent=1 // pred_fallthru
      _
    // Predicated region
    $region70: #{tpu_custom_call.1} parent=1 // pred_check
      _
    $region71: #{tpu_custom_call.1} parent=1 // pred_check_branch
      %2888 = sbr.rel (0) target = $region73
    $region72: #{tpu_custom_call.1} parent=1 // pred_region
      %s2890 = ssub.s32 128, 128
      %2891 = vsyncadd [#allocation18], %s2890
      %s2893 = sshll.u32 [#allocation17], 4
      %s2894 = int_to_ptr.vmem [resolvable:$true] %s2893
      %2896 = dma.vmem_to_hbm [thread:$0]  %s2894, 128, %s9, [#allocation18]
    $region73: #{tpu_custom_call.1} parent=1 // pred_fallthru
      _
    // Predicated region
    $region74: #{tpu_custom_call.1} parent=1 // pred_check
      _
    $region75: #{tpu_custom_call.1} parent=1 // pred_check_branch
      %2898 = sbr.rel (0) target = $region77
    $region76: #{tpu_custom_call.1} parent=1 // pred_region
      %2899 = dma.done [#allocation7], 1024
    $region77: #{tpu_custom_call.1} parent=1 // pred_fallthru
      _
    // Predicated region
    $region78: #{tpu_custom_call.1} parent=1 // pred_check
      _
    $region79: #{tpu_custom_call.1} parent=1 // pred_check_branch
      %2901 = sbr.rel (0) target = $region81
    $region80: #{tpu_custom_call.1} parent=1 // pred_region
      %2902 = dma.done [#allocation18], 128
    $region81: #{tpu_custom_call.1} parent=1 // pred_fallthru
      _
    %2903 = vsyncpa [#allocation6], 1
    %2904 = vsyncpa [#allocation9], 1
    %2905 = vsyncpa [#allocation12], 1
    %2906 = vsyncpa [#allocation15], 1
    %2907 = vsyncpa [#allocation7], 1
    %2908 = vsyncpa [#allocation18], 1

</llo_original>
